<compile_context>
chip_gen: v7x
topology: tpu7x:2x2x1
jax: 0.10.0
libtpu: 0.0.40
codegen_flags: <defaults>
</compile_context>

<pallas_src>
import numpy as np
import jax
import jax.numpy as jnp
from jax.experimental import pallas as pl
from jax.experimental.pallas import tpu as pltpu

H = W = 5
CIN, CMID = 2, 16
HIDDEN = 32
EPS = 1e-5
NHW = H * W              # 25 positions per (sample, channel) for BatchNorm stats
INV_NHW = 1.0 / NHW
F_IN = CIN * H * W       # 50  flattened input features  (C,H,W order)
F_MID = CMID * H * W     # 400 flattened conv activations (C,H,W order)
OUT_LANES = 128          # lane-dense padded output width (column 0 is the result)
BLOCK_B_MAX = 512        # max batch rows per grid step (MXU M dimension)


def _dot(a, b):
    # bf16 x bf16 operands -> f32 accumulation on the MXU
    return jnp.dot(a, b, preferred_element_type=jnp.float32)


def value_func_kernel(x_ref, w1_ref, b1_ref, p_ref, q_ref, w2_ref, b2_ref,
                      wf1_ref, bf1_ref, wf2_ref, bf2_ref, out_ref):
    p = p_ref[...]        # (400,16) bf16 exact 0/1 per-channel indicator (reduction)
    q = q_ref[...]        # (16,400) bf16 exact 0/1 per-channel indicator (broadcast)

    def batchnorm(a):
        """Training-mode BatchNorm2d, per-row (=per-sample) per-channel stats over the
        25 H*W positions, gamma=1, beta=0, eps=1e-5.  Two independent reduction
        matmuls (sum, sum-of-squares) -> 16-lane stats in f32 -> rsqrt at 16 lanes ->
        broadcast 16->400 via exact 0/1 matmul -> a*scale - shift."""
        s1 = _dot(a.astype(jnp.bfloat16), p)             # (BB,16) channel sums
        s2 = _dot((a * a).astype(jnp.bfloat16), p)       # (BB,16) channel sum-of-squares
        mean = s1 * INV_NHW
        var = s2 * INV_NHW - mean * mean                 # biased variance (f32)
        scale = jax.lax.rsqrt(var + EPS)                 # 16-lane EUP rsqrt
        shift = mean * scale
        return a * _dot(scale.astype(jnp.bfloat16), q) - _dot(shift.astype(jnp.bfloat16), q)

    x = x_ref[...]                                                            # (BB,50) bf16
    a = batchnorm(jnp.maximum(_dot(x, w1_ref[...]) + b1_ref[...], 0.0))       # conv1+relu+bn1
    a = batchnorm(jnp.maximum(_dot(a.astype(jnp.bfloat16), w2_ref[...])
                              + b2_ref[...], 0.0))                            # conv2+relu+bn2
    h = jnp.maximum(_dot(a.astype(jnp.bfloat16), wf1_ref[...]) + bf1_ref[...], 0.0)  # fc1+relu
    out_ref[...] = _dot(h.astype(jnp.bfloat16), wf2_ref[...]) + bf2_ref[...]         # fc2 (lane-dense)


def _conv_dense(w, cin, cout):
    """PyTorch conv weight (cout, cin, 3, 3), stride 1, pad 1 on a 5x5 grid
    -> dense matrix (cin*25, cout*25) acting on (C,H,W)-flattened features.
    Zero padding is folded in (out-of-range taps simply get no entry)."""
    w = np.asarray(w)
    m = np.zeros((cin * H * W, cout * H * W), np.float32)
    ci_idx = np.arange(cin)[:, None]
    co_idx = np.arange(cout)[None, :]
    for dy in range(3):
        for dx in range(3):
            for oy in range(H):
                iy = oy + dy - 1
                if not (0 <= iy < H):
                    continue
                for ox in range(W):
                    ix = ox + dx - 1
                    if not (0 <= ix < W):
                        continue
                    m[ci_idx * NHW + iy * W + ix,
                      co_idx * NHW + oy * W + ox] += w[:, :, dy, dx].T
    return m


def make_params(key):
    ks = jax.random.split(key, 8)
    return dict(
        w_conv1=jax.random.normal(ks[0], (CMID, CIN, 3, 3), jnp.float32) * 0.2,
        b_conv1=jax.random.normal(ks[1], (CMID,), jnp.float32) * 0.1,
        w_conv2=jax.random.normal(ks[2], (CMID, CMID, 3, 3), jnp.float32) * 0.1,
        b_conv2=jax.random.normal(ks[3], (CMID,), jnp.float32) * 0.1,
        w_fc1=jax.random.normal(ks[4], (HIDDEN, F_MID), jnp.float32) * 0.05,
        b_fc1=jax.random.normal(ks[5], (HIDDEN,), jnp.float32) * 0.05,
        w_fc2=jax.random.normal(ks[6], (1, HIDDEN), jnp.float32) * 0.1,
        b_fc2=jax.random.normal(ks[7], (1,), jnp.float32) * 0.1,
    )


def prepare_constants(params):
    """One-time host-side re-layout of the module parameters into kernel constants.
    Conv/fc weight matrices are stored in bf16 (MXU fast path); biases and the BN
    elementwise path stay f32.  The BN reduction/broadcast matrices are exact 0/1
    indicators (bf16-exact); the 1/25 averaging is applied in f32 inside the kernel."""
    w1d = jnp.asarray(_conv_dense(params['w_conv1'], CIN, CMID), jnp.bfloat16)   # (50, 400)
    w2d = jnp.asarray(_conv_dense(params['w_conv2'], CMID, CMID), jnp.bfloat16)  # (400, 400)
    b1e = jnp.repeat(params['b_conv1'], NHW)[None, :].astype(jnp.float32)        # (1, 400)
    b2e = jnp.repeat(params['b_conv2'], NHW)[None, :].astype(jnp.float32)        # (1, 400)
    pmat = np.kron(np.eye(CMID, dtype=np.float32), np.ones((NHW, 1), np.float32))  # (400, 16)
    qmat = np.kron(np.eye(CMID, dtype=np.float32), np.ones((1, NHW), np.float32))  # (16, 400)
    wf1 = params['w_fc1'].T.astype(jnp.bfloat16)                                 # (400, 32)
    bf1 = params['b_fc1'][None, :].astype(jnp.float32)                           # (1, 32)
    wf2 = np.zeros((HIDDEN, OUT_LANES), np.float32)                              # lane-dense fc2
    wf2[:, 0] = np.asarray(params['w_fc2'])[0]
    bf2 = np.zeros((1, OUT_LANES), np.float32)
    bf2[0, 0] = float(np.asarray(params['b_fc2'])[0])
    return dict(w1=w1d, b1=b1e,
                p=jnp.asarray(pmat, jnp.bfloat16), q=jnp.asarray(qmat, jnp.bfloat16),
                w2=w2d, b2=b2e, wf1=wf1, bf1=bf1,
                wf2=jnp.asarray(wf2, jnp.bfloat16), bf2=jnp.asarray(bf2))


def _pick_block_b(bsz):
    """Prefer 512-row MXU blocks (better accumulate/weight-load ratio, fewer grid-step
    overheads), but keep >=2 grid steps whenever the batch allows so v7x's two
    TensorCores both get work from the "parallel" batch axis; floor at 128 rows."""
    half = max(1, (bsz + 1) // 2)
    blk = 1 << max(7, (half - 1).bit_length())       # next_pow2(ceil(bsz/2)), >= 128
    return min(BLOCK_B_MAX, blk)


@jax.jit
def value_func_cnn_forward(x, consts):
    """Batched forward; row b of the result equals the module's forward on sample b."""
    xf = x.reshape(-1, F_IN).astype(jnp.bfloat16)     # (B, 50), PyTorch (C,H,W) flatten
    bsz = xf.shape[0]
    block_b = _pick_block_b(bsz)                      # static under jit
    bpad = pl.cdiv(bsz, block_b) * block_b
    if bpad != bsz:
        xf = jnp.pad(xf, ((0, bpad - bsz), (0, 0)))

    def resident(a):                                  # constants: DMA'd once, VMEM-resident
        return pl.BlockSpec(a.shape, lambda i: (0, 0))

    args = [xf, consts['w1'], consts['b1'], consts['p'], consts['q'],
            consts['w2'], consts['b2'], consts['wf1'], consts['bf1'],
            consts['wf2'], consts['bf2']]
    in_specs = [pl.BlockSpec((block_b, F_IN), lambda i: (i, 0))] + \
               [resident(a) for a in args[1:]]

    out = pl.pallas_call(
        value_func_kernel,
        out_shape=jax.ShapeDtypeStruct((bpad, OUT_LANES), jnp.float32),
        grid=(bpad // block_b,),
        in_specs=in_specs,
        out_specs=pl.BlockSpec((block_b, OUT_LANES), lambda i: (i, 0)),
        compiler_params=pltpu.CompilerParams(dimension_semantics=("parallel",)),
    )(*args)
    return out[:bsz, :1]


def ref_forward(x, p):
    """Pure-JAX f32 reference: the module's forward applied independently per sample."""
    x = x.reshape(-1, CIN, H, W).astype(jnp.float32)
    hp = jax.lax.Precision.HIGHEST

    def conv(z, w, b):
        y = jax.lax.conv_general_dilated(
            z, w, (1, 1), ((1, 1), (1, 1)),
            dimension_numbers=('NCHW', 'OIHW', 'NCHW'), precision=hp)
        return y + b[None, :, None, None]

    def bn(z):   # per-sample stats (module forward always sees batch=1, training mode)
        mean = jnp.mean(z, axis=(2, 3), keepdims=True)
        var = jnp.mean((z - mean) ** 2, axis=(2, 3), keepdims=True)
        return (z - mean) / jnp.sqrt(var + EPS)

    z = bn(jax.nn.relu(conv(x, p['w_conv1'], p['b_conv1'])))
    z = bn(jax.nn.relu(conv(z, p['w_conv2'], p['b_conv2'])))
    flat = z.reshape(z.shape[0], -1)                                   # (B, 400), C,H,W order
    h = jax.nn.relu(jnp.dot(flat, p['w_fc1'].T, precision=hp) + p['b_fc1'][None, :])
    return jnp.dot(h, p['w_fc2'].T, precision=hp) + p['b_fc2'][None, :]


if __name__ == "__main__":
    # The module's forward handles one (1,2,5,5) sample; the kernel batches B such
    # samples (per-sample BatchNorm statistics, i.e. B independent module forwards).
    # TODO(synk): BatchNorm running-stat updates (training-mode side effect) are not
    # modeled; they do not affect the forward output.
    B = 256
    key = jax.random.PRNGKey(0)
    x = jax.random.normal(key, (B, CIN, H, W), jnp.float32)
    params = make_params(jax.random.PRNGKey(1))        # deterministic synthetic weights
    consts = prepare_constants(params)                 # one-time host-side re-layout

    out = jax.block_until_ready(value_func_cnn_forward(x, consts))
    ref = ref_forward(x, params)
    assert out.shape == (B, 1)
    # bf16 MXU operands vs a HIGHEST-precision f32 reference; the per-sample BatchNorm
    # rsqrt can amplify bf16 rounding for low-variance channels, hence the slightly
    # looser absolute tolerance than the all-f32 variant.
    np.testing.assert_allclose(np.asarray(out), np.asarray(ref), rtol=2e-2, atol=4e-2)
    print("KERNEL_OK")
</pallas_src>

<mosaic_0001>
module attributes {stable_mosaic.version = 11 : i64} {
  func.func @value_func_kernel(%arg0: i32, %arg1: memref<128x50xbf16, #tpu.memory_space<vmem>>, %arg2: memref<50x400xbf16, #tpu.memory_space<vmem>>, %arg3: memref<1x400xf32, #tpu.memory_space<vmem>>, %arg4: memref<400x16xbf16, #tpu.memory_space<vmem>>, %arg5: memref<16x400xbf16, #tpu.memory_space<vmem>>, %arg6: memref<400x400xbf16, #tpu.memory_space<vmem>>, %arg7: memref<1x400xf32, #tpu.memory_space<vmem>>, %arg8: memref<400x32xbf16, #tpu.memory_space<vmem>>, %arg9: memref<1x32xf32, #tpu.memory_space<vmem>>, %arg10: memref<32x128xbf16, #tpu.memory_space<vmem>>, %arg11: memref<1x128xf32, #tpu.memory_space<vmem>>, %arg12: memref<128x128xf32, #tpu.memory_space<vmem>>) attributes {dimension_semantics = [#tpu.dimension_semantics<parallel>], iteration_bounds = array<i64: 2>, scalar_prefetch = 0 : i64, scratch_operands = 0 : i64, tpu.core_type = #tpu.core_type<tc>, window_params = [{transform_indices = @transform_0, window_bounds = array<i64: 128, 50>}, {pipeline_mode = #tpu.pipeline_mode<synchronous>, transform_indices = @transform_1, window_bounds = array<i64: 50, 400>}, {pipeline_mode = #tpu.pipeline_mode<synchronous>, transform_indices = @transform_2, window_bounds = array<i64: 1, 400>}, {pipeline_mode = #tpu.pipeline_mode<synchronous>, transform_indices = @transform_3, window_bounds = array<i64: 400, 16>}, {pipeline_mode = #tpu.pipeline_mode<synchronous>, transform_indices = @transform_4, window_bounds = array<i64: 16, 400>}, {pipeline_mode = #tpu.pipeline_mode<synchronous>, transform_indices = @transform_5, window_bounds = array<i64: 400, 400>}, {pipeline_mode = #tpu.pipeline_mode<synchronous>, transform_indices = @transform_6, window_bounds = array<i64: 1, 400>}, {pipeline_mode = #tpu.pipeline_mode<synchronous>, transform_indices = @transform_7, window_bounds = array<i64: 400, 32>}, {pipeline_mode = #tpu.pipeline_mode<synchronous>, transform_indices = @transform_8, window_bounds = array<i64: 1, 32>}, {pipeline_mode = #tpu.pipeline_mode<synchronous>, transform_indices = @transform_9, window_bounds = array<i64: 32, 128>}, {pipeline_mode = #tpu.pipeline_mode<synchronous>, transform_indices = @transform_10, window_bounds = array<i64: 1, 128>}, {transform_indices = @transform_11, window_bounds = array<i64: 128, 128>}]} {
    %c0 = arith.constant 0 : index
    %c0_0 = arith.constant 0 : index
    %0 = vector.load %arg4[%c0, %c0_0] : memref<400x16xbf16, #tpu.memory_space<vmem>>, vector<400x16xbf16>
    %c0_1 = arith.constant 0 : index
    %c0_2 = arith.constant 0 : index
    %1 = vector.load %arg5[%c0_1, %c0_2] : memref<16x400xbf16, #tpu.memory_space<vmem>>, vector<16x400xbf16>
    %c0_3 = arith.constant 0 : index
    %c0_4 = arith.constant 0 : index
    %2 = vector.load %arg1[%c0_3, %c0_4] : memref<128x50xbf16, #tpu.memory_space<vmem>>, vector<128x50xbf16>
    %c0_5 = arith.constant 0 : index
    %c0_6 = arith.constant 0 : index
    %3 = vector.load %arg2[%c0_5, %c0_6] : memref<50x400xbf16, #tpu.memory_space<vmem>>, vector<50x400xbf16>
    %cst = arith.constant dense<0.000000e+00> : vector<128x400xf32>
    %4 = tpu.matmul %2, %3, %cst {dimension_numbers = #tpu.dot_dimension_numbers<[1], [0], [0], [1], [0, 0, 1, 1], [], []>} : vector<128x50xbf16>, vector<50x400xbf16>, vector<128x400xf32> -> vector<128x400xf32>
    %c0_7 = arith.constant 0 : index
    %c0_8 = arith.constant 0 : index
    %5 = vector.load %arg3[%c0_7, %c0_8] : memref<1x400xf32, #tpu.memory_space<vmem>>, vector<1x400xf32>
    %6 = vector.broadcast %5 : vector<1x400xf32> to vector<128x400xf32>
    %7 = arith.addf %4, %6 : vector<128x400xf32>
    %cst_9 = arith.constant 0.000000e+00 : f32
    %8 = vector.broadcast %cst_9 : f32 to vector<128x400xf32>
    %9 = arith.maximumf %7, %8 : vector<128x400xf32>
    %10 = arith.truncf %9 : vector<128x400xf32> to vector<128x400xbf16>
    %cst_10 = arith.constant dense<0.000000e+00> : vector<128x16xf32>
    %11 = tpu.matmul %10, %0, %cst_10 {dimension_numbers = #tpu.dot_dimension_numbers<[1], [0], [0], [1], [0, 0, 1, 1], [], []>} : vector<128x400xbf16>, vector<400x16xbf16>, vector<128x16xf32> -> vector<128x16xf32>
    %12 = arith.mulf %9, %9 : vector<128x400xf32>
    %13 = arith.truncf %12 : vector<128x400xf32> to vector<128x400xbf16>
    %cst_11 = arith.constant dense<0.000000e+00> : vector<128x16xf32>
    %14 = tpu.matmul %13, %0, %cst_11 {dimension_numbers = #tpu.dot_dimension_numbers<[1], [0], [0], [1], [0, 0, 1, 1], [], []>} : vector<128x400xbf16>, vector<400x16xbf16>, vector<128x16xf32> -> vector<128x16xf32>
    %cst_12 = arith.constant 4.000000e-02 : f32
    %15 = vector.broadcast %cst_12 : f32 to vector<128x16xf32>
    %16 = arith.mulf %11, %15 : vector<128x16xf32>
    %cst_13 = arith.constant 4.000000e-02 : f32
    %17 = vector.broadcast %cst_13 : f32 to vector<128x16xf32>
    %18 = arith.mulf %14, %17 : vector<128x16xf32>
    %19 = arith.mulf %16, %16 : vector<128x16xf32>
    %20 = arith.subf %18, %19 : vector<128x16xf32>
    %cst_14 = arith.constant 9.99999974E-6 : f32
    %21 = vector.broadcast %cst_14 : f32 to vector<128x16xf32>
    %22 = arith.addf %20, %21 : vector<128x16xf32>
    %23 = math.rsqrt %22 : vector<128x16xf32>
    %24 = arith.mulf %16, %23 : vector<128x16xf32>
    %25 = arith.truncf %23 : vector<128x16xf32> to vector<128x16xbf16>
    %cst_15 = arith.constant dense<0.000000e+00> : vector<128x400xf32>
    %26 = tpu.matmul %25, %1, %cst_15 {dimension_numbers = #tpu.dot_dimension_numbers<[1], [0], [0], [1], [0, 0, 1, 1], [], []>} : vector<128x16xbf16>, vector<16x400xbf16>, vector<128x400xf32> -> vector<128x400xf32>
    %27 = arith.mulf %9, %26 : vector<128x400xf32>
    %28 = arith.truncf %24 : vector<128x16xf32> to vector<128x16xbf16>
    %cst_16 = arith.constant dense<0.000000e+00> : vector<128x400xf32>
    %29 = tpu.matmul %28, %1, %cst_16 {dimension_numbers = #tpu.dot_dimension_numbers<[1], [0], [0], [1], [0, 0, 1, 1], [], []>} : vector<128x16xbf16>, vector<16x400xbf16>, vector<128x400xf32> -> vector<128x400xf32>
    %30 = arith.subf %27, %29 : vector<128x400xf32>
    %31 = arith.truncf %30 : vector<128x400xf32> to vector<128x400xbf16>
    %c0_17 = arith.constant 0 : index
    %c0_18 = arith.constant 0 : index
    %32 = vector.load %arg6[%c0_17, %c0_18] : memref<400x400xbf16, #tpu.memory_space<vmem>>, vector<400x400xbf16>
    %cst_19 = arith.constant dense<0.000000e+00> : vector<128x400xf32>
    %33 = tpu.matmul %31, %32, %cst_19 {dimension_numbers = #tpu.dot_dimension_numbers<[1], [0], [0], [1], [0, 0, 1, 1], [], []>} : vector<128x400xbf16>, vector<400x400xbf16>, vector<128x400xf32> -> vector<128x400xf32>
    %c0_20 = arith.constant 0 : index
    %c0_21 = arith.constant 0 : index
    %34 = vector.load %arg7[%c0_20, %c0_21] : memref<1x400xf32, #tpu.memory_space<vmem>>, vector<1x400xf32>
    %35 = vector.broadcast %34 : vector<1x400xf32> to vector<128x400xf32>
    %36 = arith.addf %33, %35 : vector<128x400xf32>
    %cst_22 = arith.constant 0.000000e+00 : f32
    %37 = vector.broadcast %cst_22 : f32 to vector<128x400xf32>
    %38 = arith.maximumf %36, %37 : vector<128x400xf32>
    %39 = arith.truncf %38 : vector<128x400xf32> to vector<128x400xbf16>
    %cst_23 = arith.constant dense<0.000000e+00> : vector<128x16xf32>
    %40 = tpu.matmul %39, %0, %cst_23 {dimension_numbers = #tpu.dot_dimension_numbers<[1], [0], [0], [1], [0, 0, 1, 1], [], []>} : vector<128x400xbf16>, vector<400x16xbf16>, vector<128x16xf32> -> vector<128x16xf32>
    %41 = arith.mulf %38, %38 : vector<128x400xf32>
    %42 = arith.truncf %41 : vector<128x400xf32> to vector<128x400xbf16>
    %cst_24 = arith.constant dense<0.000000e+00> : vector<128x16xf32>
    %43 = tpu.matmul %42, %0, %cst_24 {dimension_numbers = #tpu.dot_dimension_numbers<[1], [0], [0], [1], [0, 0, 1, 1], [], []>} : vector<128x400xbf16>, vector<400x16xbf16>, vector<128x16xf32> -> vector<128x16xf32>
    %cst_25 = arith.constant 4.000000e-02 : f32
    %44 = vector.broadcast %cst_25 : f32 to vector<128x16xf32>
    %45 = arith.mulf %40, %44 : vector<128x16xf32>
    %cst_26 = arith.constant 4.000000e-02 : f32
    %46 = vector.broadcast %cst_26 : f32 to vector<128x16xf32>
    %47 = arith.mulf %43, %46 : vector<128x16xf32>
    %48 = arith.mulf %45, %45 : vector<128x16xf32>
    %49 = arith.subf %47, %48 : vector<128x16xf32>
    %cst_27 = arith.constant 9.99999974E-6 : f32
    %50 = vector.broadcast %cst_27 : f32 to vector<128x16xf32>
    %51 = arith.addf %49, %50 : vector<128x16xf32>
    %52 = math.rsqrt %51 : vector<128x16xf32>
    %53 = arith.mulf %45, %52 : vector<128x16xf32>
    %54 = arith.truncf %52 : vector<128x16xf32> to vector<128x16xbf16>
    %cst_28 = arith.constant dense<0.000000e+00> : vector<128x400xf32>
    %55 = tpu.matmul %54, %1, %cst_28 {dimension_numbers = #tpu.dot_dimension_numbers<[1], [0], [0], [1], [0, 0, 1, 1], [], []>} : vector<128x16xbf16>, vector<16x400xbf16>, vector<128x400xf32> -> vector<128x400xf32>
    %56 = arith.mulf %38, %55 : vector<128x400xf32>
    %57 = arith.truncf %53 : vector<128x16xf32> to vector<128x16xbf16>
    %cst_29 = arith.constant dense<0.000000e+00> : vector<128x400xf32>
    %58 = tpu.matmul %57, %1, %cst_29 {dimension_numbers = #tpu.dot_dimension_numbers<[1], [0], [0], [1], [0, 0, 1, 1], [], []>} : vector<128x16xbf16>, vector<16x400xbf16>, vector<128x400xf32> -> vector<128x400xf32>
    %59 = arith.subf %56, %58 : vector<128x400xf32>
    %60 = arith.truncf %59 : vector<128x400xf32> to vector<128x400xbf16>
    %c0_30 = arith.constant 0 : index
    %c0_31 = arith.constant 0 : index
    %61 = vector.load %arg8[%c0_30, %c0_31] : memref<400x32xbf16, #tpu.memory_space<vmem>>, vector<400x32xbf16>
    %cst_32 = arith.constant dense<0.000000e+00> : vector<128x32xf32>
    %62 = tpu.matmul %60, %61, %cst_32 {dimension_numbers = #tpu.dot_dimension_numbers<[1], [0], [0], [1], [0, 0, 1, 1], [], []>} : vector<128x400xbf16>, vector<400x32xbf16>, vector<128x32xf32> -> vector<128x32xf32>
    %c0_33 = arith.constant 0 : index
    %c0_34 = arith.constant 0 : index
    %63 = vector.load %arg9[%c0_33, %c0_34] : memref<1x32xf32, #tpu.memory_space<vmem>>, vector<1x32xf32>
    %64 = vector.broadcast %63 : vector<1x32xf32> to vector<128x32xf32>
    %65 = arith.addf %62, %64 : vector<128x32xf32>
    %cst_35 = arith.constant 0.000000e+00 : f32
    %66 = vector.broadcast %cst_35 : f32 to vector<128x32xf32>
    %67 = arith.maximumf %65, %66 : vector<128x32xf32>
    %68 = arith.truncf %67 : vector<128x32xf32> to vector<128x32xbf16>
    %c0_36 = arith.constant 0 : index
    %c0_37 = arith.constant 0 : index
    %69 = vector.load %arg10[%c0_36, %c0_37] : memref<32x128xbf16, #tpu.memory_space<vmem>>, vector<32x128xbf16>
    %cst_38 = arith.constant dense<0.000000e+00> : vector<128x128xf32>
    %70 = tpu.matmul %68, %69, %cst_38 {dimension_numbers = #tpu.dot_dimension_numbers<[1], [0], [0], [1], [0, 0, 1, 1], [], []>} : vector<128x32xbf16>, vector<32x128xbf16>, vector<128x128xf32> -> vector<128x128xf32>
    %c0_39 = arith.constant 0 : index
    %c0_40 = arith.constant 0 : index
    %71 = vector.load %arg11[%c0_39, %c0_40] : memref<1x128xf32, #tpu.memory_space<vmem>>, vector<1x128xf32>
    %72 = vector.broadcast %71 : vector<1x128xf32> to vector<128x128xf32>
    %73 = arith.addf %70, %72 : vector<128x128xf32>
    %c0_41 = arith.constant 0 : index
    %c0_42 = arith.constant 0 : index
    %74 = vector.load %arg12[%c0_41, %c0_42] : memref<128x128xf32, #tpu.memory_space<vmem>>, vector<128x128xf32>
    tpu.vector_store %arg12[%c0_41, %c0_42], %73 {strides = array<i32>} : memref<128x128xf32, #tpu.memory_space<vmem>>, vector<128x128xf32>,
    return
  }
  func.func @transform_0(%arg0: i32) -> (i32, i32) {
    %c0_i32 = arith.constant 0 : i32
    %c0_i32_0 = arith.constant 0 : i32
    return %arg0, %c0_i32 : i32, i32
  }
  func.func @transform_1(%arg0: i32) -> (i32, i32) {
    %c0_i32 = arith.constant 0 : i32
    %c0_i32_0 = arith.constant 0 : i32
    %c0_i32_1 = arith.constant 0 : i32
    return %c0_i32, %c0_i32_0 : i32, i32
  }
  func.func @transform_2(%arg0: i32) -> (i32, i32) {
    %c0_i32 = arith.constant 0 : i32
    %c0_i32_0 = arith.constant 0 : i32
    %c0_i32_1 = arith.constant 0 : i32
    return %c0_i32, %c0_i32_0 : i32, i32
  }
  func.func @transform_3(%arg0: i32) -> (i32, i32) {
    %c0_i32 = arith.constant 0 : i32
    %c0_i32_0 = arith.constant 0 : i32
    %c0_i32_1 = arith.constant 0 : i32
    return %c0_i32, %c0_i32_0 : i32, i32
  }
  func.func @transform_4(%arg0: i32) -> (i32, i32) {
    %c0_i32 = arith.constant 0 : i32
    %c0_i32_0 = arith.constant 0 : i32
    %c0_i32_1 = arith.constant 0 : i32
    return %c0_i32, %c0_i32_0 : i32, i32
  }
  func.func @transform_5(%arg0: i32) -> (i32, i32) {
    %c0_i32 = arith.constant 0 : i32
    %c0_i32_0 = arith.constant 0 : i32
    %c0_i32_1 = arith.constant 0 : i32
    return %c0_i32, %c0_i32_0 : i32, i32
  }
  func.func @transform_6(%arg0: i32) -> (i32, i32) {
    %c0_i32 = arith.constant 0 : i32
    %c0_i32_0 = arith.constant 0 : i32
    %c0_i32_1 = arith.constant 0 : i32
    return %c0_i32, %c0_i32_0 : i32, i32
  }
  func.func @transform_7(%arg0: i32) -> (i32, i32) {
    %c0_i32 = arith.constant 0 : i32
    %c0_i32_0 = arith.constant 0 : i32
    %c0_i32_1 = arith.constant 0 : i32
    return %c0_i32, %c0_i32_0 : i32, i32
  }
  func.func @transform_8(%arg0: i32) -> (i32, i32) {
    %c0_i32 = arith.constant 0 : i32
    %c0_i32_0 = arith.constant 0 : i32
    %c0_i32_1 = arith.constant 0 : i32
    return %c0_i32, %c0_i32_0 : i32, i32
  }
  func.func @transform_9(%arg0: i32) -> (i32, i32) {
    %c0_i32 = arith.constant 0 : i32
    %c0_i32_0 = arith.constant 0 : i32
    %c0_i32_1 = arith.constant 0 : i32
    return %c0_i32, %c0_i32_0 : i32, i32
  }
  func.func @transform_10(%arg0: i32) -> (i32, i32) {
    %c0_i32 = arith.constant 0 : i32
    %c0_i32_0 = arith.constant 0 : i32
    %c0_i32_1 = arith.constant 0 : i32
    return %c0_i32, %c0_i32_0 : i32, i32
  }
  func.func @transform_11(%arg0: i32) -> (i32, i32) {
    %c0_i32 = arith.constant 0 : i32
    %c0_i32_0 = arith.constant 0 : i32
    return %arg0, %c0_i32 : i32, i32
  }
}

</mosaic_0001>

<llo_original>
// kernel: value_func_cnn_forward.1
$region0: #{value_func_cnn_forward.1}
  #allocation0 [shape = 'u32[]', space=smem, size = 0x4, offset = 0x4, fixed_abs, tag = 'smem constant byte address 0x4 - core index']
  #allocation1 [shape = 'u32[144,128]{1,0:T(1,128)}', space=vmem, size = 0x12000, scoped, tag = 'internal scratch']
  %s0 = inlined_call_operand.vmem [shape: bf16[256,50], index: 0, kind: input, shape index: {}]
  %s1 = inlined_call_operand.vmem [shape: bf16[50,400], index: 1, kind: input, shape index: {}]
  %s2 = inlined_call_operand.vmem [shape: f32[1,400], index: 2, kind: input, shape index: {}]
  %s3 = inlined_call_operand.vmem [shape: bf16[400,16], index: 3, kind: input, shape index: {}]
  %s4 = inlined_call_operand.vmem [shape: bf16[16,400], index: 4, kind: input, shape index: {}]
  %s5 = inlined_call_operand.vmem [shape: bf16[400,400], index: 5, kind: input, shape index: {}]
  %s6 = inlined_call_operand.vmem [shape: f32[1,400], index: 6, kind: input, shape index: {}]
  %s7 = inlined_call_operand.vmem [shape: bf16[400,32], index: 7, kind: input, shape index: {}]
  %s8 = inlined_call_operand.vmem [shape: f32[1,32], index: 8, kind: input, shape index: {}]
  %s9 = inlined_call_operand.vmem [shape: bf16[32,128], index: 9, kind: input, shape index: {}]
  %s10 = inlined_call_operand.vmem [shape: f32[1,128], index: 10, kind: input, shape index: {}]
  %s11 = inlined_call_operand.vmem [shape: f32[256,128], index: 11, kind: output, shape index: {}]
  %s12 = sld [smem:[#allocation0]]
  $region77: #{value_func_cnn_forward.1} parent=0
    _
  %s14 = ssub.s32 1, %s12
  %s15 = scalar_select 0, %s14, %s12
  loop: start=0, step=1, limit=4
  $region2: #{value_func_cnn_forward.1} parent=0 // loop_pre_header
    _
  $region3: #{value_func_cnn_forward.1} parent=0 // loop_header
    %s17 = sphi 0, %s21
    %p18 = scmp.ge.s32.totalorder %s17, 4
    %s27 = sphi 0, %s29
    %s30 = sphi 0, %s27
    %s31 = sphi 0, %s30
    %s47 = sphi 0, %s31
    %s51 = sphi 0, %s51
    %s53 = sphi 0, %s51
    %s54 = sphi 0, %s53
    %s68 = sphi 0, %s54
    %s72 = sphi 0, %s72
    %s74 = sphi 0, %s72
    %s75 = sphi 0, %s74
    %s89 = sphi 0, %s75
    %s93 = sphi 0, %s93
    %s95 = sphi 0, %s93
    %s96 = sphi 0, %s95
    %s110 = sphi 0, %s96
    %s114 = sphi 0, %s114
    %s116 = sphi 0, %s114
    %s117 = sphi 0, %s116
    %s131 = sphi 0, %s117
    %s135 = sphi 0, %s135
    %s137 = sphi 0, %s135
    %s138 = sphi 0, %s137
    %s152 = sphi 0, %s138
    %s156 = sphi 0, %s156
    %s158 = sphi 0, %s156
    %s159 = sphi 0, %s158
    %s173 = sphi 0, %s159
    %s177 = sphi 0, %s177
    %s179 = sphi 0, %s177
    %s180 = sphi 0, %s179
    %s194 = sphi 0, %s180
    %s198 = sphi 0, %s198
    %s200 = sphi 0, %s198
    %s201 = sphi 0, %s200
    %s215 = sphi 0, %s201
    %s219 = sphi 0, %s219
    %s221 = sphi 0, %s219
    %s222 = sphi 0, %s221
    %s236 = sphi 0, %s222
    %s240 = sphi 0, %s240
    %s242 = sphi 0, %s240
    %s243 = sphi 0, %s242
    %s257 = sphi 0, %s243
    %s263 = sphi 0, %s265
    %s266 = sphi 0, %s263
    %s267 = sphi 0, %s266
    %s283 = sphi 0, %s267
  $region4: #{value_func_cnn_forward.1} parent=0 // loop_header_branch
    %20 = sbr.rel (%p18) target = $region8
  $region5: #{value_func_cnn_forward.1} parent=0 // loop_body
    %s22 = ssub.s32 %s17, 1
    %s23 = ssub.s32 %s17, 2
    %s24 = sadd.s32 %s17, 1
    %s25 = ssub.s32 %s17, %s24
    %p26 = scmp.eq.s32.totalorder %s25, 0
    %s28 = sadd.s32 %s27, 1
    %s29 = scalar_select %p26, %s27, %s28
    %p32 = pneg %p26
    %p33 = scmp.eq.s32.totalorder %s17, 1
    %p34 = por %p32, %p33
    %p35 = scmp.ne.s32.totalorder %s27, %s30
    %p36 = scmp.eq.s32.totalorder %s17, 0
    %p37 = por %p35, %p36
    %p38 = scmp.ne.s32.totalorder %s27, %s30
    %p39 = scmp.eq.s32.totalorder %s22, 1
    %p40 = por %p38, %p39
    %p41 = scmp.ne.s32.totalorder %s30, %s31
    %p42 = scmp.eq.s32.totalorder %s22, 0
    %p43 = por %p41, %p42
    %p44 = scmp.ne.s32.totalorder %s30, %s31
    %p45 = scmp.eq.s32.totalorder %s23, 1
    %p46 = por %p44, %p45
    %p48 = scmp.ne.s32.totalorder %s31, %s47
    %p49 = scmp.eq.s32.totalorder %s23, 0
    %p50 = por %p48, %p49
    %s52 = sadd.s32 %s51, 1
    %p55 = scmp.eq.s32.totalorder %s17, 1
    %p56 = scmp.ne.s32.totalorder %s51, %s53
    %p57 = scmp.eq.s32.totalorder %s17, 0
    %p58 = por %p56, %p57
    %p59 = scmp.ne.s32.totalorder %s51, %s53
    %p60 = scmp.eq.s32.totalorder %s22, 1
    %p61 = por %p59, %p60
    %p62 = scmp.ne.s32.totalorder %s53, %s54
    %p63 = scmp.eq.s32.totalorder %s22, 0
    %p64 = por %p62, %p63
    %p65 = scmp.ne.s32.totalorder %s53, %s54
    %p66 = scmp.eq.s32.totalorder %s23, 1
    %p67 = por %p65, %p66
    %p69 = scmp.ne.s32.totalorder %s54, %s68
    %p70 = scmp.eq.s32.totalorder %s23, 0
    %p71 = por %p69, %p70
    %s73 = sadd.s32 %s72, 1
    %p76 = scmp.eq.s32.totalorder %s17, 1
    %p77 = scmp.ne.s32.totalorder %s72, %s74
    %p78 = scmp.eq.s32.totalorder %s17, 0
    %p79 = por %p77, %p78
    %p80 = scmp.ne.s32.totalorder %s72, %s74
    %p81 = scmp.eq.s32.totalorder %s22, 1
    %p82 = por %p80, %p81
    %p83 = scmp.ne.s32.totalorder %s74, %s75
    %p84 = scmp.eq.s32.totalorder %s22, 0
    %p85 = por %p83, %p84
    %p86 = scmp.ne.s32.totalorder %s74, %s75
    %p87 = scmp.eq.s32.totalorder %s23, 1
    %p88 = por %p86, %p87
    %p90 = scmp.ne.s32.totalorder %s75, %s89
    %p91 = scmp.eq.s32.totalorder %s23, 0
    %p92 = por %p90, %p91
    %s94 = sadd.s32 %s93, 1
    %p97 = scmp.eq.s32.totalorder %s17, 1
    %p98 = scmp.ne.s32.totalorder %s93, %s95
    %p99 = scmp.eq.s32.totalorder %s17, 0
    %p100 = por %p98, %p99
    %p101 = scmp.ne.s32.totalorder %s93, %s95
    %p102 = scmp.eq.s32.totalorder %s22, 1
    %p103 = por %p101, %p102
    %p104 = scmp.ne.s32.totalorder %s95, %s96
    %p105 = scmp.eq.s32.totalorder %s22, 0
    %p106 = por %p104, %p105
    %p107 = scmp.ne.s32.totalorder %s95, %s96
    %p108 = scmp.eq.s32.totalorder %s23, 1
    %p109 = por %p107, %p108
    %p111 = scmp.ne.s32.totalorder %s96, %s110
    %p112 = scmp.eq.s32.totalorder %s23, 0
    %p113 = por %p111, %p112
    %s115 = sadd.s32 %s114, 1
    %p118 = scmp.eq.s32.totalorder %s17, 1
    %p119 = scmp.ne.s32.totalorder %s114, %s116
    %p120 = scmp.eq.s32.totalorder %s17, 0
    %p121 = por %p119, %p120
    %p122 = scmp.ne.s32.totalorder %s114, %s116
    %p123 = scmp.eq.s32.totalorder %s22, 1
    %p124 = por %p122, %p123
    %p125 = scmp.ne.s32.totalorder %s116, %s117
    %p126 = scmp.eq.s32.totalorder %s22, 0
    %p127 = por %p125, %p126
    %p128 = scmp.ne.s32.totalorder %s116, %s117
    %p129 = scmp.eq.s32.totalorder %s23, 1
    %p130 = por %p128, %p129
    %p132 = scmp.ne.s32.totalorder %s117, %s131
    %p133 = scmp.eq.s32.totalorder %s23, 0
    %p134 = por %p132, %p133
    %s136 = sadd.s32 %s135, 1
    %p139 = scmp.eq.s32.totalorder %s17, 1
    %p140 = scmp.ne.s32.totalorder %s135, %s137
    %p141 = scmp.eq.s32.totalorder %s17, 0
    %p142 = por %p140, %p141
    %p143 = scmp.ne.s32.totalorder %s135, %s137
    %p144 = scmp.eq.s32.totalorder %s22, 1
    %p145 = por %p143, %p144
    %p146 = scmp.ne.s32.totalorder %s137, %s138
    %p147 = scmp.eq.s32.totalorder %s22, 0
    %p148 = por %p146, %p147
    %p149 = scmp.ne.s32.totalorder %s137, %s138
    %p150 = scmp.eq.s32.totalorder %s23, 1
    %p151 = por %p149, %p150
    %p153 = scmp.ne.s32.totalorder %s138, %s152
    %p154 = scmp.eq.s32.totalorder %s23, 0
    %p155 = por %p153, %p154
    %s157 = sadd.s32 %s156, 1
    %p160 = scmp.eq.s32.totalorder %s17, 1
    %p161 = scmp.ne.s32.totalorder %s156, %s158
    %p162 = scmp.eq.s32.totalorder %s17, 0
    %p163 = por %p161, %p162
    %p164 = scmp.ne.s32.totalorder %s156, %s158
    %p165 = scmp.eq.s32.totalorder %s22, 1
    %p166 = por %p164, %p165
    %p167 = scmp.ne.s32.totalorder %s158, %s159
    %p168 = scmp.eq.s32.totalorder %s22, 0
    %p169 = por %p167, %p168
    %p170 = scmp.ne.s32.totalorder %s158, %s159
    %p171 = scmp.eq.s32.totalorder %s23, 1
    %p172 = por %p170, %p171
    %p174 = scmp.ne.s32.totalorder %s159, %s173
    %p175 = scmp.eq.s32.totalorder %s23, 0
    %p176 = por %p174, %p175
    %s178 = sadd.s32 %s177, 1
    %p181 = scmp.eq.s32.totalorder %s17, 1
    %p182 = scmp.ne.s32.totalorder %s177, %s179
    %p183 = scmp.eq.s32.totalorder %s17, 0
    %p184 = por %p182, %p183
    %p185 = scmp.ne.s32.totalorder %s177, %s179
    %p186 = scmp.eq.s32.totalorder %s22, 1
    %p187 = por %p185, %p186
    %p188 = scmp.ne.s32.totalorder %s179, %s180
    %p189 = scmp.eq.s32.totalorder %s22, 0
    %p190 = por %p188, %p189
    %p191 = scmp.ne.s32.totalorder %s179, %s180
    %p192 = scmp.eq.s32.totalorder %s23, 1
    %p193 = por %p191, %p192
    %p195 = scmp.ne.s32.totalorder %s180, %s194
    %p196 = scmp.eq.s32.totalorder %s23, 0
    %p197 = por %p195, %p196
    %s199 = sadd.s32 %s198, 1
    %p202 = scmp.eq.s32.totalorder %s17, 1
    %p203 = scmp.ne.s32.totalorder %s198, %s200
    %p204 = scmp.eq.s32.totalorder %s17, 0
    %p205 = por %p203, %p204
    %p206 = scmp.ne.s32.totalorder %s198, %s200
    %p207 = scmp.eq.s32.totalorder %s22, 1
    %p208 = por %p206, %p207
    %p209 = scmp.ne.s32.totalorder %s200, %s201
    %p210 = scmp.eq.s32.totalorder %s22, 0
    %p211 = por %p209, %p210
    %p212 = scmp.ne.s32.totalorder %s200, %s201
    %p213 = scmp.eq.s32.totalorder %s23, 1
    %p214 = por %p212, %p213
    %p216 = scmp.ne.s32.totalorder %s201, %s215
    %p217 = scmp.eq.s32.totalorder %s23, 0
    %p218 = por %p216, %p217
    %s220 = sadd.s32 %s219, 1
    %p223 = scmp.eq.s32.totalorder %s17, 1
    %p224 = scmp.ne.s32.totalorder %s219, %s221
    %p225 = scmp.eq.s32.totalorder %s17, 0
    %p226 = por %p224, %p225
    %p227 = scmp.ne.s32.totalorder %s219, %s221
    %p228 = scmp.eq.s32.totalorder %s22, 1
    %p229 = por %p227, %p228
    %p230 = scmp.ne.s32.totalorder %s221, %s222
    %p231 = scmp.eq.s32.totalorder %s22, 0
    %p232 = por %p230, %p231
    %p233 = scmp.ne.s32.totalorder %s221, %s222
    %p234 = scmp.eq.s32.totalorder %s23, 1
    %p235 = por %p233, %p234
    %p237 = scmp.ne.s32.totalorder %s222, %s236
    %p238 = scmp.eq.s32.totalorder %s23, 0
    %p239 = por %p237, %p238
    %s241 = sadd.s32 %s240, 1
    %p244 = scmp.eq.s32.totalorder %s17, 1
    %p245 = scmp.ne.s32.totalorder %s240, %s242
    %p246 = scmp.eq.s32.totalorder %s17, 0
    %p247 = por %p245, %p246
    %p248 = scmp.ne.s32.totalorder %s240, %s242
    %p249 = scmp.eq.s32.totalorder %s22, 1
    %p250 = por %p248, %p249
    %p251 = scmp.ne.s32.totalorder %s242, %s243
    %p252 = scmp.eq.s32.totalorder %s22, 0
    %p253 = por %p251, %p252
    %p254 = scmp.ne.s32.totalorder %s242, %s243
    %p255 = scmp.eq.s32.totalorder %s23, 1
    %p256 = por %p254, %p255
    %p258 = scmp.ne.s32.totalorder %s243, %s257
    %p259 = scmp.eq.s32.totalorder %s23, 0
    %p260 = por %p258, %p259
    %s261 = ssub.s32 %s17, %s24
    %p262 = scmp.eq.s32.totalorder %s261, 0
    %s264 = sadd.s32 %s263, 1
    %s265 = scalar_select %p262, %s263, %s264
    %p268 = pneg %p262
    %p269 = scmp.eq.s32.totalorder %s17, 1
    %p270 = por %p268, %p269
    %p271 = scmp.ne.s32.totalorder %s263, %s266
    %p272 = scmp.eq.s32.totalorder %s17, 0
    %p273 = por %p271, %p272
    %p274 = scmp.ne.s32.totalorder %s263, %s266
    %p275 = scmp.eq.s32.totalorder %s22, 1
    %p276 = por %p274, %p275
    %p277 = scmp.ne.s32.totalorder %s266, %s267
    %p278 = scmp.eq.s32.totalorder %s22, 0
    %p279 = por %p277, %p278
    %p280 = scmp.ne.s32.totalorder %s266, %s267
    %p281 = scmp.eq.s32.totalorder %s23, 1
    %p282 = por %p280, %p281
    %p284 = scmp.ne.s32.totalorder %s267, %s283
    %p285 = scmp.eq.s32.totalorder %s23, 0
    %p286 = por %p284, %p285
    %p287 = scmp.le.s32.totalorder 1, %s17
    %p288 = scmp.lt.s32.totalorder %s17, 3
    %p289 = pnand %p287, %p288
    %p290 = pneg %p289
    // Predicated region
    $region9: #{value_func_cnn_forward.1} parent=5 // pred_check
      _
    $region10: #{value_func_cnn_forward.1} parent=5 // pred_check_branch
      %292 = sbr.rel (%p289) target = $region12
    $region11: #{value_func_cnn_forward.1} parent=5 // pred_region
      %s293 = ssub.s32 %s17, 1
      // Predicated region
      $region13: #{value_func_cnn_forward.1} parent=11 // pred_check
        %p294 = pneg %p64
      $region14: #{value_func_cnn_forward.1} parent=11 // pred_check_branch
        %296 = sbr.rel (%p294) target = $region16
      $region15: #{value_func_cnn_forward.1} parent=11 // pred_region
        _
      $region16: #{value_func_cnn_forward.1} parent=11 // pred_fallthru
        _
      // Predicated region
      $region17: #{value_func_cnn_forward.1} parent=11 // pred_check
        %p297 = pneg %p85
      $region18: #{value_func_cnn_forward.1} parent=11 // pred_check_branch
        %299 = sbr.rel (%p297) target = $region20
      $region19: #{value_func_cnn_forward.1} parent=11 // pred_region
        _
      $region20: #{value_func_cnn_forward.1} parent=11 // pred_fallthru
        _
      // Predicated region
      $region21: #{value_func_cnn_forward.1} parent=11 // pred_check
        %p300 = pneg %p106
      $region22: #{value_func_cnn_forward.1} parent=11 // pred_check_branch
        %302 = sbr.rel (%p300) target = $region24
      $region23: #{value_func_cnn_forward.1} parent=11 // pred_region
        _
      $region24: #{value_func_cnn_forward.1} parent=11 // pred_fallthru
        _
      // Predicated region
      $region25: #{value_func_cnn_forward.1} parent=11 // pred_check
        %p303 = pneg %p127
      $region26: #{value_func_cnn_forward.1} parent=11 // pred_check_branch
        %305 = sbr.rel (%p303) target = $region28
      $region27: #{value_func_cnn_forward.1} parent=11 // pred_region
        _
      $region28: #{value_func_cnn_forward.1} parent=11 // pred_fallthru
        _
      // Predicated region
      $region29: #{value_func_cnn_forward.1} parent=11 // pred_check
        %p306 = pneg %p148
      $region30: #{value_func_cnn_forward.1} parent=11 // pred_check_branch
        %308 = sbr.rel (%p306) target = $region32
      $region31: #{value_func_cnn_forward.1} parent=11 // pred_region
        _
      $region32: #{value_func_cnn_forward.1} parent=11 // pred_fallthru
        _
      // Predicated region
      $region33: #{value_func_cnn_forward.1} parent=11 // pred_check
        %p309 = pneg %p169
      $region34: #{value_func_cnn_forward.1} parent=11 // pred_check_branch
        %311 = sbr.rel (%p309) target = $region36
      $region35: #{value_func_cnn_forward.1} parent=11 // pred_region
        _
      $region36: #{value_func_cnn_forward.1} parent=11 // pred_fallthru
        _
      // Predicated region
      $region37: #{value_func_cnn_forward.1} parent=11 // pred_check
        %p312 = pneg %p190
      $region38: #{value_func_cnn_forward.1} parent=11 // pred_check_branch
        %314 = sbr.rel (%p312) target = $region40
      $region39: #{value_func_cnn_forward.1} parent=11 // pred_region
        _
      $region40: #{value_func_cnn_forward.1} parent=11 // pred_fallthru
        _
      // Predicated region
      $region41: #{value_func_cnn_forward.1} parent=11 // pred_check
        %p315 = pneg %p211
      $region42: #{value_func_cnn_forward.1} parent=11 // pred_check_branch
        %317 = sbr.rel (%p315) target = $region44
      $region43: #{value_func_cnn_forward.1} parent=11 // pred_region
        _
      $region44: #{value_func_cnn_forward.1} parent=11 // pred_fallthru
        _
      // Predicated region
      $region45: #{value_func_cnn_forward.1} parent=11 // pred_check
        %p318 = pneg %p232
      $region46: #{value_func_cnn_forward.1} parent=11 // pred_check_branch
        %320 = sbr.rel (%p318) target = $region48
      $region47: #{value_func_cnn_forward.1} parent=11 // pred_region
        _
      $region48: #{value_func_cnn_forward.1} parent=11 // pred_fallthru
        _
      // Predicated region
      $region49: #{value_func_cnn_forward.1} parent=11 // pred_check
        %p321 = pneg %p253
      $region50: #{value_func_cnn_forward.1} parent=11 // pred_check_branch
        %323 = sbr.rel (%p321) target = $region52
      $region51: #{value_func_cnn_forward.1} parent=11 // pred_region
        _
      $region52: #{value_func_cnn_forward.1} parent=11 // pred_fallthru
        _
    $region12: #{value_func_cnn_forward.1} parent=5 // pred_fallthru
      _
    %p324 = scmp.lt.s32.totalorder %s17, 2
    // Predicated region
    $region53: #{value_func_cnn_forward.1} parent=5 // pred_check
      %p325 = pneg %p324
    $region54: #{value_func_cnn_forward.1} parent=5 // pred_check_branch
      %327 = sbr.rel (%p325) target = $region56
    $region55: #{value_func_cnn_forward.1} parent=5 // pred_region
      // Predicated region
      $region57: #{value_func_cnn_forward.1} parent=55 // pred_check
        %p328 = pneg %p37
      $region58: #{value_func_cnn_forward.1} parent=55 // pred_check_branch
        %330 = sbr.rel (%p328) target = $region60
      $region59: #{value_func_cnn_forward.1} parent=55 // pred_region
        %s331 = smul.u32 16, %s17
        %p332 = scmp.lt.s32.totalorder %s331, 31
        %s333 = scalar_select %p332, %s331, 31
        %s334 = smul.addr %s333, 4
        %s335 = scalar_lea.vmem %s0, %s334
        %s336 = smul.u32 16, %s17
      $region60: #{value_func_cnn_forward.1} parent=55 // pred_fallthru
        _
    $region56: #{value_func_cnn_forward.1} parent=5 // pred_fallthru
      _
    %p337 = scmp.le.s32.totalorder 1, %s17
    %p338 = scmp.lt.s32.totalorder %s17, 3
    %p339 = pnand %p337, %p338
    %p340 = pneg %p339
    // Predicated region
    $region61: #{value_func_cnn_forward.1} parent=5 // pred_check
      _
    $region62: #{value_func_cnn_forward.1} parent=5 // pred_check_branch
      %342 = sbr.rel (%p339) target = $region64
    $region63: #{value_func_cnn_forward.1} parent=5 // pred_region
      %s343 = ssub.s32 %s17, 1
      %s344 = smul.u32 16, %s22
      %p345 = scmp.lt.s32.totalorder %s344, 31
      %s346 = scalar_select %p345, %s344, 31
      %s347 = smul.addr %s346, 4
      %s348 = scalar_lea.vmem %s0, %s347
      %p349 = pneg %p43
      %p350 = pneg %p40
      %p351 = pneg %p64
      %p352 = pneg %p61
      %p353 = pneg %p85
      %p354 = pneg %p82
      %p355 = pneg %p106
      %p356 = pneg %p103
      %p357 = pneg %p127
      %p358 = pneg %p124
      %p359 = pneg %p148
      %p360 = pneg %p145
      %p361 = pneg %p169
      %p362 = pneg %p166
      %p363 = pneg %p190
      %p364 = pneg %p187
      %p365 = pneg %p211
      %p366 = pneg %p208
      %p367 = pneg %p232
      %p368 = pneg %p229
      %p369 = pneg %p253
      %p370 = pneg %p250
      %p371 = pneg %p279
      %p372 = pneg %p276
      %s373 = smul.u32 16, %s22
      %p374 = scmp.lt.s32.totalorder %s373, 31
      %s375 = scalar_select %p374, %s373, 31
      %s376 = smul.addr %s375, 8
      %s377 = scalar_lea.vmem %s11, %s376
      %s378 = smul.u32 16, %s22
      %p379 = scmp.lt.s32.totalorder %s378, 31
      %s380 = scalar_select %p379, %s378, 31
      %s381 = smul.addr %s380, 4
      %s382 = scalar_lea.vmem %s0, %s381
      %s383 = smul.u32 16, %s22
      %s384 = smul.u32 16, %s22
      %p385 = scmp.lt.s32.totalorder %s384, 31
      %s386 = scalar_select %p385, %s384, 31
      %s387 = smul.addr %s386, 8
      %s388 = scalar_lea.vmem %s11, %s387
      %s389 = smul.u32 16, %s22
      %v391 = vld [vmem:[%s3] sm:$0xf]
      %v392 = vld [vmem:[%s3 + $0x4] sm:$0xf]
      %v393 = vld [vmem:[%s3 + $0x8] sm:$0xf]
      %v394 = vld [vmem:[%s3 + $0xc] sm:$0xf]
      %v395 = vld [vmem:[%s3 + $0x10] sm:$0xf]
      %v396 = vld [vmem:[%s3 + $0x14] sm:$0xf]
      %v397 = vld [vmem:[%s3 + $0x18] sm:$0xf]
      %v398 = vld [vmem:[%s3 + $0x1c] sm:$0xf]
      %v399 = vld [vmem:[%s3 + $0x20] sm:$0xf]
      %v400 = vld [vmem:[%s3 + $0x24] sm:$0xf]
      %v401 = vld [vmem:[%s3 + $0x28] sm:$0xf]
      %v402 = vld [vmem:[%s3 + $0x2c] sm:$0xf]
      %v403 = vld [vmem:[%s3 + $0x30] sm:$0xf]
      %v404 = vld [vmem:[%s3 + $0x34] sm:$0xf]
      %v405 = vld [vmem:[%s3 + $0x38] sm:$0xf]
      %v406 = vld [vmem:[%s3 + $0x3c] sm:$0xf]
      %v407 = vld [vmem:[%s3 + $0x40] sm:$0xf]
      %v408 = vld [vmem:[%s3 + $0x44] sm:$0xf]
      %v409 = vld [vmem:[%s3 + $0x48] sm:$0xf]
      %v410 = vld [vmem:[%s3 + $0x4c] sm:$0xf]
      %v411 = vld [vmem:[%s3 + $0x50] sm:$0xf]
      %v412 = vld [vmem:[%s3 + $0x54] sm:$0xf]
      %v413 = vld [vmem:[%s3 + $0x58] sm:$0xf]
      %v414 = vld [vmem:[%s3 + $0x5c] sm:$0xf]
      %v415 = vld [vmem:[%s3 + $0x60] sm:$0xf]
      %v416 = vld [vmem:[%s3 + $0x64] sm:$0xf]
      %v417 = vld [vmem:[%s3 + $0x68] sm:$0xf]
      %v418 = vld [vmem:[%s3 + $0x6c] sm:$0xf]
      %v419 = vld [vmem:[%s3 + $0x70] sm:$0xf]
      %v420 = vld [vmem:[%s3 + $0x74] sm:$0xf]
      %v421 = vld [vmem:[%s3 + $0x78] sm:$0xf]
      %v422 = vld [vmem:[%s3 + $0x7c] sm:$0xf]
      %v423 = vld [vmem:[%s3 + $0x80] sm:$0xf]
      %v424 = vld [vmem:[%s3 + $0x84] sm:$0xf]
      %v425 = vld [vmem:[%s3 + $0x88] sm:$0xf]
      %v426 = vld [vmem:[%s3 + $0x8c] sm:$0xf]
      %v427 = vld [vmem:[%s3 + $0x90] sm:$0xf]
      %v428 = vld [vmem:[%s3 + $0x94] sm:$0xf]
      %v429 = vld [vmem:[%s3 + $0x98] sm:$0xf]
      %v430 = vld [vmem:[%s3 + $0x9c] sm:$0xf]
      %v431 = vld [vmem:[%s3 + $0xa0] sm:$0xf]
      %v432 = vld [vmem:[%s3 + $0xa4] sm:$0xf]
      %v433 = vld [vmem:[%s3 + $0xa8] sm:$0xf]
      %v434 = vld [vmem:[%s3 + $0xac] sm:$0xf]
      %v435 = vld [vmem:[%s3 + $0xb0] sm:$0xf]
      %v436 = vld [vmem:[%s3 + $0xb4] sm:$0xf]
      %v437 = vld [vmem:[%s3 + $0xb8] sm:$0xf]
      %v438 = vld [vmem:[%s3 + $0xbc] sm:$0xf]
      %v439 = vld [vmem:[%s3 + $0xc0] sm:$0xf]
      %v440 = vld [vmem:[%s3 + $0xc4] sm:$0xf]
      %v441 = vld [vmem:[%s4] sm:$0xff]
      %v442 = vld [vmem:[%s4 + $0x8] sm:$0xff]
      %v443 = vld [vmem:[%s4 + $0x10] sm:$0xff]
      %v444 = vld [vmem:[%s4 + $0x18] sm:$0xff]
      %v445 = vld [vmem:[%s382] sm:$0xf]
      %v446 = vld [vmem:[%s382 + $0x4] sm:$0xf]
      %v447 = vld [vmem:[%s382 + $0x8] sm:$0xf]
      %v448 = vld [vmem:[%s382 + $0xc] sm:$0xf]
      %v449 = vld [vmem:[%s382 + $0x10] sm:$0xf]
      %v450 = vld [vmem:[%s382 + $0x14] sm:$0xf]
      %v451 = vld [vmem:[%s382 + $0x18] sm:$0xf]
      %v452 = vld [vmem:[%s382 + $0x1c] sm:$0xf]
      %v453 = vld [vmem:[%s382 + $0x20] sm:$0xf]
      %v454 = vld [vmem:[%s382 + $0x24] sm:$0xf]
      %v455 = vld [vmem:[%s382 + $0x28] sm:$0xf]
      %v456 = vld [vmem:[%s382 + $0x2c] sm:$0xf]
      %v457 = vld [vmem:[%s382 + $0x30] sm:$0xf]
      %v458 = vld [vmem:[%s382 + $0x34] sm:$0xf]
      %v459 = vld [vmem:[%s382 + $0x38] sm:$0xf]
      %v460 = vld [vmem:[%s382 + $0x3c] sm:$0xf]
      %v461 = vld [vmem:[%s1] sm:$0xff]
      %v462 = vld [vmem:[%s1 + $0x8] sm:$0xff]
      %v463 = vld [vmem:[%s1 + $0x10] sm:$0xff]
      %v464 = vld [vmem:[%s1 + $0x18] sm:$0xff]
      %v465 = vld [vmem:[%s1 + $0x20] sm:$0xff]
      %v466 = vld [vmem:[%s1 + $0x28] sm:$0xff]
      %v467 = vld [vmem:[%s1 + $0x30] sm:$0xff]
      %v468 = vld [vmem:[%s1 + $0x38] sm:$0xff]
      %v469 = vld [vmem:[%s1 + $0x40] sm:$0xff]
      %v470 = vld [vmem:[%s1 + $0x48] sm:$0xff]
      %v471 = vld [vmem:[%s1 + $0x50] sm:$0xff]
      %v472 = vld [vmem:[%s1 + $0x58] sm:$0xff]
      %v473 = vld [vmem:[%s1 + $0x60] sm:$0x11]
      %v474 = vld [vmem:[%s1 + $0x68] sm:$0x11]
      %v475 = vld [vmem:[%s2] sm:$0xf]
      %v477 = vlaneseq
      %v478 = vshrl.u32 %v477, 7
      %v479 = vsub.s32 0, %v478
      %v480 = vrot.slane %v475, %v479
      %v481 = vlaneseq
      %v482 = vshrl.u32 %v481, 7
      %v483 = vsub.s32 1, %v482
      %v484 = vrot.slane %v475, %v483
      %v485 = vlaneseq
      %v486 = vshrl.u32 %v485, 7
      %v487 = vsub.s32 2, %v486
      %v488 = vrot.slane %v475, %v487
      %v489 = vlaneseq
      %v490 = vshrl.u32 %v489, 7
      %v491 = vsub.s32 3, %v490
      %v492 = vrot.slane %v475, %v491
      %v513 = vunpack.c.l.b16 %v445
      %v514 = vunpack.c.l.b16 %v446
      %v515 = vunpack.c.l.b16 %v447
      %v516 = vunpack.c.l.b16 %v448
      %v517 = vunpack.c.l.b16 %v449
      %v518 = vunpack.c.l.b16 %v450
      %v519 = vunpack.c.l.b16 %v451
      %v520 = vunpack.c.l.b16 %v452
      %v521 = vunpack.c.l.b16 %v453
      %v522 = vunpack.c.l.b16 %v454
      %v523 = vunpack.c.l.b16 %v455
      %v524 = vunpack.c.l.b16 %v456
      %v525 = vunpack.c.l.b16 %v457
      %v526 = vunpack.c.l.b16 %v458
      %v527 = vunpack.c.l.b16 %v459
      %v528 = vunpack.c.l.b16 %v460
      %v529 = vpack.c.b16 %v514, %v513
      %v530 = vpack.c.b16 %v516, %v515
      %v531 = vpack.c.b16 %v518, %v517
      %v532 = vpack.c.b16 %v520, %v519
      %v533 = vpack.c.b16 %v522, %v521
      %v534 = vpack.c.b16 %v524, %v523
      %v535 = vpack.c.b16 %v526, %v525
      %v536 = vpack.c.b16 %v528, %v527
      %v551 = vunpack.c.l.b16 %v461
      %v552 = vunpack.c.h.b16 %v461
      %v553 = vunpack.c.l.b16 %v462
      %v554 = vunpack.c.h.b16 %v462
      %v555 = vunpack.c.l.b16 %v463
      %v556 = vunpack.c.h.b16 %v463
      %v557 = vunpack.c.l.b16 %v464
      %v558 = vunpack.c.h.b16 %v464
      %v559 = vunpack.c.l.b16 %v465
      %v560 = vunpack.c.h.b16 %v465
      %v561 = vunpack.c.l.b16 %v466
      %v562 = vunpack.c.h.b16 %v466
      %v563 = vunpack.c.l.b16 %v467
      %v564 = vunpack.c.h.b16 %v467
      %v565 = vunpack.c.l.b16 %v468
      %v566 = vunpack.c.h.b16 %v468
      %v567 = vunpack.c.l.b16 %v469
      %v568 = vunpack.c.h.b16 %v469
      %v569 = vunpack.c.l.b16 %v470
      %v570 = vunpack.c.h.b16 %v470
      %v571 = vunpack.c.l.b16 %v471
      %v572 = vunpack.c.h.b16 %v471
      %v573 = vunpack.c.l.b16 %v472
      %v574 = vunpack.c.h.b16 %v472
      %v575 = vunpack.c.l.b16 %v473
      %v576 = vunpack.c.h.b16 %v473
      %v577 = vunpack.c.l.b16 %v474
      %v578 = vunpack.c.h.b16 %v474
      %v579 = vpack.c.b16 %v555, %v551
      %v580 = vpack.c.b16 %v556, %v552
      %v581 = vpack.c.b16 %v557, %v553
      %v582 = vpack.c.b16 %v558, %v554
      %v583 = vpack.c.b16 %v563, %v559
      %v584 = vpack.c.b16 %v564, %v560
      %v585 = vpack.c.b16 %v565, %v561
      %v586 = vpack.c.b16 %v566, %v562
      %v587 = vpack.c.b16 %v571, %v567
      %v588 = vpack.c.b16 %v572, %v568
      %v589 = vpack.c.b16 %v573, %v569
      %v590 = vpack.c.b16 %v574, %v570
      %v591 = vpack.c.b16 %v575, %v575
      %v592 = vpack.c.b16 %v576, %v576
      %v593 = vpack.c.b16 %v577, %v577
      %v594 = vpack.c.b16 %v578, %v578
      %vm607 = vcmask 408576
      %v609 = vsel %vm607, %v529, 0
      %v612 = vsel %vm607, %v530, 0
      %v615 = vsel %vm607, %v531, 0
      %v618 = vsel %vm607, %v532, 0
      %v621 = vsel %vm607, %v533, 0
      %v624 = vsel %vm607, %v534, 0
      %v627 = vsel %vm607, %v535, 0
      %v630 = vsel %vm607, %v536, 0
      %vm632 = vcmask 1040384
      %v634 = vsel %vm632, %v591, 0
      %v637 = vsel %vm632, %v592, 0
      %v640 = vsel %vm632, %v593, 0
      %v643 = vsel %vm632, %v594, 0
      %645 = vmatprep.subr.bf16.mxu0 %v580
      %646 = vmatpush1.bf16.msra.mxu0 %v579
      %647 = vmatprep.subr.bf16.mxu0 %v584
      %648 = vmatpush1.bf16.msra.mxu0 %v583
      %649 = vmatprep.subr.bf16.mxu0 %v588
      %650 = vmatpush1.bf16.msra.mxu0 %v587
      %651 = vmatprep.subr.bf16.mxu0 %v637
      %652 = vmatpush1.bf16.msra.mxu0 %v634
      %653 = vmatprep.subr.bf16.mxu0 0
      %654 = vmatpush1.bf16.msra.mxu0 0
      %655 = vmatprep.subr.bf16.mxu0 0
      %656 = vmatpush1.bf16.msra.mxu0 0
      %657 = vmatprep.subr.bf16.mxu0 0
      %658 = vmatpush1.bf16.msra.mxu0 0
      %659 = vmatprep.subr.bf16.mxu0 0
      %660 = vmatpush1.bf16.msra.mxu0 0
      %661 = vmatprep.subr.bf16.mxu0 0
      %662 = vmatpush1.bf16.msra.mxu0 0
      %663 = vmatprep.subr.bf16.mxu0 0
      %664 = vmatpush1.bf16.msra.mxu0 0
      %665 = vmatprep.subr.bf16.mxu0 0
      %666 = vmatpush1.bf16.msra.mxu0 0
      %667 = vmatprep.subr.bf16.mxu0 0
      %668 = vmatpush1.bf16.msra.mxu0 0
      %669 = vmatprep.subr.bf16.mxu0 0
      %670 = vmatpush1.bf16.msra.mxu0 0
      %671 = vmatprep.subr.bf16.mxu0 0
      %672 = vmatpush1.bf16.msra.mxu0 0
      %673 = vmatprep.subr.bf16.mxu0 0
      %674 = vmatpush1.bf16.msra.mxu0 0
      %675 = vmatprep.subr.bf16.mxu0 0
      %676 = vmatpush1.bf16.msra.mxu0 0
      %677 = vmatprep.mubr.bf16.mxu0 0
      %678 = vmatmul.mubr.bf16.gmra.mrb[0].mxu0 %v609
      %v679 = vpop.f32.mrb[0].mxu0
      %v680 = vadd.f32 %v480, %v679
      %v681 = vpop.f32.mrb[0].mxu0
      %v682 = vadd.f32 %v484, %v681
      %v683 = vpop.f32.mrb[0].mxu0
      %v684 = vadd.f32 %v480, %v683
      %v685 = vpop.f32.mrb[0].mxu0
      %v686 = vadd.f32 %v484, %v685
      %687 = vmatprep.mubr.bf16.mxu0 0
      %688 = vmatmul.mubr.bf16.gmra.mrb[0].mxu0 %v612
      %v689 = vpop.f32.mrb[0].mxu0
      %v690 = vadd.f32 %v480, %v689
      %v691 = vpop.f32.mrb[0].mxu0
      %v692 = vadd.f32 %v484, %v691
      %v693 = vpop.f32.mrb[0].mxu0
      %v694 = vadd.f32 %v480, %v693
      %v695 = vpop.f32.mrb[0].mxu0
      %v696 = vadd.f32 %v484, %v695
      %697 = vmatprep.mubr.bf16.mxu0 0
      %698 = vmatmul.mubr.bf16.gmra.mrb[0].mxu0 %v615
      %v699 = vpop.f32.mrb[0].mxu0
      %v700 = vadd.f32 %v480, %v699
      %v701 = vpop.f32.mrb[0].mxu0
      %v702 = vadd.f32 %v484, %v701
      %v703 = vpop.f32.mrb[0].mxu0
      %v704 = vadd.f32 %v480, %v703
      %v705 = vpop.f32.mrb[0].mxu0
      %v706 = vadd.f32 %v484, %v705
      %707 = vmatprep.mubr.bf16.mxu0 0
      %708 = vmatmul.mubr.bf16.gmra.mrb[0].mxu0 %v618
      %v709 = vpop.f32.mrb[0].mxu0
      %v710 = vadd.f32 %v480, %v709
      %v711 = vpop.f32.mrb[0].mxu0
      %v712 = vadd.f32 %v484, %v711
      %v713 = vpop.f32.mrb[0].mxu0
      %v714 = vadd.f32 %v480, %v713
      %v715 = vpop.f32.mrb[0].mxu0
      %v716 = vadd.f32 %v484, %v715
      %717 = vmatprep.mubr.bf16.mxu0 0
      %718 = vmatmul.mubr.bf16.gmra.mrb[0].mxu0 %v621
      %v719 = vpop.f32.mrb[0].mxu0
      %v720 = vadd.f32 %v480, %v719
      %v721 = vpop.f32.mrb[0].mxu0
      %v722 = vadd.f32 %v484, %v721
      %v723 = vpop.f32.mrb[0].mxu0
      %v724 = vadd.f32 %v480, %v723
      %v725 = vpop.f32.mrb[0].mxu0
      %v726 = vadd.f32 %v484, %v725
      %727 = vmatprep.mubr.bf16.mxu0 0
      %728 = vmatmul.mubr.bf16.gmra.mrb[0].mxu0 %v624
      %v729 = vpop.f32.mrb[0].mxu0
      %v730 = vadd.f32 %v480, %v729
      %v731 = vpop.f32.mrb[0].mxu0
      %v732 = vadd.f32 %v484, %v731
      %v733 = vpop.f32.mrb[0].mxu0
      %v734 = vadd.f32 %v480, %v733
      %v735 = vpop.f32.mrb[0].mxu0
      %v736 = vadd.f32 %v484, %v735
      %737 = vmatprep.mubr.bf16.mxu0 0
      %738 = vmatmul.mubr.bf16.gmra.mrb[0].mxu0 %v627
      %v739 = vpop.f32.mrb[0].mxu0
      %v740 = vadd.f32 %v480, %v739
      %v741 = vpop.f32.mrb[0].mxu0
      %v742 = vadd.f32 %v484, %v741
      %v743 = vpop.f32.mrb[0].mxu0
      %v744 = vadd.f32 %v480, %v743
      %v745 = vpop.f32.mrb[0].mxu0
      %v746 = vadd.f32 %v484, %v745
      %747 = vmatprep.mubr.bf16.mxu0 0
      %748 = vmatmul.mubr.bf16.gmra.mrb[0].mxu0 %v630
      %v749 = vpop.f32.mrb[0].mxu0
      %v750 = vadd.f32 %v480, %v749
      %v751 = vpop.f32.mrb[0].mxu0
      %v752 = vadd.f32 %v484, %v751
      %v753 = vpop.f32.mrb[0].mxu0
      %v754 = vadd.f32 %v480, %v753
      %v755 = vpop.f32.mrb[0].mxu0
      %v756 = vadd.f32 %v484, %v755
      %757 = vdwg.mxu0
      %758 = vmatprep.subr.bf16.mxu0 %v582
      %759 = vmatpush1.bf16.msra.mxu0 %v581
      %760 = vmatprep.subr.bf16.mxu0 %v586
      %761 = vmatpush1.bf16.msra.mxu0 %v585
      %762 = vmatprep.subr.bf16.mxu0 %v590
      %763 = vmatpush1.bf16.msra.mxu0 %v589
      %764 = vmatprep.subr.bf16.mxu0 %v643
      %765 = vmatpush1.bf16.msra.mxu0 %v640
      %766 = vmatprep.subr.bf16.mxu0 0
      %767 = vmatpush1.bf16.msra.mxu0 0
      %768 = vmatprep.subr.bf16.mxu0 0
      %769 = vmatpush1.bf16.msra.mxu0 0
      %770 = vmatprep.subr.bf16.mxu0 0
      %771 = vmatpush1.bf16.msra.mxu0 0
      %772 = vmatprep.subr.bf16.mxu0 0
      %773 = vmatpush1.bf16.msra.mxu0 0
      %774 = vmatprep.subr.bf16.mxu0 0
      %775 = vmatpush1.bf16.msra.mxu0 0
      %776 = vmatprep.subr.bf16.mxu0 0
      %777 = vmatpush1.bf16.msra.mxu0 0
      %778 = vmatprep.subr.bf16.mxu0 0
      %779 = vmatpush1.bf16.msra.mxu0 0
      %780 = vmatprep.subr.bf16.mxu0 0
      %781 = vmatpush1.bf16.msra.mxu0 0
      %782 = vmatprep.subr.bf16.mxu0 0
      %783 = vmatpush1.bf16.msra.mxu0 0
      %784 = vmatprep.subr.bf16.mxu0 0
      %785 = vmatpush1.bf16.msra.mxu0 0
      %786 = vmatprep.subr.bf16.mxu0 0
      %787 = vmatpush1.bf16.msra.mxu0 0
      %788 = vmatprep.subr.bf16.mxu0 0
      %789 = vmatpush1.bf16.msra.mxu0 0
      %790 = vmatprep.mubr.bf16.mxu0 0
      %791 = vmatmul.mubr.bf16.gmra.mrb[0].mxu0 %v609
      %v792 = vpop.f32.mrb[0].mxu0
      %v793 = vadd.f32 %v488, %v792
      %v794 = vpop.f32.mrb[0].mxu0
      %v795 = vadd.f32 %v492, %v794
      %v796 = vpop.f32.mrb[0].mxu0
      %v797 = vadd.f32 %v488, %v796
      %v798 = vpop.f32.mrb[0].mxu0
      %v799 = vadd.f32 %v492, %v798
      %800 = vmatprep.mubr.bf16.mxu0 0
      %801 = vmatmul.mubr.bf16.gmra.mrb[0].mxu0 %v612
      %v802 = vpop.f32.mrb[0].mxu0
      %v803 = vadd.f32 %v488, %v802
      %v804 = vpop.f32.mrb[0].mxu0
      %v805 = vadd.f32 %v492, %v804
      %v806 = vpop.f32.mrb[0].mxu0
      %v807 = vadd.f32 %v488, %v806
      %v808 = vpop.f32.mrb[0].mxu0
      %v809 = vadd.f32 %v492, %v808
      %810 = vmatprep.mubr.bf16.mxu0 0
      %811 = vmatmul.mubr.bf16.gmra.mrb[0].mxu0 %v615
      %v812 = vpop.f32.mrb[0].mxu0
      %v813 = vadd.f32 %v488, %v812
      %v814 = vpop.f32.mrb[0].mxu0
      %v815 = vadd.f32 %v492, %v814
      %v816 = vpop.f32.mrb[0].mxu0
      %v817 = vadd.f32 %v488, %v816
      %v818 = vpop.f32.mrb[0].mxu0
      %v819 = vadd.f32 %v492, %v818
      %820 = vmatprep.mubr.bf16.mxu0 0
      %821 = vmatmul.mubr.bf16.gmra.mrb[0].mxu0 %v618
      %v822 = vpop.f32.mrb[0].mxu0
      %v823 = vadd.f32 %v488, %v822
      %v824 = vpop.f32.mrb[0].mxu0
      %v825 = vadd.f32 %v492, %v824
      %v826 = vpop.f32.mrb[0].mxu0
      %v827 = vadd.f32 %v488, %v826
      %v828 = vpop.f32.mrb[0].mxu0
      %v829 = vadd.f32 %v492, %v828
      %830 = vmatprep.mubr.bf16.mxu0 0
      %831 = vmatmul.mubr.bf16.gmra.mrb[0].mxu0 %v621
      %v832 = vpop.f32.mrb[0].mxu0
      %v833 = vadd.f32 %v488, %v832
      %v834 = vpop.f32.mrb[0].mxu0
      %v835 = vadd.f32 %v492, %v834
      %v836 = vpop.f32.mrb[0].mxu0
      %v837 = vadd.f32 %v488, %v836
      %v838 = vpop.f32.mrb[0].mxu0
      %v839 = vadd.f32 %v492, %v838
      %840 = vmatprep.mubr.bf16.mxu0 0
      %841 = vmatmul.mubr.bf16.gmra.mrb[0].mxu0 %v624
      %v842 = vpop.f32.mrb[0].mxu0
      %v843 = vadd.f32 %v488, %v842
      %v844 = vpop.f32.mrb[0].mxu0
      %v845 = vadd.f32 %v492, %v844
      %v846 = vpop.f32.mrb[0].mxu0
      %v847 = vadd.f32 %v488, %v846
      %v848 = vpop.f32.mrb[0].mxu0
      %v849 = vadd.f32 %v492, %v848
      %850 = vmatprep.mubr.bf16.mxu0 0
      %851 = vmatmul.mubr.bf16.gmra.mrb[0].mxu0 %v627
      %v852 = vpop.f32.mrb[0].mxu0
      %v853 = vadd.f32 %v488, %v852
      %v854 = vpop.f32.mrb[0].mxu0
      %v855 = vadd.f32 %v492, %v854
      %v856 = vpop.f32.mrb[0].mxu0
      %v857 = vadd.f32 %v488, %v856
      %v858 = vpop.f32.mrb[0].mxu0
      %v859 = vadd.f32 %v492, %v858
      %860 = vmatprep.mubr.bf16.mxu0 0
      %861 = vmatmul.mubr.bf16.gmra.mrb[0].mxu0 %v630
      %v862 = vpop.f32.mrb[0].mxu0
      %v863 = vadd.f32 %v488, %v862
      %v864 = vpop.f32.mrb[0].mxu0
      %v865 = vadd.f32 %v492, %v864
      %v866 = vpop.f32.mrb[0].mxu0
      %v867 = vadd.f32 %v488, %v866
      %v868 = vpop.f32.mrb[0].mxu0
      %v869 = vadd.f32 %v492, %v868
      %870 = vdwg.mxu0
      %v871 = vmax.f32 %v680, 0.0
      %v872 = vmax.f32 %v682, 0.0
      %v873 = vmax.f32 %v793, 0.0
      %v874 = vmax.f32 %v795, 0.0
      %v875 = vmax.f32 %v684, 0.0
      %v876 = vmax.f32 %v686, 0.0
      %v877 = vmax.f32 %v797, 0.0
      %v878 = vmax.f32 %v799, 0.0
      %v879 = vmax.f32 %v690, 0.0
      %v880 = vmax.f32 %v692, 0.0
      %v881 = vmax.f32 %v803, 0.0
      %v882 = vmax.f32 %v805, 0.0
      %v883 = vmax.f32 %v694, 0.0
      %v884 = vmax.f32 %v696, 0.0
      %v885 = vmax.f32 %v807, 0.0
      %v886 = vmax.f32 %v809, 0.0
      %v887 = vmax.f32 %v700, 0.0
      %v888 = vmax.f32 %v702, 0.0
      %v889 = vmax.f32 %v813, 0.0
      %v890 = vmax.f32 %v815, 0.0
      %v891 = vmax.f32 %v704, 0.0
      %v892 = vmax.f32 %v706, 0.0
      %v893 = vmax.f32 %v817, 0.0
      %v894 = vmax.f32 %v819, 0.0
      %v895 = vmax.f32 %v710, 0.0
      %v896 = vmax.f32 %v712, 0.0
      %v897 = vmax.f32 %v823, 0.0
      %v898 = vmax.f32 %v825, 0.0
      %v899 = vmax.f32 %v714, 0.0
      %v900 = vmax.f32 %v716, 0.0
      %v901 = vmax.f32 %v827, 0.0
      %v902 = vmax.f32 %v829, 0.0
      %v903 = vmax.f32 %v720, 0.0
      %v904 = vmax.f32 %v722, 0.0
      %v905 = vmax.f32 %v833, 0.0
      %v906 = vmax.f32 %v835, 0.0
      %v907 = vmax.f32 %v724, 0.0
      %v908 = vmax.f32 %v726, 0.0
      %v909 = vmax.f32 %v837, 0.0
      %v910 = vmax.f32 %v839, 0.0
      %v911 = vmax.f32 %v730, 0.0
      %v912 = vmax.f32 %v732, 0.0
      %v913 = vmax.f32 %v843, 0.0
      %v914 = vmax.f32 %v845, 0.0
      %v915 = vmax.f32 %v734, 0.0
      %v916 = vmax.f32 %v736, 0.0
      %v917 = vmax.f32 %v847, 0.0
      %v918 = vmax.f32 %v849, 0.0
      %v919 = vmax.f32 %v740, 0.0
      %v920 = vmax.f32 %v742, 0.0
      %v921 = vmax.f32 %v853, 0.0
      %v922 = vmax.f32 %v855, 0.0
      %v923 = vmax.f32 %v744, 0.0
      %v924 = vmax.f32 %v746, 0.0
      %v925 = vmax.f32 %v857, 0.0
      %v926 = vmax.f32 %v859, 0.0
      %v927 = vmax.f32 %v750, 0.0
      %v928 = vmax.f32 %v752, 0.0
      %v929 = vmax.f32 %v863, 0.0
      %v930 = vmax.f32 %v865, 0.0
      %v931 = vmax.f32 %v754, 0.0
      %v932 = vmax.f32 %v756, 0.0
      %v933 = vmax.f32 %v867, 0.0
      %v934 = vmax.f32 %v869, 0.0
      %v935 = vpack.c.bf16 %v875, %v871
      %v936 = vpack.c.bf16 %v876, %v872
      %v937 = vpack.c.bf16 %v877, %v873
      %v938 = vpack.c.bf16 %v878, %v874
      %v939 = vpack.c.bf16 %v883, %v879
      %v940 = vpack.c.bf16 %v884, %v880
      %v941 = vpack.c.bf16 %v885, %v881
      %v942 = vpack.c.bf16 %v886, %v882
      %v943 = vpack.c.bf16 %v891, %v887
      %v944 = vpack.c.bf16 %v892, %v888
      %v945 = vpack.c.bf16 %v893, %v889
      %v946 = vpack.c.bf16 %v894, %v890
      %v947 = vpack.c.bf16 %v899, %v895
      %v948 = vpack.c.bf16 %v900, %v896
      %v949 = vpack.c.bf16 %v901, %v897
      %v950 = vpack.c.bf16 %v902, %v898
      %v951 = vpack.c.bf16 %v907, %v903
      %v952 = vpack.c.bf16 %v908, %v904
      %v953 = vpack.c.bf16 %v909, %v905
      %v954 = vpack.c.bf16 %v910, %v906
      %v955 = vpack.c.bf16 %v915, %v911
      %v956 = vpack.c.bf16 %v916, %v912
      %v957 = vpack.c.bf16 %v917, %v913
      %v958 = vpack.c.bf16 %v918, %v914
      %v959 = vpack.c.bf16 %v923, %v919
      %v960 = vpack.c.bf16 %v924, %v920
      %v961 = vpack.c.bf16 %v925, %v921
      %v962 = vpack.c.bf16 %v926, %v922
      %v963 = vpack.c.bf16 %v931, %v927
      %v964 = vpack.c.bf16 %v932, %v928
      %v965 = vpack.c.bf16 %v933, %v929
      %v966 = vpack.c.bf16 %v934, %v930
      %v1017 = vunpack.c.l.b16 %v391
      %v1018 = vunpack.c.l.b16 %v392
      %v1019 = vunpack.c.l.b16 %v393
      %v1020 = vunpack.c.l.b16 %v394
      %v1021 = vunpack.c.l.b16 %v395
      %v1022 = vunpack.c.l.b16 %v396
      %v1023 = vunpack.c.l.b16 %v397
      %v1024 = vunpack.c.l.b16 %v398
      %v1025 = vunpack.c.l.b16 %v399
      %v1026 = vunpack.c.l.b16 %v400
      %v1027 = vunpack.c.l.b16 %v401
      %v1028 = vunpack.c.l.b16 %v402
      %v1029 = vunpack.c.l.b16 %v403
      %v1030 = vunpack.c.l.b16 %v404
      %v1031 = vunpack.c.l.b16 %v405
      %v1032 = vunpack.c.l.b16 %v406
      %v1033 = vunpack.c.l.b16 %v407
      %v1034 = vunpack.c.l.b16 %v408
      %v1035 = vunpack.c.l.b16 %v409
      %v1036 = vunpack.c.l.b16 %v410
      %v1037 = vunpack.c.l.b16 %v411
      %v1038 = vunpack.c.l.b16 %v412
      %v1039 = vunpack.c.l.b16 %v413
      %v1040 = vunpack.c.l.b16 %v414
      %v1041 = vunpack.c.l.b16 %v415
      %v1042 = vunpack.c.l.b16 %v416
      %v1043 = vunpack.c.l.b16 %v417
      %v1044 = vunpack.c.l.b16 %v418
      %v1045 = vunpack.c.l.b16 %v419
      %v1046 = vunpack.c.l.b16 %v420
      %v1047 = vunpack.c.l.b16 %v421
      %v1048 = vunpack.c.l.b16 %v422
      %v1049 = vunpack.c.l.b16 %v423
      %v1050 = vunpack.c.l.b16 %v424
      %v1051 = vunpack.c.l.b16 %v425
      %v1052 = vunpack.c.l.b16 %v426
      %v1053 = vunpack.c.l.b16 %v427
      %v1054 = vunpack.c.l.b16 %v428
      %v1055 = vunpack.c.l.b16 %v429
      %v1056 = vunpack.c.l.b16 %v430
      %v1057 = vunpack.c.l.b16 %v431
      %v1058 = vunpack.c.l.b16 %v432
      %v1059 = vunpack.c.l.b16 %v433
      %v1060 = vunpack.c.l.b16 %v434
      %v1061 = vunpack.c.l.b16 %v435
      %v1062 = vunpack.c.l.b16 %v436
      %v1063 = vunpack.c.l.b16 %v437
      %v1064 = vunpack.c.l.b16 %v438
      %v1065 = vunpack.c.l.b16 %v439
      %v1066 = vunpack.c.l.b16 %v440
      %v1067 = vpack.c.b16 %v1018, %v1017
      %v1068 = vpack.c.b16 %v1020, %v1019
      %v1069 = vpack.c.b16 %v1022, %v1021
      %v1070 = vpack.c.b16 %v1024, %v1023
      %v1071 = vpack.c.b16 %v1026, %v1025
      %v1072 = vpack.c.b16 %v1028, %v1027
      %v1073 = vpack.c.b16 %v1030, %v1029
      %v1074 = vpack.c.b16 %v1032, %v1031
      %v1075 = vpack.c.b16 %v1034, %v1033
      %v1076 = vpack.c.b16 %v1036, %v1035
      %v1077 = vpack.c.b16 %v1038, %v1037
      %v1078 = vpack.c.b16 %v1040, %v1039
      %v1079 = vpack.c.b16 %v1042, %v1041
      %v1080 = vpack.c.b16 %v1044, %v1043
      %v1081 = vpack.c.b16 %v1046, %v1045
      %v1082 = vpack.c.b16 %v1048, %v1047
      %v1083 = vpack.c.b16 %v1050, %v1049
      %v1084 = vpack.c.b16 %v1052, %v1051
      %v1085 = vpack.c.b16 %v1054, %v1053
      %v1086 = vpack.c.b16 %v1056, %v1055
      %v1087 = vpack.c.b16 %v1058, %v1057
      %v1088 = vpack.c.b16 %v1060, %v1059
      %v1089 = vpack.c.b16 %v1062, %v1061
      %v1090 = vpack.c.b16 %v1064, %v1063
      %v1091 = vpack.c.b16 %v1066, %v1065
      %vm1117 = vcmask 130048
      %v1119 = vsel %vm1117, %v938, 0
      %v1122 = vsel %vm1117, %v942, 0
      %v1125 = vsel %vm1117, %v946, 0
      %v1128 = vsel %vm1117, %v950, 0
      %v1131 = vsel %vm1117, %v954, 0
      %v1134 = vsel %vm1117, %v958, 0
      %v1137 = vsel %vm1117, %v962, 0
      %v1140 = vsel %vm1117, %v966, 0
      %1142 = vmatprep.subr.bf16.mxu0 0
      %1143 = vmatpush1.bf16.msra.mxu0 %v1067
      %1144 = vmatprep.subr.bf16.mxu0 0
      %1145 = vmatpush1.bf16.msra.mxu0 %v1068
      %1146 = vmatprep.subr.bf16.mxu0 0
      %1147 = vmatpush1.bf16.msra.mxu0 %v1069
      %1148 = vmatprep.subr.bf16.mxu0 0
      %1149 = vmatpush1.bf16.msra.mxu0 %v1070
      %1150 = vmatprep.subr.bf16.mxu0 0
      %1151 = vmatpush1.bf16.msra.mxu0 %v1071
      %1152 = vmatprep.subr.bf16.mxu0 0
      %1153 = vmatpush1.bf16.msra.mxu0 %v1072
      %1154 = vmatprep.subr.bf16.mxu0 0
      %1155 = vmatpush1.bf16.msra.mxu0 %v1073
      %1156 = vmatprep.subr.bf16.mxu0 0
      %1157 = vmatpush1.bf16.msra.mxu0 %v1074
      %1158 = vmatprep.subr.bf16.mxu0 0
      %1159 = vmatpush1.bf16.msra.mxu0 %v1075
      %1160 = vmatprep.subr.bf16.mxu0 0
      %1161 = vmatpush1.bf16.msra.mxu0 %v1076
      %1162 = vmatprep.subr.bf16.mxu0 0
      %1163 = vmatpush1.bf16.msra.mxu0 %v1077
      %1164 = vmatprep.subr.bf16.mxu0 0
      %1165 = vmatpush1.bf16.msra.mxu0 %v1078
      %1166 = vmatprep.subr.bf16.mxu0 0
      %1167 = vmatpush1.bf16.msra.mxu0 %v1079
      %1168 = vmatprep.subr.bf16.mxu0 0
      %1169 = vmatpush1.bf16.msra.mxu0 %v1080
      %1170 = vmatprep.subr.bf16.mxu0 0
      %1171 = vmatpush1.bf16.msra.mxu0 %v1081
      %1172 = vmatprep.subr.bf16.mxu0 0
      %1173 = vmatpush1.bf16.msra.mxu0 %v1082
      %1174 = vmatprep.mubr.bf16.mxu0 %v936
      %1175 = vmatmul.mubr.bf16.gmra.mrb[0].mxu0 %v935
      %v1176 = vpop.f32.mrb[0].mxu0
      %v1177 = vadd.f32 0.0, %v1176
      %v1178 = vpop.f32.mrb[0].mxu0
      %v1179 = vpop.f32.mrb[0].mxu0
      %v1180 = vadd.f32 0.0, %v1179
      %v1181 = vpop.f32.mrb[0].mxu0
      %1182 = vmatprep.mubr.bf16.mxu0 %v940
      %1183 = vmatmul.mubr.bf16.gmra.mrb[0].mxu0 %v939
      %v1184 = vpop.f32.mrb[0].mxu0
      %v1185 = vadd.f32 0.0, %v1184
      %v1186 = vpop.f32.mrb[0].mxu0
      %v1187 = vpop.f32.mrb[0].mxu0
      %v1188 = vadd.f32 0.0, %v1187
      %v1189 = vpop.f32.mrb[0].mxu0
      %1190 = vmatprep.mubr.bf16.mxu0 %v944
      %1191 = vmatmul.mubr.bf16.gmra.mrb[0].mxu0 %v943
      %v1192 = vpop.f32.mrb[0].mxu0
      %v1193 = vadd.f32 0.0, %v1192
      %v1194 = vpop.f32.mrb[0].mxu0
      %v1195 = vpop.f32.mrb[0].mxu0
      %v1196 = vadd.f32 0.0, %v1195
      %v1197 = vpop.f32.mrb[0].mxu0
      %1198 = vmatprep.mubr.bf16.mxu0 %v948
      %1199 = vmatmul.mubr.bf16.gmra.mrb[0].mxu0 %v947
      %v1200 = vpop.f32.mrb[0].mxu0
      %v1201 = vadd.f32 0.0, %v1200
      %v1202 = vpop.f32.mrb[0].mxu0
      %v1203 = vpop.f32.mrb[0].mxu0
      %v1204 = vadd.f32 0.0, %v1203
      %v1205 = vpop.f32.mrb[0].mxu0
      %1206 = vmatprep.mubr.bf16.mxu0 %v952
      %1207 = vmatmul.mubr.bf16.gmra.mrb[0].mxu0 %v951
      %v1208 = vpop.f32.mrb[0].mxu0
      %v1209 = vadd.f32 0.0, %v1208
      %v1210 = vpop.f32.mrb[0].mxu0
      %v1211 = vpop.f32.mrb[0].mxu0
      %v1212 = vadd.f32 0.0, %v1211
      %v1213 = vpop.f32.mrb[0].mxu0
      %1214 = vmatprep.mubr.bf16.mxu0 %v956
      %1215 = vmatmul.mubr.bf16.gmra.mrb[0].mxu0 %v955
      %v1216 = vpop.f32.mrb[0].mxu0
      %v1217 = vadd.f32 0.0, %v1216
      %v1218 = vpop.f32.mrb[0].mxu0
      %v1219 = vpop.f32.mrb[0].mxu0
      %v1220 = vadd.f32 0.0, %v1219
      %v1221 = vpop.f32.mrb[0].mxu0
      %1222 = vmatprep.mubr.bf16.mxu0 %v960
      %1223 = vmatmul.mubr.bf16.gmra.mrb[0].mxu0 %v959
      %v1224 = vpop.f32.mrb[0].mxu0
      %v1225 = vadd.f32 0.0, %v1224
      %v1226 = vpop.f32.mrb[0].mxu0
      %v1227 = vpop.f32.mrb[0].mxu0
      %v1228 = vadd.f32 0.0, %v1227
      %v1229 = vpop.f32.mrb[0].mxu0
      %1230 = vmatprep.mubr.bf16.mxu0 %v964
      %1231 = vmatmul.mubr.bf16.gmra.mrb[0].mxu0 %v963
      %v1232 = vpop.f32.mrb[0].mxu0
      %v1233 = vadd.f32 0.0, %v1232
      %v1234 = vpop.f32.mrb[0].mxu0
      %v1235 = vpop.f32.mrb[0].mxu0
      %v1236 = vadd.f32 0.0, %v1235
      %v1237 = vpop.f32.mrb[0].mxu0
      %1238 = vdwg.mxu0
      %1239 = vmatprep.subr.bf16.mxu0 0
      %1240 = vmatpush1.bf16.msra.mxu0 %v1083
      %1241 = vmatprep.subr.bf16.mxu0 0
      %1242 = vmatpush1.bf16.msra.mxu0 %v1084
      %1243 = vmatprep.subr.bf16.mxu0 0
      %1244 = vmatpush1.bf16.msra.mxu0 %v1085
      %1245 = vmatprep.subr.bf16.mxu0 0
      %1246 = vmatpush1.bf16.msra.mxu0 %v1086
      %1247 = vmatprep.subr.bf16.mxu0 0
      %1248 = vmatpush1.bf16.msra.mxu0 %v1087
      %1249 = vmatprep.subr.bf16.mxu0 0
      %1250 = vmatpush1.bf16.msra.mxu0 %v1088
      %1251 = vmatprep.subr.bf16.mxu0 0
      %1252 = vmatpush1.bf16.msra.mxu0 %v1089
      %1253 = vmatprep.subr.bf16.mxu0 0
      %1254 = vmatpush1.bf16.msra.mxu0 %v1090
      %1255 = vmatprep.subr.bf16.mxu0 0
      %1256 = vmatpush1.bf16.msra.mxu0 %v1091
      %1257 = vmatprep.subr.bf16.mxu0 0
      %1258 = vmatpush1.bf16.msra.mxu0 0
      %1259 = vmatprep.subr.bf16.mxu0 0
      %1260 = vmatpush1.bf16.msra.mxu0 0
      %1261 = vmatprep.subr.bf16.mxu0 0
      %1262 = vmatpush1.bf16.msra.mxu0 0
      %1263 = vmatprep.subr.bf16.mxu0 0
      %1264 = vmatpush1.bf16.msra.mxu0 0
      %1265 = vmatprep.subr.bf16.mxu0 0
      %1266 = vmatpush1.bf16.msra.mxu0 0
      %1267 = vmatprep.subr.bf16.mxu0 0
      %1268 = vmatpush1.bf16.msra.mxu0 0
      %1269 = vmatprep.subr.bf16.mxu0 0
      %1270 = vmatpush1.bf16.msra.mxu0 0
      %1271 = vmatprep.mubr.bf16.mxu0 %v1119
      %1272 = vmatmul.mubr.bf16.gmra.mrb[0].mxu0 %v937
      %v1273 = vpop.f32.mrb[0].mxu0
      %v1274 = vadd.f32 %v1177, %v1273
      %v1275 = vpop.f32.mrb[0].mxu0
      %v1276 = vpop.f32.mrb[0].mxu0
      %v1277 = vadd.f32 %v1180, %v1276
      %v1278 = vpop.f32.mrb[0].mxu0
      %1279 = vmatprep.mubr.bf16.mxu0 %v1122
      %1280 = vmatmul.mubr.bf16.gmra.mrb[0].mxu0 %v941
      %v1281 = vpop.f32.mrb[0].mxu0
      %v1282 = vadd.f32 %v1185, %v1281
      %v1283 = vpop.f32.mrb[0].mxu0
      %v1284 = vpop.f32.mrb[0].mxu0
      %v1285 = vadd.f32 %v1188, %v1284
      %v1286 = vpop.f32.mrb[0].mxu0
      %1287 = vmatprep.mubr.bf16.mxu0 %v1125
      %1288 = vmatmul.mubr.bf16.gmra.mrb[0].mxu0 %v945
      %v1289 = vpop.f32.mrb[0].mxu0
      %v1290 = vadd.f32 %v1193, %v1289
      %v1291 = vpop.f32.mrb[0].mxu0
      %v1292 = vpop.f32.mrb[0].mxu0
      %v1293 = vadd.f32 %v1196, %v1292
      %v1294 = vpop.f32.mrb[0].mxu0
      %1295 = vmatprep.mubr.bf16.mxu0 %v1128
      %1296 = vmatmul.mubr.bf16.gmra.mrb[0].mxu0 %v949
      %v1297 = vpop.f32.mrb[0].mxu0
      %v1298 = vadd.f32 %v1201, %v1297
      %v1299 = vpop.f32.mrb[0].mxu0
      %v1300 = vpop.f32.mrb[0].mxu0
      %v1301 = vadd.f32 %v1204, %v1300
      %v1302 = vpop.f32.mrb[0].mxu0
      %1303 = vmatprep.mubr.bf16.mxu0 %v1131
      %1304 = vmatmul.mubr.bf16.gmra.mrb[0].mxu0 %v953
      %v1305 = vpop.f32.mrb[0].mxu0
      %v1306 = vadd.f32 %v1209, %v1305
      %v1307 = vpop.f32.mrb[0].mxu0
      %v1308 = vpop.f32.mrb[0].mxu0
      %v1309 = vadd.f32 %v1212, %v1308
      %v1310 = vpop.f32.mrb[0].mxu0
      %1311 = vmatprep.mubr.bf16.mxu0 %v1134
      %1312 = vmatmul.mubr.bf16.gmra.mrb[0].mxu0 %v957
      %v1313 = vpop.f32.mrb[0].mxu0
      %v1314 = vadd.f32 %v1217, %v1313
      %v1315 = vpop.f32.mrb[0].mxu0
      %v1316 = vpop.f32.mrb[0].mxu0
      %v1317 = vadd.f32 %v1220, %v1316
      %v1318 = vpop.f32.mrb[0].mxu0
      %1319 = vmatprep.mubr.bf16.mxu0 %v1137
      %1320 = vmatmul.mubr.bf16.gmra.mrb[0].mxu0 %v961
      %v1321 = vpop.f32.mrb[0].mxu0
      %v1322 = vadd.f32 %v1225, %v1321
      %v1323 = vpop.f32.mrb[0].mxu0
      %v1324 = vpop.f32.mrb[0].mxu0
      %v1325 = vadd.f32 %v1228, %v1324
      %v1326 = vpop.f32.mrb[0].mxu0
      %1327 = vmatprep.mubr.bf16.mxu0 %v1140
      %1328 = vmatmul.mubr.bf16.gmra.mrb[0].mxu0 %v965
      %v1329 = vpop.f32.mrb[0].mxu0
      %v1330 = vadd.f32 %v1233, %v1329
      %v1331 = vpop.f32.mrb[0].mxu0
      %v1332 = vpop.f32.mrb[0].mxu0
      %v1333 = vadd.f32 %v1236, %v1332
      %v1334 = vpop.f32.mrb[0].mxu0
      %1335 = vdwg.mxu0
      %v1336 = vmul.f32 %v871, %v871
      %v1337 = vmul.f32 %v872, %v872
      %v1338 = vmul.f32 %v873, %v873
      %v1339 = vmul.f32 %v874, %v874
      %v1340 = vmul.f32 %v875, %v875
      %v1341 = vmul.f32 %v876, %v876
      %v1342 = vmul.f32 %v877, %v877
      %v1343 = vmul.f32 %v878, %v878
      %v1344 = vmul.f32 %v879, %v879
      %v1345 = vmul.f32 %v880, %v880
      %v1346 = vmul.f32 %v881, %v881
      %v1347 = vmul.f32 %v882, %v882
      %v1348 = vmul.f32 %v883, %v883
      %v1349 = vmul.f32 %v884, %v884
      %v1350 = vmul.f32 %v885, %v885
      %v1351 = vmul.f32 %v886, %v886
      %v1352 = vmul.f32 %v887, %v887
      %v1353 = vmul.f32 %v888, %v888
      %v1354 = vmul.f32 %v889, %v889
      %v1355 = vmul.f32 %v890, %v890
      %v1356 = vmul.f32 %v891, %v891
      %v1357 = vmul.f32 %v892, %v892
      %v1358 = vmul.f32 %v893, %v893
      %v1359 = vmul.f32 %v894, %v894
      %v1360 = vmul.f32 %v895, %v895
      %v1361 = vmul.f32 %v896, %v896
      %v1362 = vmul.f32 %v897, %v897
      %v1363 = vmul.f32 %v898, %v898
      %v1364 = vmul.f32 %v899, %v899
      %v1365 = vmul.f32 %v900, %v900
      %v1366 = vmul.f32 %v901, %v901
      %v1367 = vmul.f32 %v902, %v902
      %v1368 = vmul.f32 %v903, %v903
      %v1369 = vmul.f32 %v904, %v904
      %v1370 = vmul.f32 %v905, %v905
      %v1371 = vmul.f32 %v906, %v906
      %v1372 = vmul.f32 %v907, %v907
      %v1373 = vmul.f32 %v908, %v908
      %v1374 = vmul.f32 %v909, %v909
      %v1375 = vmul.f32 %v910, %v910
      %v1376 = vmul.f32 %v911, %v911
      %v1377 = vmul.f32 %v912, %v912
      %v1378 = vmul.f32 %v913, %v913
      %v1379 = vmul.f32 %v914, %v914
      %v1380 = vmul.f32 %v915, %v915
      %v1381 = vmul.f32 %v916, %v916
      %v1382 = vmul.f32 %v917, %v917
      %v1383 = vmul.f32 %v918, %v918
      %v1384 = vmul.f32 %v919, %v919
      %v1385 = vmul.f32 %v920, %v920
      %v1386 = vmul.f32 %v921, %v921
      %v1387 = vmul.f32 %v922, %v922
      %v1388 = vmul.f32 %v923, %v923
      %v1389 = vmul.f32 %v924, %v924
      %v1390 = vmul.f32 %v925, %v925
      %v1391 = vmul.f32 %v926, %v926
      %v1392 = vmul.f32 %v927, %v927
      %v1393 = vmul.f32 %v928, %v928
      %v1394 = vmul.f32 %v929, %v929
      %v1395 = vmul.f32 %v930, %v930
      %v1396 = vmul.f32 %v931, %v931
      %v1397 = vmul.f32 %v932, %v932
      %v1398 = vmul.f32 %v933, %v933
      %v1399 = vmul.f32 %v934, %v934
      %v1400 = vpack.c.bf16 %v1340, %v1336
      %v1401 = vpack.c.bf16 %v1341, %v1337
      %v1402 = vpack.c.bf16 %v1342, %v1338
      %v1403 = vpack.c.bf16 %v1343, %v1339
      %v1404 = vpack.c.bf16 %v1348, %v1344
      %v1405 = vpack.c.bf16 %v1349, %v1345
      %v1406 = vpack.c.bf16 %v1350, %v1346
      %v1407 = vpack.c.bf16 %v1351, %v1347
      %v1408 = vpack.c.bf16 %v1356, %v1352
      %v1409 = vpack.c.bf16 %v1357, %v1353
      %v1410 = vpack.c.bf16 %v1358, %v1354
      %v1411 = vpack.c.bf16 %v1359, %v1355
      %v1412 = vpack.c.bf16 %v1364, %v1360
      %v1413 = vpack.c.bf16 %v1365, %v1361
      %v1414 = vpack.c.bf16 %v1366, %v1362
      %v1415 = vpack.c.bf16 %v1367, %v1363
      %v1416 = vpack.c.bf16 %v1372, %v1368
      %v1417 = vpack.c.bf16 %v1373, %v1369
      %v1418 = vpack.c.bf16 %v1374, %v1370
      %v1419 = vpack.c.bf16 %v1375, %v1371
      %v1420 = vpack.c.bf16 %v1380, %v1376
      %v1421 = vpack.c.bf16 %v1381, %v1377
      %v1422 = vpack.c.bf16 %v1382, %v1378
      %v1423 = vpack.c.bf16 %v1383, %v1379
      %v1424 = vpack.c.bf16 %v1388, %v1384
      %v1425 = vpack.c.bf16 %v1389, %v1385
      %v1426 = vpack.c.bf16 %v1390, %v1386
      %v1427 = vpack.c.bf16 %v1391, %v1387
      %v1428 = vpack.c.bf16 %v1396, %v1392
      %v1429 = vpack.c.bf16 %v1397, %v1393
      %v1430 = vpack.c.bf16 %v1398, %v1394
      %v1431 = vpack.c.bf16 %v1399, %v1395
      %v1433 = vsel %vm1117, %v1403, 0
      %v1436 = vsel %vm1117, %v1407, 0
      %v1439 = vsel %vm1117, %v1411, 0
      %v1442 = vsel %vm1117, %v1415, 0
      %v1445 = vsel %vm1117, %v1419, 0
      %v1448 = vsel %vm1117, %v1423, 0
      %v1451 = vsel %vm1117, %v1427, 0
      %v1454 = vsel %vm1117, %v1431, 0
      %1456 = vmatprep.subr.bf16.mxu0 0
      %1457 = vmatpush1.bf16.msra.mxu0 %v1067
      %1458 = vmatprep.subr.bf16.mxu0 0
      %1459 = vmatpush1.bf16.msra.mxu0 %v1068
      %1460 = vmatprep.subr.bf16.mxu0 0
      %1461 = vmatpush1.bf16.msra.mxu0 %v1069
      %1462 = vmatprep.subr.bf16.mxu0 0
      %1463 = vmatpush1.bf16.msra.mxu0 %v1070
      %1464 = vmatprep.subr.bf16.mxu0 0
      %1465 = vmatpush1.bf16.msra.mxu0 %v1071
      %1466 = vmatprep.subr.bf16.mxu0 0
      %1467 = vmatpush1.bf16.msra.mxu0 %v1072
      %1468 = vmatprep.subr.bf16.mxu0 0
      %1469 = vmatpush1.bf16.msra.mxu0 %v1073
      %1470 = vmatprep.subr.bf16.mxu0 0
      %1471 = vmatpush1.bf16.msra.mxu0 %v1074
      %1472 = vmatprep.subr.bf16.mxu0 0
      %1473 = vmatpush1.bf16.msra.mxu0 %v1075
      %1474 = vmatprep.subr.bf16.mxu0 0
      %1475 = vmatpush1.bf16.msra.mxu0 %v1076
      %1476 = vmatprep.subr.bf16.mxu0 0
      %1477 = vmatpush1.bf16.msra.mxu0 %v1077
      %1478 = vmatprep.subr.bf16.mxu0 0
      %1479 = vmatpush1.bf16.msra.mxu0 %v1078
      %1480 = vmatprep.subr.bf16.mxu0 0
      %1481 = vmatpush1.bf16.msra.mxu0 %v1079
      %1482 = vmatprep.subr.bf16.mxu0 0
      %1483 = vmatpush1.bf16.msra.mxu0 %v1080
      %1484 = vmatprep.subr.bf16.mxu0 0
      %1485 = vmatpush1.bf16.msra.mxu0 %v1081
      %1486 = vmatprep.subr.bf16.mxu0 0
      %1487 = vmatpush1.bf16.msra.mxu0 %v1082
      %1488 = vmatprep.mubr.bf16.mxu0 %v1401
      %1489 = vmatmul.mubr.bf16.gmra.mrb[0].mxu0 %v1400
      %v1490 = vpop.f32.mrb[0].mxu0
      %v1491 = vadd.f32 0.0, %v1490
      %v1492 = vpop.f32.mrb[0].mxu0
      %v1493 = vpop.f32.mrb[0].mxu0
      %v1494 = vadd.f32 0.0, %v1493
      %v1495 = vpop.f32.mrb[0].mxu0
      %1496 = vmatprep.mubr.bf16.mxu0 %v1405
      %1497 = vmatmul.mubr.bf16.gmra.mrb[0].mxu0 %v1404
      %v1498 = vpop.f32.mrb[0].mxu0
      %v1499 = vadd.f32 0.0, %v1498
      %v1500 = vpop.f32.mrb[0].mxu0
      %v1501 = vpop.f32.mrb[0].mxu0
      %v1502 = vadd.f32 0.0, %v1501
      %v1503 = vpop.f32.mrb[0].mxu0
      %1504 = vmatprep.mubr.bf16.mxu0 %v1409
      %1505 = vmatmul.mubr.bf16.gmra.mrb[0].mxu0 %v1408
      %v1506 = vpop.f32.mrb[0].mxu0
      %v1507 = vadd.f32 0.0, %v1506
      %v1508 = vpop.f32.mrb[0].mxu0
      %v1509 = vpop.f32.mrb[0].mxu0
      %v1510 = vadd.f32 0.0, %v1509
      %v1511 = vpop.f32.mrb[0].mxu0
      %1512 = vmatprep.mubr.bf16.mxu0 %v1413
      %1513 = vmatmul.mubr.bf16.gmra.mrb[0].mxu0 %v1412
      %v1514 = vpop.f32.mrb[0].mxu0
      %v1515 = vadd.f32 0.0, %v1514
      %v1516 = vpop.f32.mrb[0].mxu0
      %v1517 = vpop.f32.mrb[0].mxu0
      %v1518 = vadd.f32 0.0, %v1517
      %v1519 = vpop.f32.mrb[0].mxu0
      %1520 = vmatprep.mubr.bf16.mxu0 %v1417
      %1521 = vmatmul.mubr.bf16.gmra.mrb[0].mxu0 %v1416
      %v1522 = vpop.f32.mrb[0].mxu0
      %v1523 = vadd.f32 0.0, %v1522
      %v1524 = vpop.f32.mrb[0].mxu0
      %v1525 = vpop.f32.mrb[0].mxu0
      %v1526 = vadd.f32 0.0, %v1525
      %v1527 = vpop.f32.mrb[0].mxu0
      %1528 = vmatprep.mubr.bf16.mxu0 %v1421
      %1529 = vmatmul.mubr.bf16.gmra.mrb[0].mxu0 %v1420
      %v1530 = vpop.f32.mrb[0].mxu0
      %v1531 = vadd.f32 0.0, %v1530
      %v1532 = vpop.f32.mrb[0].mxu0
      %v1533 = vpop.f32.mrb[0].mxu0
      %v1534 = vadd.f32 0.0, %v1533
      %v1535 = vpop.f32.mrb[0].mxu0
      %1536 = vmatprep.mubr.bf16.mxu0 %v1425
      %1537 = vmatmul.mubr.bf16.gmra.mrb[0].mxu0 %v1424
      %v1538 = vpop.f32.mrb[0].mxu0
      %v1539 = vadd.f32 0.0, %v1538
      %v1540 = vpop.f32.mrb[0].mxu0
      %v1541 = vpop.f32.mrb[0].mxu0
      %v1542 = vadd.f32 0.0, %v1541
      %v1543 = vpop.f32.mrb[0].mxu0
      %1544 = vmatprep.mubr.bf16.mxu0 %v1429
      %1545 = vmatmul.mubr.bf16.gmra.mrb[0].mxu0 %v1428
      %v1546 = vpop.f32.mrb[0].mxu0
      %v1547 = vadd.f32 0.0, %v1546
      %v1548 = vpop.f32.mrb[0].mxu0
      %v1549 = vpop.f32.mrb[0].mxu0
      %v1550 = vadd.f32 0.0, %v1549
      %v1551 = vpop.f32.mrb[0].mxu0
      %1552 = vdwg.mxu0
      %1553 = vmatprep.subr.bf16.mxu0 0
      %1554 = vmatpush1.bf16.msra.mxu0 %v1083
      %1555 = vmatprep.subr.bf16.mxu0 0
      %1556 = vmatpush1.bf16.msra.mxu0 %v1084
      %1557 = vmatprep.subr.bf16.mxu0 0
      %1558 = vmatpush1.bf16.msra.mxu0 %v1085
      %1559 = vmatprep.subr.bf16.mxu0 0
      %1560 = vmatpush1.bf16.msra.mxu0 %v1086
      %1561 = vmatprep.subr.bf16.mxu0 0
      %1562 = vmatpush1.bf16.msra.mxu0 %v1087
      %1563 = vmatprep.subr.bf16.mxu0 0
      %1564 = vmatpush1.bf16.msra.mxu0 %v1088
      %1565 = vmatprep.subr.bf16.mxu0 0
      %1566 = vmatpush1.bf16.msra.mxu0 %v1089
      %1567 = vmatprep.subr.bf16.mxu0 0
      %1568 = vmatpush1.bf16.msra.mxu0 %v1090
      %1569 = vmatprep.subr.bf16.mxu0 0
      %1570 = vmatpush1.bf16.msra.mxu0 %v1091
      %1571 = vmatprep.subr.bf16.mxu0 0
      %1572 = vmatpush1.bf16.msra.mxu0 0
      %1573 = vmatprep.subr.bf16.mxu0 0
      %1574 = vmatpush1.bf16.msra.mxu0 0
      %1575 = vmatprep.subr.bf16.mxu0 0
      %1576 = vmatpush1.bf16.msra.mxu0 0
      %1577 = vmatprep.subr.bf16.mxu0 0
      %1578 = vmatpush1.bf16.msra.mxu0 0
      %1579 = vmatprep.subr.bf16.mxu0 0
      %1580 = vmatpush1.bf16.msra.mxu0 0
      %1581 = vmatprep.subr.bf16.mxu0 0
      %1582 = vmatpush1.bf16.msra.mxu0 0
      %1583 = vmatprep.subr.bf16.mxu0 0
      %1584 = vmatpush1.bf16.msra.mxu0 0
      %1585 = vmatprep.mubr.bf16.mxu0 %v1433
      %1586 = vmatmul.mubr.bf16.gmra.mrb[0].mxu0 %v1402
      %v1587 = vpop.f32.mrb[0].mxu0
      %v1588 = vadd.f32 %v1491, %v1587
      %v1589 = vpop.f32.mrb[0].mxu0
      %v1590 = vpop.f32.mrb[0].mxu0
      %v1591 = vadd.f32 %v1494, %v1590
      %v1592 = vpop.f32.mrb[0].mxu0
      %1593 = vmatprep.mubr.bf16.mxu0 %v1436
      %1594 = vmatmul.mubr.bf16.gmra.mrb[0].mxu0 %v1406
      %v1595 = vpop.f32.mrb[0].mxu0
      %v1596 = vadd.f32 %v1499, %v1595
      %v1597 = vpop.f32.mrb[0].mxu0
      %v1598 = vpop.f32.mrb[0].mxu0
      %v1599 = vadd.f32 %v1502, %v1598
      %v1600 = vpop.f32.mrb[0].mxu0
      %1601 = vmatprep.mubr.bf16.mxu0 %v1439
      %1602 = vmatmul.mubr.bf16.gmra.mrb[0].mxu0 %v1410
      %v1603 = vpop.f32.mrb[0].mxu0
      %v1604 = vadd.f32 %v1507, %v1603
      %v1605 = vpop.f32.mrb[0].mxu0
      %v1606 = vpop.f32.mrb[0].mxu0
      %v1607 = vadd.f32 %v1510, %v1606
      %v1608 = vpop.f32.mrb[0].mxu0
      %1609 = vmatprep.mubr.bf16.mxu0 %v1442
      %1610 = vmatmul.mubr.bf16.gmra.mrb[0].mxu0 %v1414
      %v1611 = vpop.f32.mrb[0].mxu0
      %v1612 = vadd.f32 %v1515, %v1611
      %v1613 = vpop.f32.mrb[0].mxu0
      %v1614 = vpop.f32.mrb[0].mxu0
      %v1615 = vadd.f32 %v1518, %v1614
      %v1616 = vpop.f32.mrb[0].mxu0
      %1617 = vmatprep.mubr.bf16.mxu0 %v1445
      %1618 = vmatmul.mubr.bf16.gmra.mrb[0].mxu0 %v1418
      %v1619 = vpop.f32.mrb[0].mxu0
      %v1620 = vadd.f32 %v1523, %v1619
      %v1621 = vpop.f32.mrb[0].mxu0
      %v1622 = vpop.f32.mrb[0].mxu0
      %v1623 = vadd.f32 %v1526, %v1622
      %v1624 = vpop.f32.mrb[0].mxu0
      %1625 = vmatprep.mubr.bf16.mxu0 %v1448
      %1626 = vmatmul.mubr.bf16.gmra.mrb[0].mxu0 %v1422
      %v1627 = vpop.f32.mrb[0].mxu0
      %v1628 = vadd.f32 %v1531, %v1627
      %v1629 = vpop.f32.mrb[0].mxu0
      %v1630 = vpop.f32.mrb[0].mxu0
      %v1631 = vadd.f32 %v1534, %v1630
      %v1632 = vpop.f32.mrb[0].mxu0
      %1633 = vmatprep.mubr.bf16.mxu0 %v1451
      %1634 = vmatmul.mubr.bf16.gmra.mrb[0].mxu0 %v1426
      %v1635 = vpop.f32.mrb[0].mxu0
      %v1636 = vadd.f32 %v1539, %v1635
      %v1637 = vpop.f32.mrb[0].mxu0
      %v1638 = vpop.f32.mrb[0].mxu0
      %v1639 = vadd.f32 %v1542, %v1638
      %v1640 = vpop.f32.mrb[0].mxu0
      %1641 = vmatprep.mubr.bf16.mxu0 %v1454
      %1642 = vmatmul.mubr.bf16.gmra.mrb[0].mxu0 %v1430
      %v1643 = vpop.f32.mrb[0].mxu0
      %v1644 = vadd.f32 %v1547, %v1643
      %v1645 = vpop.f32.mrb[0].mxu0
      %v1646 = vpop.f32.mrb[0].mxu0
      %v1647 = vadd.f32 %v1550, %v1646
      %v1648 = vpop.f32.mrb[0].mxu0
      %1649 = vdwg.mxu0
      %v1650 = vmul.f32 %v1274, 0.04
      %v1651 = vmul.f32 %v1277, 0.04
      %v1652 = vmul.f32 %v1282, 0.04
      %v1653 = vmul.f32 %v1285, 0.04
      %v1654 = vmul.f32 %v1290, 0.04
      %v1655 = vmul.f32 %v1293, 0.04
      %v1656 = vmul.f32 %v1298, 0.04
      %v1657 = vmul.f32 %v1301, 0.04
      %v1658 = vmul.f32 %v1306, 0.04
      %v1659 = vmul.f32 %v1309, 0.04
      %v1660 = vmul.f32 %v1314, 0.04
      %v1661 = vmul.f32 %v1317, 0.04
      %v1662 = vmul.f32 %v1322, 0.04
      %v1663 = vmul.f32 %v1325, 0.04
      %v1664 = vmul.f32 %v1330, 0.04
      %v1665 = vmul.f32 %v1333, 0.04
      %v1666 = vmul.f32 %v1588, 0.04
      %v1667 = vmul.f32 %v1591, 0.04
      %v1668 = vmul.f32 %v1596, 0.04
      %v1669 = vmul.f32 %v1599, 0.04
      %v1670 = vmul.f32 %v1604, 0.04
      %v1671 = vmul.f32 %v1607, 0.04
      %v1672 = vmul.f32 %v1612, 0.04
      %v1673 = vmul.f32 %v1615, 0.04
      %v1674 = vmul.f32 %v1620, 0.04
      %v1675 = vmul.f32 %v1623, 0.04
      %v1676 = vmul.f32 %v1628, 0.04
      %v1677 = vmul.f32 %v1631, 0.04
      %v1678 = vmul.f32 %v1636, 0.04
      %v1679 = vmul.f32 %v1639, 0.04
      %v1680 = vmul.f32 %v1644, 0.04
      %v1681 = vmul.f32 %v1647, 0.04
      %v1682 = vmul.f32 %v1650, %v1650
      %v1683 = vmul.f32 %v1651, %v1651
      %v1684 = vmul.f32 %v1652, %v1652
      %v1685 = vmul.f32 %v1653, %v1653
      %v1686 = vmul.f32 %v1654, %v1654
      %v1687 = vmul.f32 %v1655, %v1655
      %v1688 = vmul.f32 %v1656, %v1656
      %v1689 = vmul.f32 %v1657, %v1657
      %v1690 = vmul.f32 %v1658, %v1658
      %v1691 = vmul.f32 %v1659, %v1659
      %v1692 = vmul.f32 %v1660, %v1660
      %v1693 = vmul.f32 %v1661, %v1661
      %v1694 = vmul.f32 %v1662, %v1662
      %v1695 = vmul.f32 %v1663, %v1663
      %v1696 = vmul.f32 %v1664, %v1664
      %v1697 = vmul.f32 %v1665, %v1665
      %v1698 = vsub.f32 %v1666, %v1682
      %v1699 = vsub.f32 %v1667, %v1683
      %v1700 = vsub.f32 %v1668, %v1684
      %v1701 = vsub.f32 %v1669, %v1685
      %v1702 = vsub.f32 %v1670, %v1686
      %v1703 = vsub.f32 %v1671, %v1687
      %v1704 = vsub.f32 %v1672, %v1688
      %v1705 = vsub.f32 %v1673, %v1689
      %v1706 = vsub.f32 %v1674, %v1690
      %v1707 = vsub.f32 %v1675, %v1691
      %v1708 = vsub.f32 %v1676, %v1692
      %v1709 = vsub.f32 %v1677, %v1693
      %v1710 = vsub.f32 %v1678, %v1694
      %v1711 = vsub.f32 %v1679, %v1695
      %v1712 = vsub.f32 %v1680, %v1696
      %v1713 = vsub.f32 %v1681, %v1697
      %v1714 = vadd.f32 %v1698, 1e-05
      %v1715 = vadd.f32 %v1699, 1e-05
      %v1716 = vadd.f32 %v1700, 1e-05
      %v1717 = vadd.f32 %v1701, 1e-05
      %v1718 = vadd.f32 %v1702, 1e-05
      %v1719 = vadd.f32 %v1703, 1e-05
      %v1720 = vadd.f32 %v1704, 1e-05
      %v1721 = vadd.f32 %v1705, 1e-05
      %v1722 = vadd.f32 %v1706, 1e-05
      %v1723 = vadd.f32 %v1707, 1e-05
      %v1724 = vadd.f32 %v1708, 1e-05
      %v1725 = vadd.f32 %v1709, 1e-05
      %v1726 = vadd.f32 %v1710, 1e-05
      %v1727 = vadd.f32 %v1711, 1e-05
      %v1728 = vadd.f32 %v1712, 1e-05
      %v1729 = vadd.f32 %v1713, 1e-05
      %v1730 = vrsqrt.pop %v1714
      %v1731 = vrsqrt.pop %v1715
      %v1732 = vrsqrt.pop %v1716
      %v1733 = vrsqrt.pop %v1717
      %v1734 = vrsqrt.pop %v1718
      %v1735 = vrsqrt.pop %v1719
      %v1736 = vrsqrt.pop %v1720
      %v1737 = vrsqrt.pop %v1721
      %v1738 = vrsqrt.pop %v1722
      %v1739 = vrsqrt.pop %v1723
      %v1740 = vrsqrt.pop %v1724
      %v1741 = vrsqrt.pop %v1725
      %v1742 = vrsqrt.pop %v1726
      %v1743 = vrsqrt.pop %v1727
      %v1744 = vrsqrt.pop %v1728
      %v1745 = vrsqrt.pop %v1729
      %v1746 = vmul.f32 %v1650, %v1730
      %v1747 = vmul.f32 %v1651, %v1731
      %v1748 = vmul.f32 %v1652, %v1732
      %v1749 = vmul.f32 %v1653, %v1733
      %v1750 = vmul.f32 %v1654, %v1734
      %v1751 = vmul.f32 %v1655, %v1735
      %v1752 = vmul.f32 %v1656, %v1736
      %v1753 = vmul.f32 %v1657, %v1737
      %v1754 = vmul.f32 %v1658, %v1738
      %v1755 = vmul.f32 %v1659, %v1739
      %v1756 = vmul.f32 %v1660, %v1740
      %v1757 = vmul.f32 %v1661, %v1741
      %v1758 = vmul.f32 %v1662, %v1742
      %v1759 = vmul.f32 %v1663, %v1743
      %v1760 = vmul.f32 %v1664, %v1744
      %v1761 = vmul.f32 %v1665, %v1745
      %v1762 = vpack.c.bf16 %v1731, %v1730
      %v1763 = vpack.c.bf16 %v1733, %v1732
      %v1764 = vpack.c.bf16 %v1735, %v1734
      %v1765 = vpack.c.bf16 %v1737, %v1736
      %v1766 = vpack.c.bf16 %v1739, %v1738
      %v1767 = vpack.c.bf16 %v1741, %v1740
      %v1768 = vpack.c.bf16 %v1743, %v1742
      %v1769 = vpack.c.bf16 %v1745, %v1744
      %v1774 = vunpack.c.l.b16 %v441
      %v1775 = vunpack.c.h.b16 %v441
      %v1776 = vunpack.c.l.b16 %v442
      %v1777 = vunpack.c.h.b16 %v442
      %v1778 = vunpack.c.l.b16 %v443
      %v1779 = vunpack.c.h.b16 %v443
      %v1780 = vunpack.c.l.b16 %v444
      %v1781 = vunpack.c.h.b16 %v444
      %v1782 = vpack.c.b16 %v1778, %v1774
      %v1783 = vpack.c.b16 %v1779, %v1775
      %v1784 = vpack.c.b16 %v1780, %v1776
      %v1785 = vpack.c.b16 %v1781, %v1777
      %v1791 = vsel %vm1117, %v1762, 0
      %v1794 = vsel %vm1117, %v1763, 0
      %v1797 = vsel %vm1117, %v1764, 0
      %v1800 = vsel %vm1117, %v1765, 0
      %v1803 = vsel %vm1117, %v1766, 0
      %v1806 = vsel %vm1117, %v1767, 0
      %v1809 = vsel %vm1117, %v1768, 0
      %v1812 = vsel %vm1117, %v1769, 0
      %1814 = vmatprep.subr.bf16.mxu0 %v1783
      %1815 = vmatpush1.bf16.msra.mxu0 %v1782
      %1816 = vmatprep.subr.bf16.mxu0 0
      %1817 = vmatpush1.bf16.msra.mxu0 0
      %1818 = vmatprep.subr.bf16.mxu0 0
      %1819 = vmatpush1.bf16.msra.mxu0 0
      %1820 = vmatprep.subr.bf16.mxu0 0
      %1821 = vmatpush1.bf16.msra.mxu0 0
      %1822 = vmatprep.subr.bf16.mxu0 0
      %1823 = vmatpush1.bf16.msra.mxu0 0
      %1824 = vmatprep.subr.bf16.mxu0 0
      %1825 = vmatpush1.bf16.msra.mxu0 0
      %1826 = vmatprep.subr.bf16.mxu0 0
      %1827 = vmatpush1.bf16.msra.mxu0 0
      %1828 = vmatprep.subr.bf16.mxu0 0
      %1829 = vmatpush1.bf16.msra.mxu0 0
      %1830 = vmatprep.subr.bf16.mxu0 0
      %1831 = vmatpush1.bf16.msra.mxu0 0
      %1832 = vmatprep.subr.bf16.mxu0 0
      %1833 = vmatpush1.bf16.msra.mxu0 0
      %1834 = vmatprep.subr.bf16.mxu0 0
      %1835 = vmatpush1.bf16.msra.mxu0 0
      %1836 = vmatprep.subr.bf16.mxu0 0
      %1837 = vmatpush1.bf16.msra.mxu0 0
      %1838 = vmatprep.subr.bf16.mxu0 0
      %1839 = vmatpush1.bf16.msra.mxu0 0
      %1840 = vmatprep.subr.bf16.mxu0 0
      %1841 = vmatpush1.bf16.msra.mxu0 0
      %1842 = vmatprep.subr.bf16.mxu0 0
      %1843 = vmatpush1.bf16.msra.mxu0 0
      %1844 = vmatprep.subr.bf16.mxu0 0
      %1845 = vmatpush1.bf16.msra.mxu0 0
      %1846 = vmatprep.mubr.bf16.mxu0 0
      %1847 = vmatmul.mubr.bf16.gmra.mrb[0].mxu0 %v1791
      %v1848 = vpop.f32.mrb[0].mxu0
      %v1849 = vadd.f32 0.0, %v1848
      %v1850 = vpop.f32.mrb[0].mxu0
      %v1851 = vadd.f32 0.0, %v1850
      %v1852 = vpop.f32.mrb[0].mxu0
      %v1853 = vadd.f32 0.0, %v1852
      %v1854 = vpop.f32.mrb[0].mxu0
      %v1855 = vadd.f32 0.0, %v1854
      %1856 = vmatprep.mubr.bf16.mxu0 0
      %1857 = vmatmul.mubr.bf16.gmra.mrb[0].mxu0 %v1794
      %v1858 = vpop.f32.mrb[0].mxu0
      %v1859 = vadd.f32 0.0, %v1858
      %v1860 = vpop.f32.mrb[0].mxu0
      %v1861 = vadd.f32 0.0, %v1860
      %v1862 = vpop.f32.mrb[0].mxu0
      %v1863 = vadd.f32 0.0, %v1862
      %v1864 = vpop.f32.mrb[0].mxu0
      %v1865 = vadd.f32 0.0, %v1864
      %1866 = vmatprep.mubr.bf16.mxu0 0
      %1867 = vmatmul.mubr.bf16.gmra.mrb[0].mxu0 %v1797
      %v1868 = vpop.f32.mrb[0].mxu0
      %v1869 = vadd.f32 0.0, %v1868
      %v1870 = vpop.f32.mrb[0].mxu0
      %v1871 = vadd.f32 0.0, %v1870
      %v1872 = vpop.f32.mrb[0].mxu0
      %v1873 = vadd.f32 0.0, %v1872
      %v1874 = vpop.f32.mrb[0].mxu0
      %v1875 = vadd.f32 0.0, %v1874
      %1876 = vmatprep.mubr.bf16.mxu0 0
      %1877 = vmatmul.mubr.bf16.gmra.mrb[0].mxu0 %v1800
      %v1878 = vpop.f32.mrb[0].mxu0
      %v1879 = vadd.f32 0.0, %v1878
      %v1880 = vpop.f32.mrb[0].mxu0
      %v1881 = vadd.f32 0.0, %v1880
      %v1882 = vpop.f32.mrb[0].mxu0
      %v1883 = vadd.f32 0.0, %v1882
      %v1884 = vpop.f32.mrb[0].mxu0
      %v1885 = vadd.f32 0.0, %v1884
      %1886 = vmatprep.mubr.bf16.mxu0 0
      %1887 = vmatmul.mubr.bf16.gmra.mrb[0].mxu0 %v1803
      %v1888 = vpop.f32.mrb[0].mxu0
      %v1889 = vadd.f32 0.0, %v1888
      %v1890 = vpop.f32.mrb[0].mxu0
      %v1891 = vadd.f32 0.0, %v1890
      %v1892 = vpop.f32.mrb[0].mxu0
      %v1893 = vadd.f32 0.0, %v1892
      %v1894 = vpop.f32.mrb[0].mxu0
      %v1895 = vadd.f32 0.0, %v1894
      %1896 = vmatprep.mubr.bf16.mxu0 0
      %1897 = vmatmul.mubr.bf16.gmra.mrb[0].mxu0 %v1806
      %v1898 = vpop.f32.mrb[0].mxu0
      %v1899 = vadd.f32 0.0, %v1898
      %v1900 = vpop.f32.mrb[0].mxu0
      %v1901 = vadd.f32 0.0, %v1900
      %v1902 = vpop.f32.mrb[0].mxu0
      %v1903 = vadd.f32 0.0, %v1902
      %v1904 = vpop.f32.mrb[0].mxu0
      %v1905 = vadd.f32 0.0, %v1904
      %1906 = vmatprep.mubr.bf16.mxu0 0
      %1907 = vmatmul.mubr.bf16.gmra.mrb[0].mxu0 %v1809
      %v1908 = vpop.f32.mrb[0].mxu0
      %v1909 = vadd.f32 0.0, %v1908
      %v1910 = vpop.f32.mrb[0].mxu0
      %v1911 = vadd.f32 0.0, %v1910
      %v1912 = vpop.f32.mrb[0].mxu0
      %v1913 = vadd.f32 0.0, %v1912
      %v1914 = vpop.f32.mrb[0].mxu0
      %v1915 = vadd.f32 0.0, %v1914
      %1916 = vmatprep.mubr.bf16.mxu0 0
      %1917 = vmatmul.mubr.bf16.gmra.mrb[0].mxu0 %v1812
      %v1918 = vpop.f32.mrb[0].mxu0
      %v1919 = vadd.f32 0.0, %v1918
      %v1920 = vpop.f32.mrb[0].mxu0
      %v1921 = vadd.f32 0.0, %v1920
      %v1922 = vpop.f32.mrb[0].mxu0
      %v1923 = vadd.f32 0.0, %v1922
      %v1924 = vpop.f32.mrb[0].mxu0
      %v1925 = vadd.f32 0.0, %v1924
      %1926 = vdwg.mxu0
      %1927 = vmatprep.subr.bf16.mxu0 %v1785
      %1928 = vmatpush1.bf16.msra.mxu0 %v1784
      %1929 = vmatprep.subr.bf16.mxu0 0
      %1930 = vmatpush1.bf16.msra.mxu0 0
      %1931 = vmatprep.subr.bf16.mxu0 0
      %1932 = vmatpush1.bf16.msra.mxu0 0
      %1933 = vmatprep.subr.bf16.mxu0 0
      %1934 = vmatpush1.bf16.msra.mxu0 0
      %1935 = vmatprep.subr.bf16.mxu0 0
      %1936 = vmatpush1.bf16.msra.mxu0 0
      %1937 = vmatprep.subr.bf16.mxu0 0
      %1938 = vmatpush1.bf16.msra.mxu0 0
      %1939 = vmatprep.subr.bf16.mxu0 0
      %1940 = vmatpush1.bf16.msra.mxu0 0
      %1941 = vmatprep.subr.bf16.mxu0 0
      %1942 = vmatpush1.bf16.msra.mxu0 0
      %1943 = vmatprep.subr.bf16.mxu0 0
      %1944 = vmatpush1.bf16.msra.mxu0 0
      %1945 = vmatprep.subr.bf16.mxu0 0
      %1946 = vmatpush1.bf16.msra.mxu0 0
      %1947 = vmatprep.subr.bf16.mxu0 0
      %1948 = vmatpush1.bf16.msra.mxu0 0
      %1949 = vmatprep.subr.bf16.mxu0 0
      %1950 = vmatpush1.bf16.msra.mxu0 0
      %1951 = vmatprep.subr.bf16.mxu0 0
      %1952 = vmatpush1.bf16.msra.mxu0 0
      %1953 = vmatprep.subr.bf16.mxu0 0
      %1954 = vmatpush1.bf16.msra.mxu0 0
      %1955 = vmatprep.subr.bf16.mxu0 0
      %1956 = vmatpush1.bf16.msra.mxu0 0
      %1957 = vmatprep.subr.bf16.mxu0 0
      %1958 = vmatpush1.bf16.msra.mxu0 0
      %1959 = vmatprep.mubr.bf16.mxu0 0
      %1960 = vmatmul.mubr.bf16.gmra.mrb[0].mxu0 %v1791
      %v1961 = vpop.f32.mrb[0].mxu0
      %v1962 = vadd.f32 0.0, %v1961
      %v1963 = vpop.f32.mrb[0].mxu0
      %v1964 = vadd.f32 0.0, %v1963
      %v1965 = vpop.f32.mrb[0].mxu0
      %v1966 = vadd.f32 0.0, %v1965
      %v1967 = vpop.f32.mrb[0].mxu0
      %v1968 = vadd.f32 0.0, %v1967
      %1969 = vmatprep.mubr.bf16.mxu0 0
      %1970 = vmatmul.mubr.bf16.gmra.mrb[0].mxu0 %v1794
      %v1971 = vpop.f32.mrb[0].mxu0
      %v1972 = vadd.f32 0.0, %v1971
      %v1973 = vpop.f32.mrb[0].mxu0
      %v1974 = vadd.f32 0.0, %v1973
      %v1975 = vpop.f32.mrb[0].mxu0
      %v1976 = vadd.f32 0.0, %v1975
      %v1977 = vpop.f32.mrb[0].mxu0
      %v1978 = vadd.f32 0.0, %v1977
      %1979 = vmatprep.mubr.bf16.mxu0 0
      %1980 = vmatmul.mubr.bf16.gmra.mrb[0].mxu0 %v1797
      %v1981 = vpop.f32.mrb[0].mxu0
      %v1982 = vadd.f32 0.0, %v1981
      %v1983 = vpop.f32.mrb[0].mxu0
      %v1984 = vadd.f32 0.0, %v1983
      %v1985 = vpop.f32.mrb[0].mxu0
      %v1986 = vadd.f32 0.0, %v1985
      %v1987 = vpop.f32.mrb[0].mxu0
      %v1988 = vadd.f32 0.0, %v1987
      %1989 = vmatprep.mubr.bf16.mxu0 0
      %1990 = vmatmul.mubr.bf16.gmra.mrb[0].mxu0 %v1800
      %v1991 = vpop.f32.mrb[0].mxu0
      %v1992 = vadd.f32 0.0, %v1991
      %v1993 = vpop.f32.mrb[0].mxu0
      %v1994 = vadd.f32 0.0, %v1993
      %v1995 = vpop.f32.mrb[0].mxu0
      %v1996 = vadd.f32 0.0, %v1995
      %v1997 = vpop.f32.mrb[0].mxu0
      %v1998 = vadd.f32 0.0, %v1997
      %1999 = vmatprep.mubr.bf16.mxu0 0
      %2000 = vmatmul.mubr.bf16.gmra.mrb[0].mxu0 %v1803
      %v2001 = vpop.f32.mrb[0].mxu0
      %v2002 = vadd.f32 0.0, %v2001
      %v2003 = vpop.f32.mrb[0].mxu0
      %v2004 = vadd.f32 0.0, %v2003
      %v2005 = vpop.f32.mrb[0].mxu0
      %v2006 = vadd.f32 0.0, %v2005
      %v2007 = vpop.f32.mrb[0].mxu0
      %v2008 = vadd.f32 0.0, %v2007
      %2009 = vmatprep.mubr.bf16.mxu0 0
      %2010 = vmatmul.mubr.bf16.gmra.mrb[0].mxu0 %v1806
      %v2011 = vpop.f32.mrb[0].mxu0
      %v2012 = vadd.f32 0.0, %v2011
      %v2013 = vpop.f32.mrb[0].mxu0
      %v2014 = vadd.f32 0.0, %v2013
      %v2015 = vpop.f32.mrb[0].mxu0
      %v2016 = vadd.f32 0.0, %v2015
      %v2017 = vpop.f32.mrb[0].mxu0
      %v2018 = vadd.f32 0.0, %v2017
      %2019 = vmatprep.mubr.bf16.mxu0 0
      %2020 = vmatmul.mubr.bf16.gmra.mrb[0].mxu0 %v1809
      %v2021 = vpop.f32.mrb[0].mxu0
      %v2022 = vadd.f32 0.0, %v2021
      %v2023 = vpop.f32.mrb[0].mxu0
      %v2024 = vadd.f32 0.0, %v2023
      %v2025 = vpop.f32.mrb[0].mxu0
      %v2026 = vadd.f32 0.0, %v2025
      %v2027 = vpop.f32.mrb[0].mxu0
      %v2028 = vadd.f32 0.0, %v2027
      %2029 = vmatprep.mubr.bf16.mxu0 0
      %2030 = vmatmul.mubr.bf16.gmra.mrb[0].mxu0 %v1812
      %v2031 = vpop.f32.mrb[0].mxu0
      %v2032 = vadd.f32 0.0, %v2031
      %v2033 = vpop.f32.mrb[0].mxu0
      %v2034 = vadd.f32 0.0, %v2033
      %v2035 = vpop.f32.mrb[0].mxu0
      %v2036 = vadd.f32 0.0, %v2035
      %v2037 = vpop.f32.mrb[0].mxu0
      %v2038 = vadd.f32 0.0, %v2037
      %2039 = vdwg.mxu0
      %v2040 = vmul.f32 %v871, %v1849
      %v2041 = vmul.f32 %v872, %v1851
      %v2042 = vmul.f32 %v873, %v1962
      %v2043 = vmul.f32 %v874, %v1964
      %v2044 = vmul.f32 %v875, %v1853
      %v2045 = vmul.f32 %v876, %v1855
      %v2046 = vmul.f32 %v877, %v1966
      %v2047 = vmul.f32 %v878, %v1968
      %v2048 = vmul.f32 %v879, %v1859
      %v2049 = vmul.f32 %v880, %v1861
      %v2050 = vmul.f32 %v881, %v1972
      %v2051 = vmul.f32 %v882, %v1974
      %v2052 = vmul.f32 %v883, %v1863
      %v2053 = vmul.f32 %v884, %v1865
      %v2054 = vmul.f32 %v885, %v1976
      %v2055 = vmul.f32 %v886, %v1978
      %v2056 = vmul.f32 %v887, %v1869
      %v2057 = vmul.f32 %v888, %v1871
      %v2058 = vmul.f32 %v889, %v1982
      %v2059 = vmul.f32 %v890, %v1984
      %v2060 = vmul.f32 %v891, %v1873
      %v2061 = vmul.f32 %v892, %v1875
      %v2062 = vmul.f32 %v893, %v1986
      %v2063 = vmul.f32 %v894, %v1988
      %v2064 = vmul.f32 %v895, %v1879
      %v2065 = vmul.f32 %v896, %v1881
      %v2066 = vmul.f32 %v897, %v1992
      %v2067 = vmul.f32 %v898, %v1994
      %v2068 = vmul.f32 %v899, %v1883
      %v2069 = vmul.f32 %v900, %v1885
      %v2070 = vmul.f32 %v901, %v1996
      %v2071 = vmul.f32 %v902, %v1998
      %v2072 = vmul.f32 %v903, %v1889
      %v2073 = vmul.f32 %v904, %v1891
      %v2074 = vmul.f32 %v905, %v2002
      %v2075 = vmul.f32 %v906, %v2004
      %v2076 = vmul.f32 %v907, %v1893
      %v2077 = vmul.f32 %v908, %v1895
      %v2078 = vmul.f32 %v909, %v2006
      %v2079 = vmul.f32 %v910, %v2008
      %v2080 = vmul.f32 %v911, %v1899
      %v2081 = vmul.f32 %v912, %v1901
      %v2082 = vmul.f32 %v913, %v2012
      %v2083 = vmul.f32 %v914, %v2014
      %v2084 = vmul.f32 %v915, %v1903
      %v2085 = vmul.f32 %v916, %v1905
      %v2086 = vmul.f32 %v917, %v2016
      %v2087 = vmul.f32 %v918, %v2018
      %v2088 = vmul.f32 %v919, %v1909
      %v2089 = vmul.f32 %v920, %v1911
      %v2090 = vmul.f32 %v921, %v2022
      %v2091 = vmul.f32 %v922, %v2024
      %v2092 = vmul.f32 %v923, %v1913
      %v2093 = vmul.f32 %v924, %v1915
      %v2094 = vmul.f32 %v925, %v2026
      %v2095 = vmul.f32 %v926, %v2028
      %v2096 = vmul.f32 %v927, %v1919
      %v2097 = vmul.f32 %v928, %v1921
      %v2098 = vmul.f32 %v929, %v2032
      %v2099 = vmul.f32 %v930, %v2034
      %v2100 = vmul.f32 %v931, %v1923
      %v2101 = vmul.f32 %v932, %v1925
      %v2102 = vmul.f32 %v933, %v2036
      %v2103 = vmul.f32 %v934, %v2038
      %v2104 = vpack.c.bf16 %v1747, %v1746
      %v2105 = vpack.c.bf16 %v1749, %v1748
      %v2106 = vpack.c.bf16 %v1751, %v1750
      %v2107 = vpack.c.bf16 %v1753, %v1752
      %v2108 = vpack.c.bf16 %v1755, %v1754
      %v2109 = vpack.c.bf16 %v1757, %v1756
      %v2110 = vpack.c.bf16 %v1759, %v1758
      %v2111 = vpack.c.bf16 %v1761, %v1760
      %v2113 = vsel %vm1117, %v2104, 0
      %v2116 = vsel %vm1117, %v2105, 0
      %v2119 = vsel %vm1117, %v2106, 0
      %v2122 = vsel %vm1117, %v2107, 0
      %v2125 = vsel %vm1117, %v2108, 0
      %v2128 = vsel %vm1117, %v2109, 0
      %v2131 = vsel %vm1117, %v2110, 0
      %v2134 = vsel %vm1117, %v2111, 0
      %2136 = vmatprep.subr.bf16.mxu0 %v1783
      %2137 = vmatpush1.bf16.msra.mxu0 %v1782
      %2138 = vmatprep.subr.bf16.mxu0 0
      %2139 = vmatpush1.bf16.msra.mxu0 0
      %2140 = vmatprep.subr.bf16.mxu0 0
      %2141 = vmatpush1.bf16.msra.mxu0 0
      %2142 = vmatprep.subr.bf16.mxu0 0
      %2143 = vmatpush1.bf16.msra.mxu0 0
      %2144 = vmatprep.subr.bf16.mxu0 0
      %2145 = vmatpush1.bf16.msra.mxu0 0
      %2146 = vmatprep.subr.bf16.mxu0 0
      %2147 = vmatpush1.bf16.msra.mxu0 0
      %2148 = vmatprep.subr.bf16.mxu0 0
      %2149 = vmatpush1.bf16.msra.mxu0 0
      %2150 = vmatprep.subr.bf16.mxu0 0
      %2151 = vmatpush1.bf16.msra.mxu0 0
      %2152 = vmatprep.subr.bf16.mxu0 0
      %2153 = vmatpush1.bf16.msra.mxu0 0
      %2154 = vmatprep.subr.bf16.mxu0 0
      %2155 = vmatpush1.bf16.msra.mxu0 0
      %2156 = vmatprep.subr.bf16.mxu0 0
      %2157 = vmatpush1.bf16.msra.mxu0 0
      %2158 = vmatprep.subr.bf16.mxu0 0
      %2159 = vmatpush1.bf16.msra.mxu0 0
      %2160 = vmatprep.subr.bf16.mxu0 0
      %2161 = vmatpush1.bf16.msra.mxu0 0
      %2162 = vmatprep.subr.bf16.mxu0 0
      %2163 = vmatpush1.bf16.msra.mxu0 0
      %2164 = vmatprep.subr.bf16.mxu0 0
      %2165 = vmatpush1.bf16.msra.mxu0 0
      %2166 = vmatprep.subr.bf16.mxu0 0
      %2167 = vmatpush1.bf16.msra.mxu0 0
      %2168 = vmatprep.mubr.bf16.mxu0 0
      %2169 = vmatmul.mubr.bf16.gmra.mrb[0].mxu0 %v2113
      %v2170 = vpop.f32.mrb[0].mxu0
      %v2171 = vadd.f32 0.0, %v2170
      %v2172 = vpop.f32.mrb[0].mxu0
      %v2173 = vadd.f32 0.0, %v2172
      %v2174 = vpop.f32.mrb[0].mxu0
      %v2175 = vadd.f32 0.0, %v2174
      %v2176 = vpop.f32.mrb[0].mxu0
      %v2177 = vadd.f32 0.0, %v2176
      %2178 = vmatprep.mubr.bf16.mxu0 0
      %2179 = vmatmul.mubr.bf16.gmra.mrb[0].mxu0 %v2116
      %v2180 = vpop.f32.mrb[0].mxu0
      %v2181 = vadd.f32 0.0, %v2180
      %v2182 = vpop.f32.mrb[0].mxu0
      %v2183 = vadd.f32 0.0, %v2182
      %v2184 = vpop.f32.mrb[0].mxu0
      %v2185 = vadd.f32 0.0, %v2184
      %v2186 = vpop.f32.mrb[0].mxu0
      %v2187 = vadd.f32 0.0, %v2186
      %2188 = vmatprep.mubr.bf16.mxu0 0
      %2189 = vmatmul.mubr.bf16.gmra.mrb[0].mxu0 %v2119
      %v2190 = vpop.f32.mrb[0].mxu0
      %v2191 = vadd.f32 0.0, %v2190
      %v2192 = vpop.f32.mrb[0].mxu0
      %v2193 = vadd.f32 0.0, %v2192
      %v2194 = vpop.f32.mrb[0].mxu0
      %v2195 = vadd.f32 0.0, %v2194
      %v2196 = vpop.f32.mrb[0].mxu0
      %v2197 = vadd.f32 0.0, %v2196
      %2198 = vmatprep.mubr.bf16.mxu0 0
      %2199 = vmatmul.mubr.bf16.gmra.mrb[0].mxu0 %v2122
      %v2200 = vpop.f32.mrb[0].mxu0
      %v2201 = vadd.f32 0.0, %v2200
      %v2202 = vpop.f32.mrb[0].mxu0
      %v2203 = vadd.f32 0.0, %v2202
      %v2204 = vpop.f32.mrb[0].mxu0
      %v2205 = vadd.f32 0.0, %v2204
      %v2206 = vpop.f32.mrb[0].mxu0
      %v2207 = vadd.f32 0.0, %v2206
      %2208 = vmatprep.mubr.bf16.mxu0 0
      %2209 = vmatmul.mubr.bf16.gmra.mrb[0].mxu0 %v2125
      %v2210 = vpop.f32.mrb[0].mxu0
      %v2211 = vadd.f32 0.0, %v2210
      %v2212 = vpop.f32.mrb[0].mxu0
      %v2213 = vadd.f32 0.0, %v2212
      %v2214 = vpop.f32.mrb[0].mxu0
      %v2215 = vadd.f32 0.0, %v2214
      %v2216 = vpop.f32.mrb[0].mxu0
      %v2217 = vadd.f32 0.0, %v2216
      %2218 = vmatprep.mubr.bf16.mxu0 0
      %2219 = vmatmul.mubr.bf16.gmra.mrb[0].mxu0 %v2128
      %v2220 = vpop.f32.mrb[0].mxu0
      %v2221 = vadd.f32 0.0, %v2220
      %v2222 = vpop.f32.mrb[0].mxu0
      %v2223 = vadd.f32 0.0, %v2222
      %v2224 = vpop.f32.mrb[0].mxu0
      %v2225 = vadd.f32 0.0, %v2224
      %v2226 = vpop.f32.mrb[0].mxu0
      %v2227 = vadd.f32 0.0, %v2226
      %2228 = vmatprep.mubr.bf16.mxu0 0
      %2229 = vmatmul.mubr.bf16.gmra.mrb[0].mxu0 %v2131
      %v2230 = vpop.f32.mrb[0].mxu0
      %v2231 = vadd.f32 0.0, %v2230
      %v2232 = vpop.f32.mrb[0].mxu0
      %v2233 = vadd.f32 0.0, %v2232
      %v2234 = vpop.f32.mrb[0].mxu0
      %v2235 = vadd.f32 0.0, %v2234
      %v2236 = vpop.f32.mrb[0].mxu0
      %v2237 = vadd.f32 0.0, %v2236
      %2238 = vmatprep.mubr.bf16.mxu0 0
      %2239 = vmatmul.mubr.bf16.gmra.mrb[0].mxu0 %v2134
      %v2240 = vpop.f32.mrb[0].mxu0
      %v2241 = vadd.f32 0.0, %v2240
      %v2242 = vpop.f32.mrb[0].mxu0
      %v2243 = vadd.f32 0.0, %v2242
      %v2244 = vpop.f32.mrb[0].mxu0
      %v2245 = vadd.f32 0.0, %v2244
      %v2246 = vpop.f32.mrb[0].mxu0
      %v2247 = vadd.f32 0.0, %v2246
      %2248 = vdwg.mxu0
      %2249 = vmatprep.subr.bf16.mxu0 %v1785
      %2250 = vmatpush1.bf16.msra.mxu0 %v1784
      %2251 = vmatprep.subr.bf16.mxu0 0
      %2252 = vmatpush1.bf16.msra.mxu0 0
      %2253 = vmatprep.subr.bf16.mxu0 0
      %2254 = vmatpush1.bf16.msra.mxu0 0
      %2255 = vmatprep.subr.bf16.mxu0 0
      %2256 = vmatpush1.bf16.msra.mxu0 0
      %2257 = vmatprep.subr.bf16.mxu0 0
      %2258 = vmatpush1.bf16.msra.mxu0 0
      %2259 = vmatprep.subr.bf16.mxu0 0
      %2260 = vmatpush1.bf16.msra.mxu0 0
      %2261 = vmatprep.subr.bf16.mxu0 0
      %2262 = vmatpush1.bf16.msra.mxu0 0
      %2263 = vmatprep.subr.bf16.mxu0 0
      %2264 = vmatpush1.bf16.msra.mxu0 0
      %2265 = vmatprep.subr.bf16.mxu0 0
      %2266 = vmatpush1.bf16.msra.mxu0 0
      %2267 = vmatprep.subr.bf16.mxu0 0
      %2268 = vmatpush1.bf16.msra.mxu0 0
      %2269 = vmatprep.subr.bf16.mxu0 0
      %2270 = vmatpush1.bf16.msra.mxu0 0
      %2271 = vmatprep.subr.bf16.mxu0 0
      %2272 = vmatpush1.bf16.msra.mxu0 0
      %2273 = vmatprep.subr.bf16.mxu0 0
      %2274 = vmatpush1.bf16.msra.mxu0 0
      %2275 = vmatprep.subr.bf16.mxu0 0
      %2276 = vmatpush1.bf16.msra.mxu0 0
      %2277 = vmatprep.subr.bf16.mxu0 0
      %2278 = vmatpush1.bf16.msra.mxu0 0
      %2279 = vmatprep.subr.bf16.mxu0 0
      %2280 = vmatpush1.bf16.msra.mxu0 0
      %2281 = vmatprep.mubr.bf16.mxu0 0
      %2282 = vmatmul.mubr.bf16.gmra.mrb[0].mxu0 %v2113
      %v2283 = vpop.f32.mrb[0].mxu0
      %v2284 = vadd.f32 0.0, %v2283
      %v2285 = vpop.f32.mrb[0].mxu0
      %v2286 = vadd.f32 0.0, %v2285
      %v2287 = vpop.f32.mrb[0].mxu0
      %v2288 = vadd.f32 0.0, %v2287
      %v2289 = vpop.f32.mrb[0].mxu0
      %v2290 = vadd.f32 0.0, %v2289
      %2291 = vmatprep.mubr.bf16.mxu0 0
      %2292 = vmatmul.mubr.bf16.gmra.mrb[0].mxu0 %v2116
      %v2293 = vpop.f32.mrb[0].mxu0
      %v2294 = vadd.f32 0.0, %v2293
      %v2295 = vpop.f32.mrb[0].mxu0
      %v2296 = vadd.f32 0.0, %v2295
      %v2297 = vpop.f32.mrb[0].mxu0
      %v2298 = vadd.f32 0.0, %v2297
      %v2299 = vpop.f32.mrb[0].mxu0
      %v2300 = vadd.f32 0.0, %v2299
      %2301 = vmatprep.mubr.bf16.mxu0 0
      %2302 = vmatmul.mubr.bf16.gmra.mrb[0].mxu0 %v2119
      %v2303 = vpop.f32.mrb[0].mxu0
      %v2304 = vadd.f32 0.0, %v2303
      %v2305 = vpop.f32.mrb[0].mxu0
      %v2306 = vadd.f32 0.0, %v2305
      %v2307 = vpop.f32.mrb[0].mxu0
      %v2308 = vadd.f32 0.0, %v2307
      %v2309 = vpop.f32.mrb[0].mxu0
      %v2310 = vadd.f32 0.0, %v2309
      %2311 = vmatprep.mubr.bf16.mxu0 0
      %2312 = vmatmul.mubr.bf16.gmra.mrb[0].mxu0 %v2122
      %v2313 = vpop.f32.mrb[0].mxu0
      %v2314 = vadd.f32 0.0, %v2313
      %v2315 = vpop.f32.mrb[0].mxu0
      %v2316 = vadd.f32 0.0, %v2315
      %v2317 = vpop.f32.mrb[0].mxu0
      %v2318 = vadd.f32 0.0, %v2317
      %v2319 = vpop.f32.mrb[0].mxu0
      %v2320 = vadd.f32 0.0, %v2319
      %2321 = vmatprep.mubr.bf16.mxu0 0
      %2322 = vmatmul.mubr.bf16.gmra.mrb[0].mxu0 %v2125
      %v2323 = vpop.f32.mrb[0].mxu0
      %v2324 = vadd.f32 0.0, %v2323
      %v2325 = vpop.f32.mrb[0].mxu0
      %v2326 = vadd.f32 0.0, %v2325
      %v2327 = vpop.f32.mrb[0].mxu0
      %v2328 = vadd.f32 0.0, %v2327
      %v2329 = vpop.f32.mrb[0].mxu0
      %v2330 = vadd.f32 0.0, %v2329
      %2331 = vmatprep.mubr.bf16.mxu0 0
      %2332 = vmatmul.mubr.bf16.gmra.mrb[0].mxu0 %v2128
      %v2333 = vpop.f32.mrb[0].mxu0
      %v2334 = vadd.f32 0.0, %v2333
      %v2335 = vpop.f32.mrb[0].mxu0
      %v2336 = vadd.f32 0.0, %v2335
      %v2337 = vpop.f32.mrb[0].mxu0
      %v2338 = vadd.f32 0.0, %v2337
      %v2339 = vpop.f32.mrb[0].mxu0
      %v2340 = vadd.f32 0.0, %v2339
      %2341 = vmatprep.mubr.bf16.mxu0 0
      %2342 = vmatmul.mubr.bf16.gmra.mrb[0].mxu0 %v2131
      %v2343 = vpop.f32.mrb[0].mxu0
      %v2344 = vadd.f32 0.0, %v2343
      %v2345 = vpop.f32.mrb[0].mxu0
      %v2346 = vadd.f32 0.0, %v2345
      %v2347 = vpop.f32.mrb[0].mxu0
      %v2348 = vadd.f32 0.0, %v2347
      %v2349 = vpop.f32.mrb[0].mxu0
      %v2350 = vadd.f32 0.0, %v2349
      %2351 = vmatprep.mubr.bf16.mxu0 0
      %2352 = vmatmul.mubr.bf16.gmra.mrb[0].mxu0 %v2134
      %v2353 = vpop.f32.mrb[0].mxu0
      %v2354 = vadd.f32 0.0, %v2353
      %v2355 = vpop.f32.mrb[0].mxu0
      %v2356 = vadd.f32 0.0, %v2355
      %v2357 = vpop.f32.mrb[0].mxu0
      %v2358 = vadd.f32 0.0, %v2357
      %v2359 = vpop.f32.mrb[0].mxu0
      %v2360 = vadd.f32 0.0, %v2359
      %2361 = vdwg.mxu0
      %v2362 = vsub.f32 %v2040, %v2171
      %v2363 = vsub.f32 %v2041, %v2173
      %v2364 = vsub.f32 %v2042, %v2284
      %v2365 = vsub.f32 %v2043, %v2286
      %v2366 = vsub.f32 %v2044, %v2175
      %v2367 = vsub.f32 %v2045, %v2177
      %v2368 = vsub.f32 %v2046, %v2288
      %v2369 = vsub.f32 %v2047, %v2290
      %v2370 = vsub.f32 %v2048, %v2181
      %v2371 = vsub.f32 %v2049, %v2183
      %v2372 = vsub.f32 %v2050, %v2294
      %v2373 = vsub.f32 %v2051, %v2296
      %v2374 = vsub.f32 %v2052, %v2185
      %v2375 = vsub.f32 %v2053, %v2187
      %v2376 = vsub.f32 %v2054, %v2298
      %v2377 = vsub.f32 %v2055, %v2300
      %v2378 = vsub.f32 %v2056, %v2191
      %v2379 = vsub.f32 %v2057, %v2193
      %v2380 = vsub.f32 %v2058, %v2304
      %v2381 = vsub.f32 %v2059, %v2306
      %v2382 = vsub.f32 %v2060, %v2195
      %v2383 = vsub.f32 %v2061, %v2197
      %v2384 = vsub.f32 %v2062, %v2308
      %v2385 = vsub.f32 %v2063, %v2310
      %v2386 = vsub.f32 %v2064, %v2201
      %v2387 = vsub.f32 %v2065, %v2203
      %v2388 = vsub.f32 %v2066, %v2314
      %v2389 = vsub.f32 %v2067, %v2316
      %v2390 = vsub.f32 %v2068, %v2205
      %v2391 = vsub.f32 %v2069, %v2207
      %v2392 = vsub.f32 %v2070, %v2318
      %v2393 = vsub.f32 %v2071, %v2320
      %v2394 = vsub.f32 %v2072, %v2211
      %v2395 = vsub.f32 %v2073, %v2213
      %v2396 = vsub.f32 %v2074, %v2324
      %v2397 = vsub.f32 %v2075, %v2326
      %v2398 = vsub.f32 %v2076, %v2215
      %v2399 = vsub.f32 %v2077, %v2217
      %v2400 = vsub.f32 %v2078, %v2328
      %v2401 = vsub.f32 %v2079, %v2330
      %v2402 = vsub.f32 %v2080, %v2221
      %v2403 = vsub.f32 %v2081, %v2223
      %v2404 = vsub.f32 %v2082, %v2334
      %v2405 = vsub.f32 %v2083, %v2336
      %v2406 = vsub.f32 %v2084, %v2225
      %v2407 = vsub.f32 %v2085, %v2227
      %v2408 = vsub.f32 %v2086, %v2338
      %v2409 = vsub.f32 %v2087, %v2340
      %v2410 = vsub.f32 %v2088, %v2231
      %v2411 = vsub.f32 %v2089, %v2233
      %v2412 = vsub.f32 %v2090, %v2344
      %v2413 = vsub.f32 %v2091, %v2346
      %v2414 = vsub.f32 %v2092, %v2235
      %v2415 = vsub.f32 %v2093, %v2237
      %v2416 = vsub.f32 %v2094, %v2348
      %v2417 = vsub.f32 %v2095, %v2350
      %v2418 = vsub.f32 %v2096, %v2241
      %v2419 = vsub.f32 %v2097, %v2243
      %v2420 = vsub.f32 %v2098, %v2354
      %v2421 = vsub.f32 %v2099, %v2356
      %v2422 = vsub.f32 %v2100, %v2245
      %v2423 = vsub.f32 %v2101, %v2247
      %v2424 = vsub.f32 %v2102, %v2358
      %v2425 = vsub.f32 %v2103, %v2360
      %v2426 = vpack.c.bf16 %v2366, %v2362
      %v2427 = vpack.c.bf16 %v2367, %v2363
      %v2428 = vpack.c.bf16 %v2368, %v2364
      %v2429 = vpack.c.bf16 %v2369, %v2365
      %v2430 = vpack.c.bf16 %v2374, %v2370
      %v2431 = vpack.c.bf16 %v2375, %v2371
      %v2432 = vpack.c.bf16 %v2376, %v2372
      %v2433 = vpack.c.bf16 %v2377, %v2373
      %v2434 = vpack.c.bf16 %v2382, %v2378
      %v2435 = vpack.c.bf16 %v2383, %v2379
      %v2436 = vpack.c.bf16 %v2384, %v2380
      %v2437 = vpack.c.bf16 %v2385, %v2381
      %v2438 = vpack.c.bf16 %v2390, %v2386
      %v2439 = vpack.c.bf16 %v2391, %v2387
      %v2440 = vpack.c.bf16 %v2392, %v2388
      %v2441 = vpack.c.bf16 %v2393, %v2389
      %v2442 = vpack.c.bf16 %v2398, %v2394
      %v2443 = vpack.c.bf16 %v2399, %v2395
      %v2444 = vpack.c.bf16 %v2400, %v2396
      %v2445 = vpack.c.bf16 %v2401, %v2397
      %v2446 = vpack.c.bf16 %v2406, %v2402
      %v2447 = vpack.c.bf16 %v2407, %v2403
      %v2448 = vpack.c.bf16 %v2408, %v2404
      %v2449 = vpack.c.bf16 %v2409, %v2405
      %v2450 = vpack.c.bf16 %v2414, %v2410
      %v2451 = vpack.c.bf16 %v2415, %v2411
      %v2452 = vpack.c.bf16 %v2416, %v2412
      %v2453 = vpack.c.bf16 %v2417, %v2413
      %v2454 = vpack.c.bf16 %v2422, %v2418
      %v2455 = vpack.c.bf16 %v2423, %v2419
      %v2456 = vpack.c.bf16 %v2424, %v2420
      %v2457 = vpack.c.bf16 %v2425, %v2421
      %v2458 = vld [vmem:[%s5] sm:$0xff]
      %v2459 = vld [vmem:[%s5 + $0x8] sm:$0xff]
      %v2460 = vld [vmem:[%s5 + $0x10] sm:$0xff]
      %v2461 = vld [vmem:[%s5 + $0x18] sm:$0xff]
      %v2462 = vld [vmem:[%s5 + $0x20] sm:$0xff]
      %v2463 = vld [vmem:[%s5 + $0x28] sm:$0xff]
      %v2464 = vld [vmem:[%s5 + $0x30] sm:$0xff]
      %v2465 = vld [vmem:[%s5 + $0x38] sm:$0xff]
      %v2466 = vld [vmem:[%s5 + $0x40] sm:$0xff]
      %v2467 = vld [vmem:[%s5 + $0x48] sm:$0xff]
      %v2468 = vld [vmem:[%s5 + $0x50] sm:$0xff]
      %v2469 = vld [vmem:[%s5 + $0x58] sm:$0xff]
      %v2470 = vld [vmem:[%s5 + $0x60] sm:$0xff]
      %v2471 = vld [vmem:[%s5 + $0x68] sm:$0xff]
      %v2472 = vld [vmem:[%s5 + $0x70] sm:$0xff]
      %v2473 = vld [vmem:[%s5 + $0x78] sm:$0xff]
      %v2474 = vld [vmem:[%s5 + $0x80] sm:$0xff]
      %v2475 = vld [vmem:[%s5 + $0x88] sm:$0xff]
      %v2476 = vld [vmem:[%s5 + $0x90] sm:$0xff]
      %v2477 = vld [vmem:[%s5 + $0x98] sm:$0xff]
      %v2478 = vld [vmem:[%s5 + $0xa0] sm:$0xff]
      %v2479 = vld [vmem:[%s5 + $0xa8] sm:$0xff]
      %v2480 = vld [vmem:[%s5 + $0xb0] sm:$0xff]
      %v2481 = vld [vmem:[%s5 + $0xb8] sm:$0xff]
      %v2482 = vld [vmem:[%s5 + $0xc0] sm:$0xff]
      %v2483 = vld [vmem:[%s5 + $0xc8] sm:$0xff]
      %v2484 = vld [vmem:[%s5 + $0xd0] sm:$0xff]
      %v2485 = vld [vmem:[%s5 + $0xd8] sm:$0xff]
      %v2486 = vld [vmem:[%s5 + $0xe0] sm:$0xff]
      %v2487 = vld [vmem:[%s5 + $0xe8] sm:$0xff]
      %v2488 = vld [vmem:[%s5 + $0xf0] sm:$0xff]
      %v2489 = vld [vmem:[%s5 + $0xf8] sm:$0xff]
      %v2490 = vld [vmem:[%s5 + $0x100] sm:$0xff]
      %v2491 = vld [vmem:[%s5 + $0x108] sm:$0xff]
      %v2492 = vld [vmem:[%s5 + $0x110] sm:$0xff]
      %v2493 = vld [vmem:[%s5 + $0x118] sm:$0xff]
      %v2494 = vld [vmem:[%s5 + $0x120] sm:$0xff]
      %v2495 = vld [vmem:[%s5 + $0x128] sm:$0xff]
      %v2496 = vld [vmem:[%s5 + $0x130] sm:$0xff]
      %v2497 = vld [vmem:[%s5 + $0x138] sm:$0xff]
      %v2498 = vld [vmem:[%s5 + $0x140] sm:$0xff]
      %v2499 = vld [vmem:[%s5 + $0x148] sm:$0xff]
      %v2500 = vld [vmem:[%s5 + $0x150] sm:$0xff]
      %v2501 = vld [vmem:[%s5 + $0x158] sm:$0xff]
      %v2502 = vld [vmem:[%s5 + $0x160] sm:$0xff]
      %v2503 = vld [vmem:[%s5 + $0x168] sm:$0xff]
      %v2504 = vld [vmem:[%s5 + $0x170] sm:$0xff]
      %v2505 = vld [vmem:[%s5 + $0x178] sm:$0xff]
      %v2506 = vld [vmem:[%s5 + $0x180] sm:$0xff]
      %v2507 = vld [vmem:[%s5 + $0x188] sm:$0xff]
      %v2508 = vld [vmem:[%s5 + $0x190] sm:$0xff]
      %v2509 = vld [vmem:[%s5 + $0x198] sm:$0xff]
      %v2510 = vld [vmem:[%s5 + $0x1a0] sm:$0xff]
      %v2511 = vld [vmem:[%s5 + $0x1a8] sm:$0xff]
      %v2512 = vld [vmem:[%s5 + $0x1b0] sm:$0xff]
      %v2513 = vld [vmem:[%s5 + $0x1b8] sm:$0xff]
      %v2514 = vld [vmem:[%s5 + $0x1c0] sm:$0xff]
      %v2515 = vld [vmem:[%s5 + $0x1c8] sm:$0xff]
      %v2516 = vld [vmem:[%s5 + $0x1d0] sm:$0xff]
      %v2517 = vld [vmem:[%s5 + $0x1d8] sm:$0xff]
      %v2518 = vld [vmem:[%s5 + $0x1e0] sm:$0xff]
      %v2519 = vld [vmem:[%s5 + $0x1e8] sm:$0xff]
      %v2520 = vld [vmem:[%s5 + $0x1f0] sm:$0xff]
      %v2521 = vld [vmem:[%s5 + $0x1f8] sm:$0xff]
      %v2522 = vld [vmem:[%s5 + $0x200] sm:$0xff]
      %v2523 = vld [vmem:[%s5 + $0x208] sm:$0xff]
      %v2524 = vld [vmem:[%s5 + $0x210] sm:$0xff]
      %v2525 = vld [vmem:[%s5 + $0x218] sm:$0xff]
      %v2526 = vld [vmem:[%s5 + $0x220] sm:$0xff]
      %v2527 = vld [vmem:[%s5 + $0x228] sm:$0xff]
      %v2528 = vld [vmem:[%s5 + $0x230] sm:$0xff]
      %v2529 = vld [vmem:[%s5 + $0x238] sm:$0xff]
      %v2530 = vld [vmem:[%s5 + $0x240] sm:$0xff]
      %v2531 = vld [vmem:[%s5 + $0x248] sm:$0xff]
      %v2532 = vld [vmem:[%s5 + $0x250] sm:$0xff]
      %v2533 = vld [vmem:[%s5 + $0x258] sm:$0xff]
      %v2534 = vld [vmem:[%s5 + $0x260] sm:$0xff]
      %v2535 = vld [vmem:[%s5 + $0x268] sm:$0xff]
      %v2536 = vld [vmem:[%s5 + $0x270] sm:$0xff]
      %v2537 = vld [vmem:[%s5 + $0x278] sm:$0xff]
      %v2538 = vld [vmem:[%s5 + $0x280] sm:$0xff]
      %v2539 = vld [vmem:[%s5 + $0x288] sm:$0xff]
      %v2540 = vld [vmem:[%s5 + $0x290] sm:$0xff]
      %v2541 = vld [vmem:[%s5 + $0x298] sm:$0xff]
      %v2542 = vld [vmem:[%s5 + $0x2a0] sm:$0xff]
      %v2543 = vld [vmem:[%s5 + $0x2a8] sm:$0xff]
      %v2544 = vld [vmem:[%s5 + $0x2b0] sm:$0xff]
      %v2545 = vld [vmem:[%s5 + $0x2b8] sm:$0xff]
      %v2546 = vld [vmem:[%s5 + $0x2c0] sm:$0xff]
      %v2547 = vld [vmem:[%s5 + $0x2c8] sm:$0xff]
      %v2548 = vld [vmem:[%s5 + $0x2d0] sm:$0xff]
      %v2549 = vld [vmem:[%s5 + $0x2d8] sm:$0xff]
      %v2550 = vld [vmem:[%s5 + $0x2e0] sm:$0xff]
      %v2551 = vld [vmem:[%s5 + $0x2e8] sm:$0xff]
      %v2552 = vld [vmem:[%s5 + $0x2f0] sm:$0xff]
      %v2553 = vld [vmem:[%s5 + $0x2f8] sm:$0xff]
      %v2554 = vld [vmem:[%s5 + $0x300] sm:$0xff]
      %v2555 = vld [vmem:[%s5 + $0x308] sm:$0xff]
      %v2556 = vld [vmem:[%s5 + $0x310] sm:$0xff]
      %v2557 = vld [vmem:[%s5 + $0x318] sm:$0xff]
      %v2558 = vld [vmem:[%s6] sm:$0xf]
      %v2560 = vlaneseq
      %v2561 = vshrl.u32 %v2560, 7
      %v2562 = vsub.s32 0, %v2561
      %v2563 = vrot.slane %v2558, %v2562
      %v2564 = vlaneseq
      %v2565 = vshrl.u32 %v2564, 7
      %v2566 = vsub.s32 1, %v2565
      %v2567 = vrot.slane %v2558, %v2566
      %v2568 = vlaneseq
      %v2569 = vshrl.u32 %v2568, 7
      %v2570 = vsub.s32 2, %v2569
      %v2571 = vrot.slane %v2558, %v2570
      %v2572 = vlaneseq
      %v2573 = vshrl.u32 %v2572, 7
      %v2574 = vsub.s32 3, %v2573
      %v2575 = vrot.slane %v2558, %v2574
      %v2680 = vunpack.c.l.b16 %v2458
      %v2681 = vunpack.c.h.b16 %v2458
      %v2682 = vunpack.c.l.b16 %v2459
      %v2683 = vunpack.c.h.b16 %v2459
      %v2684 = vunpack.c.l.b16 %v2460
      %v2685 = vunpack.c.h.b16 %v2460
      %v2686 = vunpack.c.l.b16 %v2461
      %v2687 = vunpack.c.h.b16 %v2461
      %v2688 = vunpack.c.l.b16 %v2462
      %v2689 = vunpack.c.h.b16 %v2462
      %v2690 = vunpack.c.l.b16 %v2463
      %v2691 = vunpack.c.h.b16 %v2463
      %v2692 = vunpack.c.l.b16 %v2464
      %v2693 = vunpack.c.h.b16 %v2464
      %v2694 = vunpack.c.l.b16 %v2465
      %v2695 = vunpack.c.h.b16 %v2465
      %v2696 = vunpack.c.l.b16 %v2466
      %v2697 = vunpack.c.h.b16 %v2466
      %v2698 = vunpack.c.l.b16 %v2467
      %v2699 = vunpack.c.h.b16 %v2467
      %v2700 = vunpack.c.l.b16 %v2468
      %v2701 = vunpack.c.h.b16 %v2468
      %v2702 = vunpack.c.l.b16 %v2469
      %v2703 = vunpack.c.h.b16 %v2469
      %v2704 = vunpack.c.l.b16 %v2470
      %v2705 = vunpack.c.h.b16 %v2470
      %v2706 = vunpack.c.l.b16 %v2471
      %v2707 = vunpack.c.h.b16 %v2471
      %v2708 = vunpack.c.l.b16 %v2472
      %v2709 = vunpack.c.h.b16 %v2472
      %v2710 = vunpack.c.l.b16 %v2473
      %v2711 = vunpack.c.h.b16 %v2473
      %v2712 = vunpack.c.l.b16 %v2474
      %v2713 = vunpack.c.h.b16 %v2474
      %v2714 = vunpack.c.l.b16 %v2475
      %v2715 = vunpack.c.h.b16 %v2475
      %v2716 = vunpack.c.l.b16 %v2476
      %v2717 = vunpack.c.h.b16 %v2476
      %v2718 = vunpack.c.l.b16 %v2477
      %v2719 = vunpack.c.h.b16 %v2477
      %v2720 = vunpack.c.l.b16 %v2478
      %v2721 = vunpack.c.h.b16 %v2478
      %v2722 = vunpack.c.l.b16 %v2479
      %v2723 = vunpack.c.h.b16 %v2479
      %v2724 = vunpack.c.l.b16 %v2480
      %v2725 = vunpack.c.h.b16 %v2480
      %v2726 = vunpack.c.l.b16 %v2481
      %v2727 = vunpack.c.h.b16 %v2481
      %v2728 = vunpack.c.l.b16 %v2482
      %v2729 = vunpack.c.h.b16 %v2482
      %v2730 = vunpack.c.l.b16 %v2483
      %v2731 = vunpack.c.h.b16 %v2483
      %v2732 = vunpack.c.l.b16 %v2484
      %v2733 = vunpack.c.h.b16 %v2484
      %v2734 = vunpack.c.l.b16 %v2485
      %v2735 = vunpack.c.h.b16 %v2485
      %v2736 = vunpack.c.l.b16 %v2486
      %v2737 = vunpack.c.h.b16 %v2486
      %v2738 = vunpack.c.l.b16 %v2487
      %v2739 = vunpack.c.h.b16 %v2487
      %v2740 = vunpack.c.l.b16 %v2488
      %v2741 = vunpack.c.h.b16 %v2488
      %v2742 = vunpack.c.l.b16 %v2489
      %v2743 = vunpack.c.h.b16 %v2489
      %v2744 = vunpack.c.l.b16 %v2490
      %v2745 = vunpack.c.h.b16 %v2490
      %v2746 = vunpack.c.l.b16 %v2491
      %v2747 = vunpack.c.h.b16 %v2491
      %v2748 = vunpack.c.l.b16 %v2492
      %v2749 = vunpack.c.h.b16 %v2492
      %v2750 = vunpack.c.l.b16 %v2493
      %v2751 = vunpack.c.h.b16 %v2493
      %v2752 = vunpack.c.l.b16 %v2494
      %v2753 = vunpack.c.h.b16 %v2494
      %v2754 = vunpack.c.l.b16 %v2495
      %v2755 = vunpack.c.h.b16 %v2495
      %v2756 = vunpack.c.l.b16 %v2496
      %v2757 = vunpack.c.h.b16 %v2496
      %v2758 = vunpack.c.l.b16 %v2497
      %v2759 = vunpack.c.h.b16 %v2497
      %v2760 = vunpack.c.l.b16 %v2498
      %v2761 = vunpack.c.h.b16 %v2498
      %v2762 = vunpack.c.l.b16 %v2499
      %v2763 = vunpack.c.h.b16 %v2499
      %v2764 = vunpack.c.l.b16 %v2500
      %v2765 = vunpack.c.h.b16 %v2500
      %v2766 = vunpack.c.l.b16 %v2501
      %v2767 = vunpack.c.h.b16 %v2501
      %v2768 = vunpack.c.l.b16 %v2502
      %v2769 = vunpack.c.h.b16 %v2502
      %v2770 = vunpack.c.l.b16 %v2503
      %v2771 = vunpack.c.h.b16 %v2503
      %v2772 = vunpack.c.l.b16 %v2504
      %v2773 = vunpack.c.h.b16 %v2504
      %v2774 = vunpack.c.l.b16 %v2505
      %v2775 = vunpack.c.h.b16 %v2505
      %v2776 = vunpack.c.l.b16 %v2506
      %v2777 = vunpack.c.h.b16 %v2506
      %v2778 = vunpack.c.l.b16 %v2507
      %v2779 = vunpack.c.h.b16 %v2507
      %v2780 = vunpack.c.l.b16 %v2508
      %v2781 = vunpack.c.h.b16 %v2508
      %v2782 = vunpack.c.l.b16 %v2509
      %v2783 = vunpack.c.h.b16 %v2509
      %v2784 = vunpack.c.l.b16 %v2510
      %v2785 = vunpack.c.h.b16 %v2510
      %v2786 = vunpack.c.l.b16 %v2511
      %v2787 = vunpack.c.h.b16 %v2511
      %v2788 = vunpack.c.l.b16 %v2512
      %v2789 = vunpack.c.h.b16 %v2512
      %v2790 = vunpack.c.l.b16 %v2513
      %v2791 = vunpack.c.h.b16 %v2513
      %v2792 = vunpack.c.l.b16 %v2514
      %v2793 = vunpack.c.h.b16 %v2514
      %v2794 = vunpack.c.l.b16 %v2515
      %v2795 = vunpack.c.h.b16 %v2515
      %v2796 = vunpack.c.l.b16 %v2516
      %v2797 = vunpack.c.h.b16 %v2516
      %v2798 = vunpack.c.l.b16 %v2517
      %v2799 = vunpack.c.h.b16 %v2517
      %v2800 = vunpack.c.l.b16 %v2518
      %v2801 = vunpack.c.h.b16 %v2518
      %v2802 = vunpack.c.l.b16 %v2519
      %v2803 = vunpack.c.h.b16 %v2519
      %v2804 = vunpack.c.l.b16 %v2520
      %v2805 = vunpack.c.h.b16 %v2520
      %v2806 = vunpack.c.l.b16 %v2521
      %v2807 = vunpack.c.h.b16 %v2521
      %v2808 = vunpack.c.l.b16 %v2522
      %v2809 = vunpack.c.h.b16 %v2522
      %v2810 = vunpack.c.l.b16 %v2523
      %v2811 = vunpack.c.h.b16 %v2523
      %v2812 = vunpack.c.l.b16 %v2524
      %v2813 = vunpack.c.h.b16 %v2524
      %v2814 = vunpack.c.l.b16 %v2525
      %v2815 = vunpack.c.h.b16 %v2525
      %v2816 = vunpack.c.l.b16 %v2526
      %v2817 = vunpack.c.h.b16 %v2526
      %v2818 = vunpack.c.l.b16 %v2527
      %v2819 = vunpack.c.h.b16 %v2527
      %v2820 = vunpack.c.l.b16 %v2528
      %v2821 = vunpack.c.h.b16 %v2528
      %v2822 = vunpack.c.l.b16 %v2529
      %v2823 = vunpack.c.h.b16 %v2529
      %v2824 = vunpack.c.l.b16 %v2530
      %v2825 = vunpack.c.h.b16 %v2530
      %v2826 = vunpack.c.l.b16 %v2531
      %v2827 = vunpack.c.h.b16 %v2531
      %v2828 = vunpack.c.l.b16 %v2532
      %v2829 = vunpack.c.h.b16 %v2532
      %v2830 = vunpack.c.l.b16 %v2533
      %v2831 = vunpack.c.h.b16 %v2533
      %v2832 = vunpack.c.l.b16 %v2534
      %v2833 = vunpack.c.h.b16 %v2534
      %v2834 = vunpack.c.l.b16 %v2535
      %v2835 = vunpack.c.h.b16 %v2535
      %v2836 = vunpack.c.l.b16 %v2536
      %v2837 = vunpack.c.h.b16 %v2536
      %v2838 = vunpack.c.l.b16 %v2537
      %v2839 = vunpack.c.h.b16 %v2537
      %v2840 = vunpack.c.l.b16 %v2538
      %v2841 = vunpack.c.h.b16 %v2538
      %v2842 = vunpack.c.l.b16 %v2539
      %v2843 = vunpack.c.h.b16 %v2539
      %v2844 = vunpack.c.l.b16 %v2540
      %v2845 = vunpack.c.h.b16 %v2540
      %v2846 = vunpack.c.l.b16 %v2541
      %v2847 = vunpack.c.h.b16 %v2541
      %v2848 = vunpack.c.l.b16 %v2542
      %v2849 = vunpack.c.h.b16 %v2542
      %v2850 = vunpack.c.l.b16 %v2543
      %v2851 = vunpack.c.h.b16 %v2543
      %v2852 = vunpack.c.l.b16 %v2544
      %v2853 = vunpack.c.h.b16 %v2544
      %v2854 = vunpack.c.l.b16 %v2545
      %v2855 = vunpack.c.h.b16 %v2545
      %v2856 = vunpack.c.l.b16 %v2546
      %v2857 = vunpack.c.h.b16 %v2546
      %v2858 = vunpack.c.l.b16 %v2547
      %v2859 = vunpack.c.h.b16 %v2547
      %v2860 = vunpack.c.l.b16 %v2548
      %v2861 = vunpack.c.h.b16 %v2548
      %v2862 = vunpack.c.l.b16 %v2549
      %v2863 = vunpack.c.h.b16 %v2549
      %v2864 = vunpack.c.l.b16 %v2550
      %v2865 = vunpack.c.h.b16 %v2550
      %v2866 = vunpack.c.l.b16 %v2551
      %v2867 = vunpack.c.h.b16 %v2551
      %v2868 = vunpack.c.l.b16 %v2552
      %v2869 = vunpack.c.h.b16 %v2552
      %v2870 = vunpack.c.l.b16 %v2553
      %v2871 = vunpack.c.h.b16 %v2553
      %v2872 = vunpack.c.l.b16 %v2554
      %v2873 = vunpack.c.h.b16 %v2554
      %v2874 = vunpack.c.l.b16 %v2555
      %v2875 = vunpack.c.h.b16 %v2555
      %v2876 = vunpack.c.l.b16 %v2556
      %v2877 = vunpack.c.h.b16 %v2556
      %v2878 = vunpack.c.l.b16 %v2557
      %v2879 = vunpack.c.h.b16 %v2557
      %v2880 = vpack.c.b16 %v2684, %v2680
      %v2881 = vpack.c.b16 %v2685, %v2681
      %v2882 = vpack.c.b16 %v2686, %v2682
      %v2883 = vpack.c.b16 %v2687, %v2683
      %v2884 = vpack.c.b16 %v2692, %v2688
      %v2885 = vpack.c.b16 %v2693, %v2689
      %v2886 = vpack.c.b16 %v2694, %v2690
      %v2887 = vpack.c.b16 %v2695, %v2691
      %v2888 = vpack.c.b16 %v2700, %v2696
      %v2889 = vpack.c.b16 %v2701, %v2697
      %v2890 = vpack.c.b16 %v2702, %v2698
      %v2891 = vpack.c.b16 %v2703, %v2699
      %v2892 = vpack.c.b16 %v2708, %v2704
      %v2893 = vpack.c.b16 %v2709, %v2705
      %v2894 = vpack.c.b16 %v2710, %v2706
      %v2895 = vpack.c.b16 %v2711, %v2707
      %v2896 = vpack.c.b16 %v2716, %v2712
      %v2897 = vpack.c.b16 %v2717, %v2713
      %v2898 = vpack.c.b16 %v2718, %v2714
      %v2899 = vpack.c.b16 %v2719, %v2715
      %v2900 = vpack.c.b16 %v2724, %v2720
      %v2901 = vpack.c.b16 %v2725, %v2721
      %v2902 = vpack.c.b16 %v2726, %v2722
      %v2903 = vpack.c.b16 %v2727, %v2723
      %v2904 = vpack.c.b16 %v2732, %v2728
      %v2905 = vpack.c.b16 %v2733, %v2729
      %v2906 = vpack.c.b16 %v2734, %v2730
      %v2907 = vpack.c.b16 %v2735, %v2731
      %v2908 = vpack.c.b16 %v2740, %v2736
      %v2909 = vpack.c.b16 %v2741, %v2737
      %v2910 = vpack.c.b16 %v2742, %v2738
      %v2911 = vpack.c.b16 %v2743, %v2739
      %v2912 = vpack.c.b16 %v2748, %v2744
      %v2913 = vpack.c.b16 %v2749, %v2745
      %v2914 = vpack.c.b16 %v2750, %v2746
      %v2915 = vpack.c.b16 %v2751, %v2747
      %v2916 = vpack.c.b16 %v2756, %v2752
      %v2917 = vpack.c.b16 %v2757, %v2753
      %v2918 = vpack.c.b16 %v2758, %v2754
      %v2919 = vpack.c.b16 %v2759, %v2755
      %v2920 = vpack.c.b16 %v2764, %v2760
      %v2921 = vpack.c.b16 %v2765, %v2761
      %v2922 = vpack.c.b16 %v2766, %v2762
      %v2923 = vpack.c.b16 %v2767, %v2763
      %v2924 = vpack.c.b16 %v2772, %v2768
      %v2925 = vpack.c.b16 %v2773, %v2769
      %v2926 = vpack.c.b16 %v2774, %v2770
      %v2927 = vpack.c.b16 %v2775, %v2771
      %v2928 = vpack.c.b16 %v2780, %v2776
      %v2929 = vpack.c.b16 %v2781, %v2777
      %v2930 = vpack.c.b16 %v2782, %v2778
      %v2931 = vpack.c.b16 %v2783, %v2779
      %v2932 = vpack.c.b16 %v2788, %v2784
      %v2933 = vpack.c.b16 %v2789, %v2785
      %v2934 = vpack.c.b16 %v2790, %v2786
      %v2935 = vpack.c.b16 %v2791, %v2787
      %v2936 = vpack.c.b16 %v2796, %v2792
      %v2937 = vpack.c.b16 %v2797, %v2793
      %v2938 = vpack.c.b16 %v2798, %v2794
      %v2939 = vpack.c.b16 %v2799, %v2795
      %v2940 = vpack.c.b16 %v2804, %v2800
      %v2941 = vpack.c.b16 %v2805, %v2801
      %v2942 = vpack.c.b16 %v2806, %v2802
      %v2943 = vpack.c.b16 %v2807, %v2803
      %v2944 = vpack.c.b16 %v2812, %v2808
      %v2945 = vpack.c.b16 %v2813, %v2809
      %v2946 = vpack.c.b16 %v2814, %v2810
      %v2947 = vpack.c.b16 %v2815, %v2811
      %v2948 = vpack.c.b16 %v2820, %v2816
      %v2949 = vpack.c.b16 %v2821, %v2817
      %v2950 = vpack.c.b16 %v2822, %v2818
      %v2951 = vpack.c.b16 %v2823, %v2819
      %v2952 = vpack.c.b16 %v2828, %v2824
      %v2953 = vpack.c.b16 %v2829, %v2825
      %v2954 = vpack.c.b16 %v2830, %v2826
      %v2955 = vpack.c.b16 %v2831, %v2827
      %v2956 = vpack.c.b16 %v2836, %v2832
      %v2957 = vpack.c.b16 %v2837, %v2833
      %v2958 = vpack.c.b16 %v2838, %v2834
      %v2959 = vpack.c.b16 %v2839, %v2835
      %v2960 = vpack.c.b16 %v2844, %v2840
      %v2961 = vpack.c.b16 %v2845, %v2841
      %v2962 = vpack.c.b16 %v2846, %v2842
      %v2963 = vpack.c.b16 %v2847, %v2843
      %v2964 = vpack.c.b16 %v2852, %v2848
      %v2965 = vpack.c.b16 %v2853, %v2849
      %v2966 = vpack.c.b16 %v2854, %v2850
      %v2967 = vpack.c.b16 %v2855, %v2851
      %v2968 = vpack.c.b16 %v2860, %v2856
      %v2969 = vpack.c.b16 %v2861, %v2857
      %v2970 = vpack.c.b16 %v2862, %v2858
      %v2971 = vpack.c.b16 %v2863, %v2859
      %v2972 = vpack.c.b16 %v2868, %v2864
      %v2973 = vpack.c.b16 %v2869, %v2865
      %v2974 = vpack.c.b16 %v2870, %v2866
      %v2975 = vpack.c.b16 %v2871, %v2867
      %v2976 = vpack.c.b16 %v2876, %v2872
      %v2977 = vpack.c.b16 %v2877, %v2873
      %v2978 = vpack.c.b16 %v2878, %v2874
      %v2979 = vpack.c.b16 %v2879, %v2875
      %v3081 = vsel %vm1117, %v2429, 0
      %v3084 = vsel %vm1117, %v2433, 0
      %v3087 = vsel %vm1117, %v2437, 0
      %v3090 = vsel %vm1117, %v2441, 0
      %v3093 = vsel %vm1117, %v2445, 0
      %v3096 = vsel %vm1117, %v2449, 0
      %v3099 = vsel %vm1117, %v2453, 0
      %v3102 = vsel %vm1117, %v2457, 0
      %3104 = vmatprep.subr.bf16.mxu0 %v2881
      %3105 = vmatpush1.bf16.msra.mxu0 %v2880
      %3106 = vmatprep.subr.bf16.mxu0 %v2885
      %3107 = vmatpush1.bf16.msra.mxu0 %v2884
      %3108 = vmatprep.subr.bf16.mxu0 %v2889
      %3109 = vmatpush1.bf16.msra.mxu0 %v2888
      %3110 = vmatprep.subr.bf16.mxu0 %v2893
      %3111 = vmatpush1.bf16.msra.mxu0 %v2892
      %3112 = vmatprep.subr.bf16.mxu0 %v2897
      %3113 = vmatpush1.bf16.msra.mxu0 %v2896
      %3114 = vmatprep.subr.bf16.mxu0 %v2901
      %3115 = vmatpush1.bf16.msra.mxu0 %v2900
      %3116 = vmatprep.subr.bf16.mxu0 %v2905
      %3117 = vmatpush1.bf16.msra.mxu0 %v2904
      %3118 = vmatprep.subr.bf16.mxu0 %v2909
      %3119 = vmatpush1.bf16.msra.mxu0 %v2908
      %3120 = vmatprep.subr.bf16.mxu0 %v2913
      %3121 = vmatpush1.bf16.msra.mxu0 %v2912
      %3122 = vmatprep.subr.bf16.mxu0 %v2917
      %3123 = vmatpush1.bf16.msra.mxu0 %v2916
      %3124 = vmatprep.subr.bf16.mxu0 %v2921
      %3125 = vmatpush1.bf16.msra.mxu0 %v2920
      %3126 = vmatprep.subr.bf16.mxu0 %v2925
      %3127 = vmatpush1.bf16.msra.mxu0 %v2924
      %3128 = vmatprep.subr.bf16.mxu0 %v2929
      %3129 = vmatpush1.bf16.msra.mxu0 %v2928
      %3130 = vmatprep.subr.bf16.mxu0 %v2933
      %3131 = vmatpush1.bf16.msra.mxu0 %v2932
      %3132 = vmatprep.subr.bf16.mxu0 %v2937
      %3133 = vmatpush1.bf16.msra.mxu0 %v2936
      %3134 = vmatprep.subr.bf16.mxu0 %v2941
      %3135 = vmatpush1.bf16.msra.mxu0 %v2940
      %3136 = vmatprep.mubr.bf16.mxu0 %v2427
      %3137 = vmatmul.mubr.bf16.gmra.mrb[0].mxu0 %v2426
      %v3138 = vpop.f32.mrb[0].mxu0
      %v3139 = vadd.f32 %v2563, %v3138
      %v3140 = vpop.f32.mrb[0].mxu0
      %v3141 = vadd.f32 %v2567, %v3140
      %v3142 = vpop.f32.mrb[0].mxu0
      %v3143 = vadd.f32 %v2563, %v3142
      %v3144 = vpop.f32.mrb[0].mxu0
      %v3145 = vadd.f32 %v2567, %v3144
      %3146 = vmatprep.mubr.bf16.mxu0 %v2431
      %3147 = vmatmul.mubr.bf16.gmra.mrb[0].mxu0 %v2430
      %v3148 = vpop.f32.mrb[0].mxu0
      %v3149 = vadd.f32 %v2563, %v3148
      %v3150 = vpop.f32.mrb[0].mxu0
      %v3151 = vadd.f32 %v2567, %v3150
      %v3152 = vpop.f32.mrb[0].mxu0
      %v3153 = vadd.f32 %v2563, %v3152
      %v3154 = vpop.f32.mrb[0].mxu0
      %v3155 = vadd.f32 %v2567, %v3154
      %3156 = vmatprep.mubr.bf16.mxu0 %v2435
      %3157 = vmatmul.mubr.bf16.gmra.mrb[0].mxu0 %v2434
      %v3158 = vpop.f32.mrb[0].mxu0
      %v3159 = vadd.f32 %v2563, %v3158
      %v3160 = vpop.f32.mrb[0].mxu0
      %v3161 = vadd.f32 %v2567, %v3160
      %v3162 = vpop.f32.mrb[0].mxu0
      %v3163 = vadd.f32 %v2563, %v3162
      %v3164 = vpop.f32.mrb[0].mxu0
      %v3165 = vadd.f32 %v2567, %v3164
      %3166 = vmatprep.mubr.bf16.mxu0 %v2439
      %3167 = vmatmul.mubr.bf16.gmra.mrb[0].mxu0 %v2438
      %v3168 = vpop.f32.mrb[0].mxu0
      %v3169 = vadd.f32 %v2563, %v3168
      %v3170 = vpop.f32.mrb[0].mxu0
      %v3171 = vadd.f32 %v2567, %v3170
      %v3172 = vpop.f32.mrb[0].mxu0
      %v3173 = vadd.f32 %v2563, %v3172
      %v3174 = vpop.f32.mrb[0].mxu0
      %v3175 = vadd.f32 %v2567, %v3174
      %3176 = vmatprep.mubr.bf16.mxu0 %v2443
      %3177 = vmatmul.mubr.bf16.gmra.mrb[0].mxu0 %v2442
      %v3178 = vpop.f32.mrb[0].mxu0
      %v3179 = vadd.f32 %v2563, %v3178
      %v3180 = vpop.f32.mrb[0].mxu0
      %v3181 = vadd.f32 %v2567, %v3180
      %v3182 = vpop.f32.mrb[0].mxu0
      %v3183 = vadd.f32 %v2563, %v3182
      %v3184 = vpop.f32.mrb[0].mxu0
      %v3185 = vadd.f32 %v2567, %v3184
      %3186 = vmatprep.mubr.bf16.mxu0 %v2447
      %3187 = vmatmul.mubr.bf16.gmra.mrb[0].mxu0 %v2446
      %v3188 = vpop.f32.mrb[0].mxu0
      %v3189 = vadd.f32 %v2563, %v3188
      %v3190 = vpop.f32.mrb[0].mxu0
      %v3191 = vadd.f32 %v2567, %v3190
      %v3192 = vpop.f32.mrb[0].mxu0
      %v3193 = vadd.f32 %v2563, %v3192
      %v3194 = vpop.f32.mrb[0].mxu0
      %v3195 = vadd.f32 %v2567, %v3194
      %3196 = vmatprep.mubr.bf16.mxu0 %v2451
      %3197 = vmatmul.mubr.bf16.gmra.mrb[0].mxu0 %v2450
      %v3198 = vpop.f32.mrb[0].mxu0
      %v3199 = vadd.f32 %v2563, %v3198
      %v3200 = vpop.f32.mrb[0].mxu0
      %v3201 = vadd.f32 %v2567, %v3200
      %v3202 = vpop.f32.mrb[0].mxu0
      %v3203 = vadd.f32 %v2563, %v3202
      %v3204 = vpop.f32.mrb[0].mxu0
      %v3205 = vadd.f32 %v2567, %v3204
      %3206 = vmatprep.mubr.bf16.mxu0 %v2455
      %3207 = vmatmul.mubr.bf16.gmra.mrb[0].mxu0 %v2454
      %v3208 = vpop.f32.mrb[0].mxu0
      %v3209 = vadd.f32 %v2563, %v3208
      %v3210 = vpop.f32.mrb[0].mxu0
      %v3211 = vadd.f32 %v2567, %v3210
      %v3212 = vpop.f32.mrb[0].mxu0
      %v3213 = vadd.f32 %v2563, %v3212
      %v3214 = vpop.f32.mrb[0].mxu0
      %v3215 = vadd.f32 %v2567, %v3214
      %3216 = vdwg.mxu0
      %3217 = vmatprep.subr.bf16.mxu0 %v2945
      %3218 = vmatpush1.bf16.msra.mxu0 %v2944
      %3219 = vmatprep.subr.bf16.mxu0 %v2949
      %3220 = vmatpush1.bf16.msra.mxu0 %v2948
      %3221 = vmatprep.subr.bf16.mxu0 %v2953
      %3222 = vmatpush1.bf16.msra.mxu0 %v2952
      %3223 = vmatprep.subr.bf16.mxu0 %v2957
      %3224 = vmatpush1.bf16.msra.mxu0 %v2956
      %3225 = vmatprep.subr.bf16.mxu0 %v2961
      %3226 = vmatpush1.bf16.msra.mxu0 %v2960
      %3227 = vmatprep.subr.bf16.mxu0 %v2965
      %3228 = vmatpush1.bf16.msra.mxu0 %v2964
      %3229 = vmatprep.subr.bf16.mxu0 %v2969
      %3230 = vmatpush1.bf16.msra.mxu0 %v2968
      %3231 = vmatprep.subr.bf16.mxu0 %v2973
      %3232 = vmatpush1.bf16.msra.mxu0 %v2972
      %3233 = vmatprep.subr.bf16.mxu0 %v2977
      %3234 = vmatpush1.bf16.msra.mxu0 %v2976
      %3235 = vmatprep.subr.bf16.mxu0 0
      %3236 = vmatpush1.bf16.msra.mxu0 0
      %3237 = vmatprep.subr.bf16.mxu0 0
      %3238 = vmatpush1.bf16.msra.mxu0 0
      %3239 = vmatprep.subr.bf16.mxu0 0
      %3240 = vmatpush1.bf16.msra.mxu0 0
      %3241 = vmatprep.subr.bf16.mxu0 0
      %3242 = vmatpush1.bf16.msra.mxu0 0
      %3243 = vmatprep.subr.bf16.mxu0 0
      %3244 = vmatpush1.bf16.msra.mxu0 0
      %3245 = vmatprep.subr.bf16.mxu0 0
      %3246 = vmatpush1.bf16.msra.mxu0 0
      %3247 = vmatprep.subr.bf16.mxu0 0
      %3248 = vmatpush1.bf16.msra.mxu0 0
      %3249 = vmatprep.mubr.bf16.mxu0 %v3081
      %3250 = vmatmul.mubr.bf16.gmra.mrb[0].mxu0 %v2428
      %v3251 = vpop.f32.mrb[0].mxu0
      %v3252 = vadd.f32 %v3139, %v3251
      %v3253 = vpop.f32.mrb[0].mxu0
      %v3254 = vadd.f32 %v3141, %v3253
      %v3255 = vpop.f32.mrb[0].mxu0
      %v3256 = vadd.f32 %v3143, %v3255
      %v3257 = vpop.f32.mrb[0].mxu0
      %v3258 = vadd.f32 %v3145, %v3257
      %3259 = vmatprep.mubr.bf16.mxu0 %v3084
      %3260 = vmatmul.mubr.bf16.gmra.mrb[0].mxu0 %v2432
      %v3261 = vpop.f32.mrb[0].mxu0
      %v3262 = vadd.f32 %v3149, %v3261
      %v3263 = vpop.f32.mrb[0].mxu0
      %v3264 = vadd.f32 %v3151, %v3263
      %v3265 = vpop.f32.mrb[0].mxu0
      %v3266 = vadd.f32 %v3153, %v3265
      %v3267 = vpop.f32.mrb[0].mxu0
      %v3268 = vadd.f32 %v3155, %v3267
      %3269 = vmatprep.mubr.bf16.mxu0 %v3087
      %3270 = vmatmul.mubr.bf16.gmra.mrb[0].mxu0 %v2436
      %v3271 = vpop.f32.mrb[0].mxu0
      %v3272 = vadd.f32 %v3159, %v3271
      %v3273 = vpop.f32.mrb[0].mxu0
      %v3274 = vadd.f32 %v3161, %v3273
      %v3275 = vpop.f32.mrb[0].mxu0
      %v3276 = vadd.f32 %v3163, %v3275
      %v3277 = vpop.f32.mrb[0].mxu0
      %v3278 = vadd.f32 %v3165, %v3277
      %3279 = vmatprep.mubr.bf16.mxu0 %v3090
      %3280 = vmatmul.mubr.bf16.gmra.mrb[0].mxu0 %v2440
      %v3281 = vpop.f32.mrb[0].mxu0
      %v3282 = vadd.f32 %v3169, %v3281
      %v3283 = vpop.f32.mrb[0].mxu0
      %v3284 = vadd.f32 %v3171, %v3283
      %v3285 = vpop.f32.mrb[0].mxu0
      %v3286 = vadd.f32 %v3173, %v3285
      %v3287 = vpop.f32.mrb[0].mxu0
      %v3288 = vadd.f32 %v3175, %v3287
      %3289 = vmatprep.mubr.bf16.mxu0 %v3093
      %3290 = vmatmul.mubr.bf16.gmra.mrb[0].mxu0 %v2444
      %v3291 = vpop.f32.mrb[0].mxu0
      %v3292 = vadd.f32 %v3179, %v3291
      %v3293 = vpop.f32.mrb[0].mxu0
      %v3294 = vadd.f32 %v3181, %v3293
      %v3295 = vpop.f32.mrb[0].mxu0
      %v3296 = vadd.f32 %v3183, %v3295
      %v3297 = vpop.f32.mrb[0].mxu0
      %v3298 = vadd.f32 %v3185, %v3297
      %3299 = vmatprep.mubr.bf16.mxu0 %v3096
      %3300 = vmatmul.mubr.bf16.gmra.mrb[0].mxu0 %v2448
      %v3301 = vpop.f32.mrb[0].mxu0
      %v3302 = vadd.f32 %v3189, %v3301
      %v3303 = vpop.f32.mrb[0].mxu0
      %v3304 = vadd.f32 %v3191, %v3303
      %v3305 = vpop.f32.mrb[0].mxu0
      %v3306 = vadd.f32 %v3193, %v3305
      %v3307 = vpop.f32.mrb[0].mxu0
      %v3308 = vadd.f32 %v3195, %v3307
      %3309 = vmatprep.mubr.bf16.mxu0 %v3099
      %3310 = vmatmul.mubr.bf16.gmra.mrb[0].mxu0 %v2452
      %v3311 = vpop.f32.mrb[0].mxu0
      %v3312 = vadd.f32 %v3199, %v3311
      %v3313 = vpop.f32.mrb[0].mxu0
      %v3314 = vadd.f32 %v3201, %v3313
      %v3315 = vpop.f32.mrb[0].mxu0
      %v3316 = vadd.f32 %v3203, %v3315
      %v3317 = vpop.f32.mrb[0].mxu0
      %v3318 = vadd.f32 %v3205, %v3317
      %3319 = vmatprep.mubr.bf16.mxu0 %v3102
      %3320 = vmatmul.mubr.bf16.gmra.mrb[0].mxu0 %v2456
      %v3321 = vpop.f32.mrb[0].mxu0
      %v3322 = vadd.f32 %v3209, %v3321
      %v3323 = vpop.f32.mrb[0].mxu0
      %v3324 = vadd.f32 %v3211, %v3323
      %v3325 = vpop.f32.mrb[0].mxu0
      %v3326 = vadd.f32 %v3213, %v3325
      %v3327 = vpop.f32.mrb[0].mxu0
      %v3328 = vadd.f32 %v3215, %v3327
      %3329 = vdwg.mxu0
      %3330 = vmatprep.subr.bf16.mxu0 %v2883
      %3331 = vmatpush1.bf16.msra.mxu0 %v2882
      %3332 = vmatprep.subr.bf16.mxu0 %v2887
      %3333 = vmatpush1.bf16.msra.mxu0 %v2886
      %3334 = vmatprep.subr.bf16.mxu0 %v2891
      %3335 = vmatpush1.bf16.msra.mxu0 %v2890
      %3336 = vmatprep.subr.bf16.mxu0 %v2895
      %3337 = vmatpush1.bf16.msra.mxu0 %v2894
      %3338 = vmatprep.subr.bf16.mxu0 %v2899
      %3339 = vmatpush1.bf16.msra.mxu0 %v2898
      %3340 = vmatprep.subr.bf16.mxu0 %v2903
      %3341 = vmatpush1.bf16.msra.mxu0 %v2902
      %3342 = vmatprep.subr.bf16.mxu0 %v2907
      %3343 = vmatpush1.bf16.msra.mxu0 %v2906
      %3344 = vmatprep.subr.bf16.mxu0 %v2911
      %3345 = vmatpush1.bf16.msra.mxu0 %v2910
      %3346 = vmatprep.subr.bf16.mxu0 %v2915
      %3347 = vmatpush1.bf16.msra.mxu0 %v2914
      %3348 = vmatprep.subr.bf16.mxu0 %v2919
      %3349 = vmatpush1.bf16.msra.mxu0 %v2918
      %3350 = vmatprep.subr.bf16.mxu0 %v2923
      %3351 = vmatpush1.bf16.msra.mxu0 %v2922
      %3352 = vmatprep.subr.bf16.mxu0 %v2927
      %3353 = vmatpush1.bf16.msra.mxu0 %v2926
      %3354 = vmatprep.subr.bf16.mxu0 %v2931
      %3355 = vmatpush1.bf16.msra.mxu0 %v2930
      %3356 = vmatprep.subr.bf16.mxu0 %v2935
      %3357 = vmatpush1.bf16.msra.mxu0 %v2934
      %3358 = vmatprep.subr.bf16.mxu0 %v2939
      %3359 = vmatpush1.bf16.msra.mxu0 %v2938
      %3360 = vmatprep.subr.bf16.mxu0 %v2943
      %3361 = vmatpush1.bf16.msra.mxu0 %v2942
      %3362 = vmatprep.mubr.bf16.mxu0 %v2427
      %3363 = vmatmul.mubr.bf16.gmra.mrb[0].mxu0 %v2426
      %v3364 = vpop.f32.mrb[0].mxu0
      %v3365 = vadd.f32 %v2571, %v3364
      %v3366 = vpop.f32.mrb[0].mxu0
      %v3367 = vadd.f32 %v2575, %v3366
      %v3368 = vpop.f32.mrb[0].mxu0
      %v3369 = vadd.f32 %v2571, %v3368
      %v3370 = vpop.f32.mrb[0].mxu0
      %v3371 = vadd.f32 %v2575, %v3370
      %3372 = vmatprep.mubr.bf16.mxu0 %v2431
      %3373 = vmatmul.mubr.bf16.gmra.mrb[0].mxu0 %v2430
      %v3374 = vpop.f32.mrb[0].mxu0
      %v3375 = vadd.f32 %v2571, %v3374
      %v3376 = vpop.f32.mrb[0].mxu0
      %v3377 = vadd.f32 %v2575, %v3376
      %v3378 = vpop.f32.mrb[0].mxu0
      %v3379 = vadd.f32 %v2571, %v3378
      %v3380 = vpop.f32.mrb[0].mxu0
      %v3381 = vadd.f32 %v2575, %v3380
      %3382 = vmatprep.mubr.bf16.mxu0 %v2435
      %3383 = vmatmul.mubr.bf16.gmra.mrb[0].mxu0 %v2434
      %v3384 = vpop.f32.mrb[0].mxu0
      %v3385 = vadd.f32 %v2571, %v3384
      %v3386 = vpop.f32.mrb[0].mxu0
      %v3387 = vadd.f32 %v2575, %v3386
      %v3388 = vpop.f32.mrb[0].mxu0
      %v3389 = vadd.f32 %v2571, %v3388
      %v3390 = vpop.f32.mrb[0].mxu0
      %v3391 = vadd.f32 %v2575, %v3390
      %3392 = vmatprep.mubr.bf16.mxu0 %v2439
      %3393 = vmatmul.mubr.bf16.gmra.mrb[0].mxu0 %v2438
      %v3394 = vpop.f32.mrb[0].mxu0
      %v3395 = vadd.f32 %v2571, %v3394
      %v3396 = vpop.f32.mrb[0].mxu0
      %v3397 = vadd.f32 %v2575, %v3396
      %v3398 = vpop.f32.mrb[0].mxu0
      %v3399 = vadd.f32 %v2571, %v3398
      %v3400 = vpop.f32.mrb[0].mxu0
      %v3401 = vadd.f32 %v2575, %v3400
      %3402 = vmatprep.mubr.bf16.mxu0 %v2443
      %3403 = vmatmul.mubr.bf16.gmra.mrb[0].mxu0 %v2442
      %v3404 = vpop.f32.mrb[0].mxu0
      %v3405 = vadd.f32 %v2571, %v3404
      %v3406 = vpop.f32.mrb[0].mxu0
      %v3407 = vadd.f32 %v2575, %v3406
      %v3408 = vpop.f32.mrb[0].mxu0
      %v3409 = vadd.f32 %v2571, %v3408
      %v3410 = vpop.f32.mrb[0].mxu0
      %v3411 = vadd.f32 %v2575, %v3410
      %3412 = vmatprep.mubr.bf16.mxu0 %v2447
      %3413 = vmatmul.mubr.bf16.gmra.mrb[0].mxu0 %v2446
      %v3414 = vpop.f32.mrb[0].mxu0
      %v3415 = vadd.f32 %v2571, %v3414
      %v3416 = vpop.f32.mrb[0].mxu0
      %v3417 = vadd.f32 %v2575, %v3416
      %v3418 = vpop.f32.mrb[0].mxu0
      %v3419 = vadd.f32 %v2571, %v3418
      %v3420 = vpop.f32.mrb[0].mxu0
      %v3421 = vadd.f32 %v2575, %v3420
      %3422 = vmatprep.mubr.bf16.mxu0 %v2451
      %3423 = vmatmul.mubr.bf16.gmra.mrb[0].mxu0 %v2450
      %v3424 = vpop.f32.mrb[0].mxu0
      %v3425 = vadd.f32 %v2571, %v3424
      %v3426 = vpop.f32.mrb[0].mxu0
      %v3427 = vadd.f32 %v2575, %v3426
      %v3428 = vpop.f32.mrb[0].mxu0
      %v3429 = vadd.f32 %v2571, %v3428
      %v3430 = vpop.f32.mrb[0].mxu0
      %v3431 = vadd.f32 %v2575, %v3430
      %3432 = vmatprep.mubr.bf16.mxu0 %v2455
      %3433 = vmatmul.mubr.bf16.gmra.mrb[0].mxu0 %v2454
      %v3434 = vpop.f32.mrb[0].mxu0
      %v3435 = vadd.f32 %v2571, %v3434
      %v3436 = vpop.f32.mrb[0].mxu0
      %v3437 = vadd.f32 %v2575, %v3436
      %v3438 = vpop.f32.mrb[0].mxu0
      %v3439 = vadd.f32 %v2571, %v3438
      %v3440 = vpop.f32.mrb[0].mxu0
      %v3441 = vadd.f32 %v2575, %v3440
      %3442 = vdwg.mxu0
      %3443 = vmatprep.subr.bf16.mxu0 %v2947
      %3444 = vmatpush1.bf16.msra.mxu0 %v2946
      %3445 = vmatprep.subr.bf16.mxu0 %v2951
      %3446 = vmatpush1.bf16.msra.mxu0 %v2950
      %3447 = vmatprep.subr.bf16.mxu0 %v2955
      %3448 = vmatpush1.bf16.msra.mxu0 %v2954
      %3449 = vmatprep.subr.bf16.mxu0 %v2959
      %3450 = vmatpush1.bf16.msra.mxu0 %v2958
      %3451 = vmatprep.subr.bf16.mxu0 %v2963
      %3452 = vmatpush1.bf16.msra.mxu0 %v2962
      %3453 = vmatprep.subr.bf16.mxu0 %v2967
      %3454 = vmatpush1.bf16.msra.mxu0 %v2966
      %3455 = vmatprep.subr.bf16.mxu0 %v2971
      %3456 = vmatpush1.bf16.msra.mxu0 %v2970
      %3457 = vmatprep.subr.bf16.mxu0 %v2975
      %3458 = vmatpush1.bf16.msra.mxu0 %v2974
      %3459 = vmatprep.subr.bf16.mxu0 %v2979
      %3460 = vmatpush1.bf16.msra.mxu0 %v2978
      %3461 = vmatprep.subr.bf16.mxu0 0
      %3462 = vmatpush1.bf16.msra.mxu0 0
      %3463 = vmatprep.subr.bf16.mxu0 0
      %3464 = vmatpush1.bf16.msra.mxu0 0
      %3465 = vmatprep.subr.bf16.mxu0 0
      %3466 = vmatpush1.bf16.msra.mxu0 0
      %3467 = vmatprep.subr.bf16.mxu0 0
      %3468 = vmatpush1.bf16.msra.mxu0 0
      %3469 = vmatprep.subr.bf16.mxu0 0
      %3470 = vmatpush1.bf16.msra.mxu0 0
      %3471 = vmatprep.subr.bf16.mxu0 0
      %3472 = vmatpush1.bf16.msra.mxu0 0
      %3473 = vmatprep.subr.bf16.mxu0 0
      %3474 = vmatpush1.bf16.msra.mxu0 0
      %3475 = vmatprep.mubr.bf16.mxu0 %v3081
      %3476 = vmatmul.mubr.bf16.gmra.mrb[0].mxu0 %v2428
      %v3477 = vpop.f32.mrb[0].mxu0
      %v3478 = vadd.f32 %v3365, %v3477
      %v3479 = vpop.f32.mrb[0].mxu0
      %v3480 = vadd.f32 %v3367, %v3479
      %v3481 = vpop.f32.mrb[0].mxu0
      %v3482 = vadd.f32 %v3369, %v3481
      %v3483 = vpop.f32.mrb[0].mxu0
      %v3484 = vadd.f32 %v3371, %v3483
      %3485 = vmatprep.mubr.bf16.mxu0 %v3084
      %3486 = vmatmul.mubr.bf16.gmra.mrb[0].mxu0 %v2432
      %v3487 = vpop.f32.mrb[0].mxu0
      %v3488 = vadd.f32 %v3375, %v3487
      %v3489 = vpop.f32.mrb[0].mxu0
      %v3490 = vadd.f32 %v3377, %v3489
      %v3491 = vpop.f32.mrb[0].mxu0
      %v3492 = vadd.f32 %v3379, %v3491
      %v3493 = vpop.f32.mrb[0].mxu0
      %v3494 = vadd.f32 %v3381, %v3493
      %3495 = vmatprep.mubr.bf16.mxu0 %v3087
      %3496 = vmatmul.mubr.bf16.gmra.mrb[0].mxu0 %v2436
      %v3497 = vpop.f32.mrb[0].mxu0
      %v3498 = vadd.f32 %v3385, %v3497
      %v3499 = vpop.f32.mrb[0].mxu0
      %v3500 = vadd.f32 %v3387, %v3499
      %v3501 = vpop.f32.mrb[0].mxu0
      %v3502 = vadd.f32 %v3389, %v3501
      %v3503 = vpop.f32.mrb[0].mxu0
      %v3504 = vadd.f32 %v3391, %v3503
      %3505 = vmatprep.mubr.bf16.mxu0 %v3090
      %3506 = vmatmul.mubr.bf16.gmra.mrb[0].mxu0 %v2440
      %v3507 = vpop.f32.mrb[0].mxu0
      %v3508 = vadd.f32 %v3395, %v3507
      %v3509 = vpop.f32.mrb[0].mxu0
      %v3510 = vadd.f32 %v3397, %v3509
      %v3511 = vpop.f32.mrb[0].mxu0
      %v3512 = vadd.f32 %v3399, %v3511
      %v3513 = vpop.f32.mrb[0].mxu0
      %v3514 = vadd.f32 %v3401, %v3513
      %3515 = vmatprep.mubr.bf16.mxu0 %v3093
      %3516 = vmatmul.mubr.bf16.gmra.mrb[0].mxu0 %v2444
      %v3517 = vpop.f32.mrb[0].mxu0
      %v3518 = vadd.f32 %v3405, %v3517
      %v3519 = vpop.f32.mrb[0].mxu0
      %v3520 = vadd.f32 %v3407, %v3519
      %v3521 = vpop.f32.mrb[0].mxu0
      %v3522 = vadd.f32 %v3409, %v3521
      %v3523 = vpop.f32.mrb[0].mxu0
      %v3524 = vadd.f32 %v3411, %v3523
      %3525 = vmatprep.mubr.bf16.mxu0 %v3096
      %3526 = vmatmul.mubr.bf16.gmra.mrb[0].mxu0 %v2448
      %v3527 = vpop.f32.mrb[0].mxu0
      %v3528 = vadd.f32 %v3415, %v3527
      %v3529 = vpop.f32.mrb[0].mxu0
      %v3530 = vadd.f32 %v3417, %v3529
      %v3531 = vpop.f32.mrb[0].mxu0
      %v3532 = vadd.f32 %v3419, %v3531
      %v3533 = vpop.f32.mrb[0].mxu0
      %v3534 = vadd.f32 %v3421, %v3533
      %3535 = vmatprep.mubr.bf16.mxu0 %v3099
      %3536 = vmatmul.mubr.bf16.gmra.mrb[0].mxu0 %v2452
      %v3537 = vpop.f32.mrb[0].mxu0
      %v3538 = vadd.f32 %v3425, %v3537
      %v3539 = vpop.f32.mrb[0].mxu0
      %v3540 = vadd.f32 %v3427, %v3539
      %v3541 = vpop.f32.mrb[0].mxu0
      %v3542 = vadd.f32 %v3429, %v3541
      %v3543 = vpop.f32.mrb[0].mxu0
      %v3544 = vadd.f32 %v3431, %v3543
      %3545 = vmatprep.mubr.bf16.mxu0 %v3102
      %3546 = vmatmul.mubr.bf16.gmra.mrb[0].mxu0 %v2456
      %v3547 = vpop.f32.mrb[0].mxu0
      %v3548 = vadd.f32 %v3435, %v3547
      %v3549 = vpop.f32.mrb[0].mxu0
      %v3550 = vadd.f32 %v3437, %v3549
      %v3551 = vpop.f32.mrb[0].mxu0
      %v3552 = vadd.f32 %v3439, %v3551
      %v3553 = vpop.f32.mrb[0].mxu0
      %v3554 = vadd.f32 %v3441, %v3553
      %3555 = vdwg.mxu0
      %v3556 = vmax.f32 %v3252, 0.0
      %v3557 = vmax.f32 %v3254, 0.0
      %v3558 = vmax.f32 %v3478, 0.0
      %v3559 = vmax.f32 %v3480, 0.0
      %v3560 = vmax.f32 %v3256, 0.0
      %v3561 = vmax.f32 %v3258, 0.0
      %v3562 = vmax.f32 %v3482, 0.0
      %v3563 = vmax.f32 %v3484, 0.0
      %v3564 = vmax.f32 %v3262, 0.0
      %v3565 = vmax.f32 %v3264, 0.0
      %v3566 = vmax.f32 %v3488, 0.0
      %v3567 = vmax.f32 %v3490, 0.0
      %v3568 = vmax.f32 %v3266, 0.0
      %v3569 = vmax.f32 %v3268, 0.0
      %v3570 = vmax.f32 %v3492, 0.0
      %v3571 = vmax.f32 %v3494, 0.0
      %v3572 = vmax.f32 %v3272, 0.0
      %v3573 = vmax.f32 %v3274, 0.0
      %v3574 = vmax.f32 %v3498, 0.0
      %v3575 = vmax.f32 %v3500, 0.0
      %v3576 = vmax.f32 %v3276, 0.0
      %v3577 = vmax.f32 %v3278, 0.0
      %v3578 = vmax.f32 %v3502, 0.0
      %v3579 = vmax.f32 %v3504, 0.0
      %v3580 = vmax.f32 %v3282, 0.0
      %v3581 = vmax.f32 %v3284, 0.0
      %v3582 = vmax.f32 %v3508, 0.0
      %v3583 = vmax.f32 %v3510, 0.0
      %v3584 = vmax.f32 %v3286, 0.0
      %v3585 = vmax.f32 %v3288, 0.0
      %v3586 = vmax.f32 %v3512, 0.0
      %v3587 = vmax.f32 %v3514, 0.0
      %v3588 = vmax.f32 %v3292, 0.0
      %v3589 = vmax.f32 %v3294, 0.0
      %v3590 = vmax.f32 %v3518, 0.0
      %v3591 = vmax.f32 %v3520, 0.0
      %v3592 = vmax.f32 %v3296, 0.0
      %v3593 = vmax.f32 %v3298, 0.0
      %v3594 = vmax.f32 %v3522, 0.0
      %v3595 = vmax.f32 %v3524, 0.0
      %v3596 = vmax.f32 %v3302, 0.0
      %v3597 = vmax.f32 %v3304, 0.0
      %v3598 = vmax.f32 %v3528, 0.0
      %v3599 = vmax.f32 %v3530, 0.0
      %v3600 = vmax.f32 %v3306, 0.0
      %v3601 = vmax.f32 %v3308, 0.0
      %v3602 = vmax.f32 %v3532, 0.0
      %v3603 = vmax.f32 %v3534, 0.0
      %v3604 = vmax.f32 %v3312, 0.0
      %v3605 = vmax.f32 %v3314, 0.0
      %v3606 = vmax.f32 %v3538, 0.0
      %v3607 = vmax.f32 %v3540, 0.0
      %v3608 = vmax.f32 %v3316, 0.0
      %v3609 = vmax.f32 %v3318, 0.0
      %v3610 = vmax.f32 %v3542, 0.0
      %v3611 = vmax.f32 %v3544, 0.0
      %v3612 = vmax.f32 %v3322, 0.0
      %v3613 = vmax.f32 %v3324, 0.0
      %v3614 = vmax.f32 %v3548, 0.0
      %v3615 = vmax.f32 %v3550, 0.0
      %v3616 = vmax.f32 %v3326, 0.0
      %v3617 = vmax.f32 %v3328, 0.0
      %v3618 = vmax.f32 %v3552, 0.0
      %v3619 = vmax.f32 %v3554, 0.0
      %v3620 = vpack.c.bf16 %v3560, %v3556
      %v3621 = vpack.c.bf16 %v3561, %v3557
      %v3622 = vpack.c.bf16 %v3562, %v3558
      %v3623 = vpack.c.bf16 %v3563, %v3559
      %v3624 = vpack.c.bf16 %v3568, %v3564
      %v3625 = vpack.c.bf16 %v3569, %v3565
      %v3626 = vpack.c.bf16 %v3570, %v3566
      %v3627 = vpack.c.bf16 %v3571, %v3567
      %v3628 = vpack.c.bf16 %v3576, %v3572
      %v3629 = vpack.c.bf16 %v3577, %v3573
      %v3630 = vpack.c.bf16 %v3578, %v3574
      %v3631 = vpack.c.bf16 %v3579, %v3575
      %v3632 = vpack.c.bf16 %v3584, %v3580
      %v3633 = vpack.c.bf16 %v3585, %v3581
      %v3634 = vpack.c.bf16 %v3586, %v3582
      %v3635 = vpack.c.bf16 %v3587, %v3583
      %v3636 = vpack.c.bf16 %v3592, %v3588
      %v3637 = vpack.c.bf16 %v3593, %v3589
      %v3638 = vpack.c.bf16 %v3594, %v3590
      %v3639 = vpack.c.bf16 %v3595, %v3591
      %v3640 = vpack.c.bf16 %v3600, %v3596
      %v3641 = vpack.c.bf16 %v3601, %v3597
      %v3642 = vpack.c.bf16 %v3602, %v3598
      %v3643 = vpack.c.bf16 %v3603, %v3599
      %v3644 = vpack.c.bf16 %v3608, %v3604
      %v3645 = vpack.c.bf16 %v3609, %v3605
      %v3646 = vpack.c.bf16 %v3610, %v3606
      %v3647 = vpack.c.bf16 %v3611, %v3607
      %v3648 = vpack.c.bf16 %v3616, %v3612
      %v3649 = vpack.c.bf16 %v3617, %v3613
      %v3650 = vpack.c.bf16 %v3618, %v3614
      %v3651 = vpack.c.bf16 %v3619, %v3615
      %v3653 = vsel %vm1117, %v3623, 0
      %v3656 = vsel %vm1117, %v3627, 0
      %v3659 = vsel %vm1117, %v3631, 0
      %v3662 = vsel %vm1117, %v3635, 0
      %v3665 = vsel %vm1117, %v3639, 0
      %v3668 = vsel %vm1117, %v3643, 0
      %v3671 = vsel %vm1117, %v3647, 0
      %v3674 = vsel %vm1117, %v3651, 0
      %3676 = vmatprep.subr.bf16.mxu0 0
      %3677 = vmatpush1.bf16.msra.mxu0 %v1067
      %3678 = vmatprep.subr.bf16.mxu0 0
      %3679 = vmatpush1.bf16.msra.mxu0 %v1068
      %3680 = vmatprep.subr.bf16.mxu0 0
      %3681 = vmatpush1.bf16.msra.mxu0 %v1069
      %3682 = vmatprep.subr.bf16.mxu0 0
      %3683 = vmatpush1.bf16.msra.mxu0 %v1070
      %3684 = vmatprep.subr.bf16.mxu0 0
      %3685 = vmatpush1.bf16.msra.mxu0 %v1071
      %3686 = vmatprep.subr.bf16.mxu0 0
      %3687 = vmatpush1.bf16.msra.mxu0 %v1072
      %3688 = vmatprep.subr.bf16.mxu0 0
      %3689 = vmatpush1.bf16.msra.mxu0 %v1073
      %3690 = vmatprep.subr.bf16.mxu0 0
      %3691 = vmatpush1.bf16.msra.mxu0 %v1074
      %3692 = vmatprep.subr.bf16.mxu0 0
      %3693 = vmatpush1.bf16.msra.mxu0 %v1075
      %3694 = vmatprep.subr.bf16.mxu0 0
      %3695 = vmatpush1.bf16.msra.mxu0 %v1076
      %3696 = vmatprep.subr.bf16.mxu0 0
      %3697 = vmatpush1.bf16.msra.mxu0 %v1077
      %3698 = vmatprep.subr.bf16.mxu0 0
      %3699 = vmatpush1.bf16.msra.mxu0 %v1078
      %3700 = vmatprep.subr.bf16.mxu0 0
      %3701 = vmatpush1.bf16.msra.mxu0 %v1079
      %3702 = vmatprep.subr.bf16.mxu0 0
      %3703 = vmatpush1.bf16.msra.mxu0 %v1080
      %3704 = vmatprep.subr.bf16.mxu0 0
      %3705 = vmatpush1.bf16.msra.mxu0 %v1081
      %3706 = vmatprep.subr.bf16.mxu0 0
      %3707 = vmatpush1.bf16.msra.mxu0 %v1082
      %3708 = vmatprep.mubr.bf16.mxu0 %v3621
      %3709 = vmatmul.mubr.bf16.gmra.mrb[0].mxu0 %v3620
      %v3710 = vpop.f32.mrb[0].mxu0
      %v3711 = vadd.f32 0.0, %v3710
      %v3712 = vpop.f32.mrb[0].mxu0
      %v3713 = vpop.f32.mrb[0].mxu0
      %v3714 = vadd.f32 0.0, %v3713
      %v3715 = vpop.f32.mrb[0].mxu0
      %3716 = vmatprep.mubr.bf16.mxu0 %v3625
      %3717 = vmatmul.mubr.bf16.gmra.mrb[0].mxu0 %v3624
      %v3718 = vpop.f32.mrb[0].mxu0
      %v3719 = vadd.f32 0.0, %v3718
      %v3720 = vpop.f32.mrb[0].mxu0
      %v3721 = vpop.f32.mrb[0].mxu0
      %v3722 = vadd.f32 0.0, %v3721
      %v3723 = vpop.f32.mrb[0].mxu0
      %3724 = vmatprep.mubr.bf16.mxu0 %v3629
      %3725 = vmatmul.mubr.bf16.gmra.mrb[0].mxu0 %v3628
      %v3726 = vpop.f32.mrb[0].mxu0
      %v3727 = vadd.f32 0.0, %v3726
      %v3728 = vpop.f32.mrb[0].mxu0
      %v3729 = vpop.f32.mrb[0].mxu0
      %v3730 = vadd.f32 0.0, %v3729
      %v3731 = vpop.f32.mrb[0].mxu0
      %3732 = vmatprep.mubr.bf16.mxu0 %v3633
      %3733 = vmatmul.mubr.bf16.gmra.mrb[0].mxu0 %v3632
      %v3734 = vpop.f32.mrb[0].mxu0
      %v3735 = vadd.f32 0.0, %v3734
      %v3736 = vpop.f32.mrb[0].mxu0
      %v3737 = vpop.f32.mrb[0].mxu0
      %v3738 = vadd.f32 0.0, %v3737
      %v3739 = vpop.f32.mrb[0].mxu0
      %3740 = vmatprep.mubr.bf16.mxu0 %v3637
      %3741 = vmatmul.mubr.bf16.gmra.mrb[0].mxu0 %v3636
      %v3742 = vpop.f32.mrb[0].mxu0
      %v3743 = vadd.f32 0.0, %v3742
      %v3744 = vpop.f32.mrb[0].mxu0
      %v3745 = vpop.f32.mrb[0].mxu0
      %v3746 = vadd.f32 0.0, %v3745
      %v3747 = vpop.f32.mrb[0].mxu0
      %3748 = vmatprep.mubr.bf16.mxu0 %v3641
      %3749 = vmatmul.mubr.bf16.gmra.mrb[0].mxu0 %v3640
      %v3750 = vpop.f32.mrb[0].mxu0
      %v3751 = vadd.f32 0.0, %v3750
      %v3752 = vpop.f32.mrb[0].mxu0
      %v3753 = vpop.f32.mrb[0].mxu0
      %v3754 = vadd.f32 0.0, %v3753
      %v3755 = vpop.f32.mrb[0].mxu0
      %3756 = vmatprep.mubr.bf16.mxu0 %v3645
      %3757 = vmatmul.mubr.bf16.gmra.mrb[0].mxu0 %v3644
      %v3758 = vpop.f32.mrb[0].mxu0
      %v3759 = vadd.f32 0.0, %v3758
      %v3760 = vpop.f32.mrb[0].mxu0
      %v3761 = vpop.f32.mrb[0].mxu0
      %v3762 = vadd.f32 0.0, %v3761
      %v3763 = vpop.f32.mrb[0].mxu0
      %3764 = vmatprep.mubr.bf16.mxu0 %v3649
      %3765 = vmatmul.mubr.bf16.gmra.mrb[0].mxu0 %v3648
      %v3766 = vpop.f32.mrb[0].mxu0
      %v3767 = vadd.f32 0.0, %v3766
      %v3768 = vpop.f32.mrb[0].mxu0
      %v3769 = vpop.f32.mrb[0].mxu0
      %v3770 = vadd.f32 0.0, %v3769
      %v3771 = vpop.f32.mrb[0].mxu0
      %3772 = vdwg.mxu0
      %3773 = vmatprep.subr.bf16.mxu0 0
      %3774 = vmatpush1.bf16.msra.mxu0 %v1083
      %3775 = vmatprep.subr.bf16.mxu0 0
      %3776 = vmatpush1.bf16.msra.mxu0 %v1084
      %3777 = vmatprep.subr.bf16.mxu0 0
      %3778 = vmatpush1.bf16.msra.mxu0 %v1085
      %3779 = vmatprep.subr.bf16.mxu0 0
      %3780 = vmatpush1.bf16.msra.mxu0 %v1086
      %3781 = vmatprep.subr.bf16.mxu0 0
      %3782 = vmatpush1.bf16.msra.mxu0 %v1087
      %3783 = vmatprep.subr.bf16.mxu0 0
      %3784 = vmatpush1.bf16.msra.mxu0 %v1088
      %3785 = vmatprep.subr.bf16.mxu0 0
      %3786 = vmatpush1.bf16.msra.mxu0 %v1089
      %3787 = vmatprep.subr.bf16.mxu0 0
      %3788 = vmatpush1.bf16.msra.mxu0 %v1090
      %3789 = vmatprep.subr.bf16.mxu0 0
      %3790 = vmatpush1.bf16.msra.mxu0 %v1091
      %3791 = vmatprep.subr.bf16.mxu0 0
      %3792 = vmatpush1.bf16.msra.mxu0 0
      %3793 = vmatprep.subr.bf16.mxu0 0
      %3794 = vmatpush1.bf16.msra.mxu0 0
      %3795 = vmatprep.subr.bf16.mxu0 0
      %3796 = vmatpush1.bf16.msra.mxu0 0
      %3797 = vmatprep.subr.bf16.mxu0 0
      %3798 = vmatpush1.bf16.msra.mxu0 0
      %3799 = vmatprep.subr.bf16.mxu0 0
      %3800 = vmatpush1.bf16.msra.mxu0 0
      %3801 = vmatprep.subr.bf16.mxu0 0
      %3802 = vmatpush1.bf16.msra.mxu0 0
      %3803 = vmatprep.subr.bf16.mxu0 0
      %3804 = vmatpush1.bf16.msra.mxu0 0
      %3805 = vmatprep.mubr.bf16.mxu0 %v3653
      %3806 = vmatmul.mubr.bf16.gmra.mrb[0].mxu0 %v3622
      %v3807 = vpop.f32.mrb[0].mxu0
      %v3808 = vadd.f32 %v3711, %v3807
      %v3809 = vpop.f32.mrb[0].mxu0
      %v3810 = vpop.f32.mrb[0].mxu0
      %v3811 = vadd.f32 %v3714, %v3810
      %v3812 = vpop.f32.mrb[0].mxu0
      %3813 = vmatprep.mubr.bf16.mxu0 %v3656
      %3814 = vmatmul.mubr.bf16.gmra.mrb[0].mxu0 %v3626
      %v3815 = vpop.f32.mrb[0].mxu0
      %v3816 = vadd.f32 %v3719, %v3815
      %v3817 = vpop.f32.mrb[0].mxu0
      %v3818 = vpop.f32.mrb[0].mxu0
      %v3819 = vadd.f32 %v3722, %v3818
      %v3820 = vpop.f32.mrb[0].mxu0
      %3821 = vmatprep.mubr.bf16.mxu0 %v3659
      %3822 = vmatmul.mubr.bf16.gmra.mrb[0].mxu0 %v3630
      %v3823 = vpop.f32.mrb[0].mxu0
      %v3824 = vadd.f32 %v3727, %v3823
      %v3825 = vpop.f32.mrb[0].mxu0
      %v3826 = vpop.f32.mrb[0].mxu0
      %v3827 = vadd.f32 %v3730, %v3826
      %v3828 = vpop.f32.mrb[0].mxu0
      %3829 = vmatprep.mubr.bf16.mxu0 %v3662
      %3830 = vmatmul.mubr.bf16.gmra.mrb[0].mxu0 %v3634
      %v3831 = vpop.f32.mrb[0].mxu0
      %v3832 = vadd.f32 %v3735, %v3831
      %v3833 = vpop.f32.mrb[0].mxu0
      %v3834 = vpop.f32.mrb[0].mxu0
      %v3835 = vadd.f32 %v3738, %v3834
      %v3836 = vpop.f32.mrb[0].mxu0
      %3837 = vmatprep.mubr.bf16.mxu0 %v3665
      %3838 = vmatmul.mubr.bf16.gmra.mrb[0].mxu0 %v3638
      %v3839 = vpop.f32.mrb[0].mxu0
      %v3840 = vadd.f32 %v3743, %v3839
      %v3841 = vpop.f32.mrb[0].mxu0
      %v3842 = vpop.f32.mrb[0].mxu0
      %v3843 = vadd.f32 %v3746, %v3842
      %v3844 = vpop.f32.mrb[0].mxu0
      %3845 = vmatprep.mubr.bf16.mxu0 %v3668
      %3846 = vmatmul.mubr.bf16.gmra.mrb[0].mxu0 %v3642
      %v3847 = vpop.f32.mrb[0].mxu0
      %v3848 = vadd.f32 %v3751, %v3847
      %v3849 = vpop.f32.mrb[0].mxu0
      %v3850 = vpop.f32.mrb[0].mxu0
      %v3851 = vadd.f32 %v3754, %v3850
      %v3852 = vpop.f32.mrb[0].mxu0
      %3853 = vmatprep.mubr.bf16.mxu0 %v3671
      %3854 = vmatmul.mubr.bf16.gmra.mrb[0].mxu0 %v3646
      %v3855 = vpop.f32.mrb[0].mxu0
      %v3856 = vadd.f32 %v3759, %v3855
      %v3857 = vpop.f32.mrb[0].mxu0
      %v3858 = vpop.f32.mrb[0].mxu0
      %v3859 = vadd.f32 %v3762, %v3858
      %v3860 = vpop.f32.mrb[0].mxu0
      %3861 = vmatprep.mubr.bf16.mxu0 %v3674
      %3862 = vmatmul.mubr.bf16.gmra.mrb[0].mxu0 %v3650
      %v3863 = vpop.f32.mrb[0].mxu0
      %v3864 = vadd.f32 %v3767, %v3863
      %v3865 = vpop.f32.mrb[0].mxu0
      %v3866 = vpop.f32.mrb[0].mxu0
      %v3867 = vadd.f32 %v3770, %v3866
      %v3868 = vpop.f32.mrb[0].mxu0
      %3869 = vdwg.mxu0
      %v3870 = vmul.f32 %v3556, %v3556
      %v3871 = vmul.f32 %v3557, %v3557
      %v3872 = vmul.f32 %v3558, %v3558
      %v3873 = vmul.f32 %v3559, %v3559
      %v3874 = vmul.f32 %v3560, %v3560
      %v3875 = vmul.f32 %v3561, %v3561
      %v3876 = vmul.f32 %v3562, %v3562
      %v3877 = vmul.f32 %v3563, %v3563
      %v3878 = vmul.f32 %v3564, %v3564
      %v3879 = vmul.f32 %v3565, %v3565
      %v3880 = vmul.f32 %v3566, %v3566
      %v3881 = vmul.f32 %v3567, %v3567
      %v3882 = vmul.f32 %v3568, %v3568
      %v3883 = vmul.f32 %v3569, %v3569
      %v3884 = vmul.f32 %v3570, %v3570
      %v3885 = vmul.f32 %v3571, %v3571
      %v3886 = vmul.f32 %v3572, %v3572
      %v3887 = vmul.f32 %v3573, %v3573
      %v3888 = vmul.f32 %v3574, %v3574
      %v3889 = vmul.f32 %v3575, %v3575
      %v3890 = vmul.f32 %v3576, %v3576
      %v3891 = vmul.f32 %v3577, %v3577
      %v3892 = vmul.f32 %v3578, %v3578
      %v3893 = vmul.f32 %v3579, %v3579
      %v3894 = vmul.f32 %v3580, %v3580
      %v3895 = vmul.f32 %v3581, %v3581
      %v3896 = vmul.f32 %v3582, %v3582
      %v3897 = vmul.f32 %v3583, %v3583
      %v3898 = vmul.f32 %v3584, %v3584
      %v3899 = vmul.f32 %v3585, %v3585
      %v3900 = vmul.f32 %v3586, %v3586
      %v3901 = vmul.f32 %v3587, %v3587
      %v3902 = vmul.f32 %v3588, %v3588
      %v3903 = vmul.f32 %v3589, %v3589
      %v3904 = vmul.f32 %v3590, %v3590
      %v3905 = vmul.f32 %v3591, %v3591
      %v3906 = vmul.f32 %v3592, %v3592
      %v3907 = vmul.f32 %v3593, %v3593
      %v3908 = vmul.f32 %v3594, %v3594
      %v3909 = vmul.f32 %v3595, %v3595
      %v3910 = vmul.f32 %v3596, %v3596
      %v3911 = vmul.f32 %v3597, %v3597
      %v3912 = vmul.f32 %v3598, %v3598
      %v3913 = vmul.f32 %v3599, %v3599
      %v3914 = vmul.f32 %v3600, %v3600
      %v3915 = vmul.f32 %v3601, %v3601
      %v3916 = vmul.f32 %v3602, %v3602
      %v3917 = vmul.f32 %v3603, %v3603
      %v3918 = vmul.f32 %v3604, %v3604
      %v3919 = vmul.f32 %v3605, %v3605
      %v3920 = vmul.f32 %v3606, %v3606
      %v3921 = vmul.f32 %v3607, %v3607
      %v3922 = vmul.f32 %v3608, %v3608
      %v3923 = vmul.f32 %v3609, %v3609
      %v3924 = vmul.f32 %v3610, %v3610
      %v3925 = vmul.f32 %v3611, %v3611
      %v3926 = vmul.f32 %v3612, %v3612
      %v3927 = vmul.f32 %v3613, %v3613
      %v3928 = vmul.f32 %v3614, %v3614
      %v3929 = vmul.f32 %v3615, %v3615
      %v3930 = vmul.f32 %v3616, %v3616
      %v3931 = vmul.f32 %v3617, %v3617
      %v3932 = vmul.f32 %v3618, %v3618
      %v3933 = vmul.f32 %v3619, %v3619
      %v3934 = vpack.c.bf16 %v3874, %v3870
      %v3935 = vpack.c.bf16 %v3875, %v3871
      %v3936 = vpack.c.bf16 %v3876, %v3872
      %v3937 = vpack.c.bf16 %v3877, %v3873
      %v3938 = vpack.c.bf16 %v3882, %v3878
      %v3939 = vpack.c.bf16 %v3883, %v3879
      %v3940 = vpack.c.bf16 %v3884, %v3880
      %v3941 = vpack.c.bf16 %v3885, %v3881
      %v3942 = vpack.c.bf16 %v3890, %v3886
      %v3943 = vpack.c.bf16 %v3891, %v3887
      %v3944 = vpack.c.bf16 %v3892, %v3888
      %v3945 = vpack.c.bf16 %v3893, %v3889
      %v3946 = vpack.c.bf16 %v3898, %v3894
      %v3947 = vpack.c.bf16 %v3899, %v3895
      %v3948 = vpack.c.bf16 %v3900, %v3896
      %v3949 = vpack.c.bf16 %v3901, %v3897
      %v3950 = vpack.c.bf16 %v3906, %v3902
      %v3951 = vpack.c.bf16 %v3907, %v3903
      %v3952 = vpack.c.bf16 %v3908, %v3904
      %v3953 = vpack.c.bf16 %v3909, %v3905
      %v3954 = vpack.c.bf16 %v3914, %v3910
      %v3955 = vpack.c.bf16 %v3915, %v3911
      %v3956 = vpack.c.bf16 %v3916, %v3912
      %v3957 = vpack.c.bf16 %v3917, %v3913
      %v3958 = vpack.c.bf16 %v3922, %v3918
      %v3959 = vpack.c.bf16 %v3923, %v3919
      %v3960 = vpack.c.bf16 %v3924, %v3920
      %v3961 = vpack.c.bf16 %v3925, %v3921
      %v3962 = vpack.c.bf16 %v3930, %v3926
      %v3963 = vpack.c.bf16 %v3931, %v3927
      %v3964 = vpack.c.bf16 %v3932, %v3928
      %v3965 = vpack.c.bf16 %v3933, %v3929
      %v3967 = vsel %vm1117, %v3937, 0
      %v3970 = vsel %vm1117, %v3941, 0
      %v3973 = vsel %vm1117, %v3945, 0
      %v3976 = vsel %vm1117, %v3949, 0
      %v3979 = vsel %vm1117, %v3953, 0
      %v3982 = vsel %vm1117, %v3957, 0
      %v3985 = vsel %vm1117, %v3961, 0
      %v3988 = vsel %vm1117, %v3965, 0
      %3990 = vmatprep.subr.bf16.mxu0 0
      %3991 = vmatpush1.bf16.msra.mxu0 %v1067
      %3992 = vmatprep.subr.bf16.mxu0 0
      %3993 = vmatpush1.bf16.msra.mxu0 %v1068
      %3994 = vmatprep.subr.bf16.mxu0 0
      %3995 = vmatpush1.bf16.msra.mxu0 %v1069
      %3996 = vmatprep.subr.bf16.mxu0 0
      %3997 = vmatpush1.bf16.msra.mxu0 %v1070
      %3998 = vmatprep.subr.bf16.mxu0 0
      %3999 = vmatpush1.bf16.msra.mxu0 %v1071
      %4000 = vmatprep.subr.bf16.mxu0 0
      %4001 = vmatpush1.bf16.msra.mxu0 %v1072
      %4002 = vmatprep.subr.bf16.mxu0 0
      %4003 = vmatpush1.bf16.msra.mxu0 %v1073
      %4004 = vmatprep.subr.bf16.mxu0 0
      %4005 = vmatpush1.bf16.msra.mxu0 %v1074
      %4006 = vmatprep.subr.bf16.mxu0 0
      %4007 = vmatpush1.bf16.msra.mxu0 %v1075
      %4008 = vmatprep.subr.bf16.mxu0 0
      %4009 = vmatpush1.bf16.msra.mxu0 %v1076
      %4010 = vmatprep.subr.bf16.mxu0 0
      %4011 = vmatpush1.bf16.msra.mxu0 %v1077
      %4012 = vmatprep.subr.bf16.mxu0 0
      %4013 = vmatpush1.bf16.msra.mxu0 %v1078
      %4014 = vmatprep.subr.bf16.mxu0 0
      %4015 = vmatpush1.bf16.msra.mxu0 %v1079
      %4016 = vmatprep.subr.bf16.mxu0 0
      %4017 = vmatpush1.bf16.msra.mxu0 %v1080
      %4018 = vmatprep.subr.bf16.mxu0 0
      %4019 = vmatpush1.bf16.msra.mxu0 %v1081
      %4020 = vmatprep.subr.bf16.mxu0 0
      %4021 = vmatpush1.bf16.msra.mxu0 %v1082
      %4022 = vmatprep.mubr.bf16.mxu0 %v3935
      %4023 = vmatmul.mubr.bf16.gmra.mrb[0].mxu0 %v3934
      %v4024 = vpop.f32.mrb[0].mxu0
      %v4025 = vadd.f32 0.0, %v4024
      %v4026 = vpop.f32.mrb[0].mxu0
      %v4027 = vpop.f32.mrb[0].mxu0
      %v4028 = vadd.f32 0.0, %v4027
      %v4029 = vpop.f32.mrb[0].mxu0
      %4030 = vmatprep.mubr.bf16.mxu0 %v3939
      %4031 = vmatmul.mubr.bf16.gmra.mrb[0].mxu0 %v3938
      %v4032 = vpop.f32.mrb[0].mxu0
      %v4033 = vadd.f32 0.0, %v4032
      %v4034 = vpop.f32.mrb[0].mxu0
      %v4035 = vpop.f32.mrb[0].mxu0
      %v4036 = vadd.f32 0.0, %v4035
      %v4037 = vpop.f32.mrb[0].mxu0
      %4038 = vmatprep.mubr.bf16.mxu0 %v3943
      %4039 = vmatmul.mubr.bf16.gmra.mrb[0].mxu0 %v3942
      %v4040 = vpop.f32.mrb[0].mxu0
      %v4041 = vadd.f32 0.0, %v4040
      %v4042 = vpop.f32.mrb[0].mxu0
      %v4043 = vpop.f32.mrb[0].mxu0
      %v4044 = vadd.f32 0.0, %v4043
      %v4045 = vpop.f32.mrb[0].mxu0
      %4046 = vmatprep.mubr.bf16.mxu0 %v3947
      %4047 = vmatmul.mubr.bf16.gmra.mrb[0].mxu0 %v3946
      %v4048 = vpop.f32.mrb[0].mxu0
      %v4049 = vadd.f32 0.0, %v4048
      %v4050 = vpop.f32.mrb[0].mxu0
      %v4051 = vpop.f32.mrb[0].mxu0
      %v4052 = vadd.f32 0.0, %v4051
      %v4053 = vpop.f32.mrb[0].mxu0
      %4054 = vmatprep.mubr.bf16.mxu0 %v3951
      %4055 = vmatmul.mubr.bf16.gmra.mrb[0].mxu0 %v3950
      %v4056 = vpop.f32.mrb[0].mxu0
      %v4057 = vadd.f32 0.0, %v4056
      %v4058 = vpop.f32.mrb[0].mxu0
      %v4059 = vpop.f32.mrb[0].mxu0
      %v4060 = vadd.f32 0.0, %v4059
      %v4061 = vpop.f32.mrb[0].mxu0
      %4062 = vmatprep.mubr.bf16.mxu0 %v3955
      %4063 = vmatmul.mubr.bf16.gmra.mrb[0].mxu0 %v3954
      %v4064 = vpop.f32.mrb[0].mxu0
      %v4065 = vadd.f32 0.0, %v4064
      %v4066 = vpop.f32.mrb[0].mxu0
      %v4067 = vpop.f32.mrb[0].mxu0
      %v4068 = vadd.f32 0.0, %v4067
      %v4069 = vpop.f32.mrb[0].mxu0
      %4070 = vmatprep.mubr.bf16.mxu0 %v3959
      %4071 = vmatmul.mubr.bf16.gmra.mrb[0].mxu0 %v3958
      %v4072 = vpop.f32.mrb[0].mxu0
      %v4073 = vadd.f32 0.0, %v4072
      %v4074 = vpop.f32.mrb[0].mxu0
      %v4075 = vpop.f32.mrb[0].mxu0
      %v4076 = vadd.f32 0.0, %v4075
      %v4077 = vpop.f32.mrb[0].mxu0
      %4078 = vmatprep.mubr.bf16.mxu0 %v3963
      %4079 = vmatmul.mubr.bf16.gmra.mrb[0].mxu0 %v3962
      %v4080 = vpop.f32.mrb[0].mxu0
      %v4081 = vadd.f32 0.0, %v4080
      %v4082 = vpop.f32.mrb[0].mxu0
      %v4083 = vpop.f32.mrb[0].mxu0
      %v4084 = vadd.f32 0.0, %v4083
      %v4085 = vpop.f32.mrb[0].mxu0
      %4086 = vdwg.mxu0
      %4087 = vmatprep.subr.bf16.mxu0 0
      %4088 = vmatpush1.bf16.msra.mxu0 %v1083
      %4089 = vmatprep.subr.bf16.mxu0 0
      %4090 = vmatpush1.bf16.msra.mxu0 %v1084
      %4091 = vmatprep.subr.bf16.mxu0 0
      %4092 = vmatpush1.bf16.msra.mxu0 %v1085
      %4093 = vmatprep.subr.bf16.mxu0 0
      %4094 = vmatpush1.bf16.msra.mxu0 %v1086
      %4095 = vmatprep.subr.bf16.mxu0 0
      %4096 = vmatpush1.bf16.msra.mxu0 %v1087
      %4097 = vmatprep.subr.bf16.mxu0 0
      %4098 = vmatpush1.bf16.msra.mxu0 %v1088
      %4099 = vmatprep.subr.bf16.mxu0 0
      %4100 = vmatpush1.bf16.msra.mxu0 %v1089
      %4101 = vmatprep.subr.bf16.mxu0 0
      %4102 = vmatpush1.bf16.msra.mxu0 %v1090
      %4103 = vmatprep.subr.bf16.mxu0 0
      %4104 = vmatpush1.bf16.msra.mxu0 %v1091
      %4105 = vmatprep.subr.bf16.mxu0 0
      %4106 = vmatpush1.bf16.msra.mxu0 0
      %4107 = vmatprep.subr.bf16.mxu0 0
      %4108 = vmatpush1.bf16.msra.mxu0 0
      %4109 = vmatprep.subr.bf16.mxu0 0
      %4110 = vmatpush1.bf16.msra.mxu0 0
      %4111 = vmatprep.subr.bf16.mxu0 0
      %4112 = vmatpush1.bf16.msra.mxu0 0
      %4113 = vmatprep.subr.bf16.mxu0 0
      %4114 = vmatpush1.bf16.msra.mxu0 0
      %4115 = vmatprep.subr.bf16.mxu0 0
      %4116 = vmatpush1.bf16.msra.mxu0 0
      %4117 = vmatprep.subr.bf16.mxu0 0
      %4118 = vmatpush1.bf16.msra.mxu0 0
      %4119 = vmatprep.mubr.bf16.mxu0 %v3967
      %4120 = vmatmul.mubr.bf16.gmra.mrb[0].mxu0 %v3936
      %v4121 = vpop.f32.mrb[0].mxu0
      %v4122 = vadd.f32 %v4025, %v4121
      %v4123 = vpop.f32.mrb[0].mxu0
      %v4124 = vpop.f32.mrb[0].mxu0
      %v4125 = vadd.f32 %v4028, %v4124
      %v4126 = vpop.f32.mrb[0].mxu0
      %4127 = vmatprep.mubr.bf16.mxu0 %v3970
      %4128 = vmatmul.mubr.bf16.gmra.mrb[0].mxu0 %v3940
      %v4129 = vpop.f32.mrb[0].mxu0
      %v4130 = vadd.f32 %v4033, %v4129
      %v4131 = vpop.f32.mrb[0].mxu0
      %v4132 = vpop.f32.mrb[0].mxu0
      %v4133 = vadd.f32 %v4036, %v4132
      %v4134 = vpop.f32.mrb[0].mxu0
      %4135 = vmatprep.mubr.bf16.mxu0 %v3973
      %4136 = vmatmul.mubr.bf16.gmra.mrb[0].mxu0 %v3944
      %v4137 = vpop.f32.mrb[0].mxu0
      %v4138 = vadd.f32 %v4041, %v4137
      %v4139 = vpop.f32.mrb[0].mxu0
      %v4140 = vpop.f32.mrb[0].mxu0
      %v4141 = vadd.f32 %v4044, %v4140
      %v4142 = vpop.f32.mrb[0].mxu0
      %4143 = vmatprep.mubr.bf16.mxu0 %v3976
      %4144 = vmatmul.mubr.bf16.gmra.mrb[0].mxu0 %v3948
      %v4145 = vpop.f32.mrb[0].mxu0
      %v4146 = vadd.f32 %v4049, %v4145
      %v4147 = vpop.f32.mrb[0].mxu0
      %v4148 = vpop.f32.mrb[0].mxu0
      %v4149 = vadd.f32 %v4052, %v4148
      %v4150 = vpop.f32.mrb[0].mxu0
      %4151 = vmatprep.mubr.bf16.mxu0 %v3979
      %4152 = vmatmul.mubr.bf16.gmra.mrb[0].mxu0 %v3952
      %v4153 = vpop.f32.mrb[0].mxu0
      %v4154 = vadd.f32 %v4057, %v4153
      %v4155 = vpop.f32.mrb[0].mxu0
      %v4156 = vpop.f32.mrb[0].mxu0
      %v4157 = vadd.f32 %v4060, %v4156
      %v4158 = vpop.f32.mrb[0].mxu0
      %4159 = vmatprep.mubr.bf16.mxu0 %v3982
      %4160 = vmatmul.mubr.bf16.gmra.mrb[0].mxu0 %v3956
      %v4161 = vpop.f32.mrb[0].mxu0
      %v4162 = vadd.f32 %v4065, %v4161
      %v4163 = vpop.f32.mrb[0].mxu0
      %v4164 = vpop.f32.mrb[0].mxu0
      %v4165 = vadd.f32 %v4068, %v4164
      %v4166 = vpop.f32.mrb[0].mxu0
      %4167 = vmatprep.mubr.bf16.mxu0 %v3985
      %4168 = vmatmul.mubr.bf16.gmra.mrb[0].mxu0 %v3960
      %v4169 = vpop.f32.mrb[0].mxu0
      %v4170 = vadd.f32 %v4073, %v4169
      %v4171 = vpop.f32.mrb[0].mxu0
      %v4172 = vpop.f32.mrb[0].mxu0
      %v4173 = vadd.f32 %v4076, %v4172
      %v4174 = vpop.f32.mrb[0].mxu0
      %4175 = vmatprep.mubr.bf16.mxu0 %v3988
      %4176 = vmatmul.mubr.bf16.gmra.mrb[0].mxu0 %v3964
      %v4177 = vpop.f32.mrb[0].mxu0
      %v4178 = vadd.f32 %v4081, %v4177
      %v4179 = vpop.f32.mrb[0].mxu0
      %v4180 = vpop.f32.mrb[0].mxu0
      %v4181 = vadd.f32 %v4084, %v4180
      %v4182 = vpop.f32.mrb[0].mxu0
      %4183 = vdwg.mxu0
      %v4184 = vmul.f32 %v3808, 0.04
      %v4185 = vmul.f32 %v3811, 0.04
      %v4186 = vmul.f32 %v3816, 0.04
      %v4187 = vmul.f32 %v3819, 0.04
      %v4188 = vmul.f32 %v3824, 0.04
      %v4189 = vmul.f32 %v3827, 0.04
      %v4190 = vmul.f32 %v3832, 0.04
      %v4191 = vmul.f32 %v3835, 0.04
      %v4192 = vmul.f32 %v3840, 0.04
      %v4193 = vmul.f32 %v3843, 0.04
      %v4194 = vmul.f32 %v3848, 0.04
      %v4195 = vmul.f32 %v3851, 0.04
      %v4196 = vmul.f32 %v3856, 0.04
      %v4197 = vmul.f32 %v3859, 0.04
      %v4198 = vmul.f32 %v3864, 0.04
      %v4199 = vmul.f32 %v3867, 0.04
      %v4200 = vmul.f32 %v4122, 0.04
      %v4201 = vmul.f32 %v4125, 0.04
      %v4202 = vmul.f32 %v4130, 0.04
      %v4203 = vmul.f32 %v4133, 0.04
      %v4204 = vmul.f32 %v4138, 0.04
      %v4205 = vmul.f32 %v4141, 0.04
      %v4206 = vmul.f32 %v4146, 0.04
      %v4207 = vmul.f32 %v4149, 0.04
      %v4208 = vmul.f32 %v4154, 0.04
      %v4209 = vmul.f32 %v4157, 0.04
      %v4210 = vmul.f32 %v4162, 0.04
      %v4211 = vmul.f32 %v4165, 0.04
      %v4212 = vmul.f32 %v4170, 0.04
      %v4213 = vmul.f32 %v4173, 0.04
      %v4214 = vmul.f32 %v4178, 0.04
      %v4215 = vmul.f32 %v4181, 0.04
      %v4216 = vmul.f32 %v4184, %v4184
      %v4217 = vmul.f32 %v4185, %v4185
      %v4218 = vmul.f32 %v4186, %v4186
      %v4219 = vmul.f32 %v4187, %v4187
      %v4220 = vmul.f32 %v4188, %v4188
      %v4221 = vmul.f32 %v4189, %v4189
      %v4222 = vmul.f32 %v4190, %v4190
      %v4223 = vmul.f32 %v4191, %v4191
      %v4224 = vmul.f32 %v4192, %v4192
      %v4225 = vmul.f32 %v4193, %v4193
      %v4226 = vmul.f32 %v4194, %v4194
      %v4227 = vmul.f32 %v4195, %v4195
      %v4228 = vmul.f32 %v4196, %v4196
      %v4229 = vmul.f32 %v4197, %v4197
      %v4230 = vmul.f32 %v4198, %v4198
      %v4231 = vmul.f32 %v4199, %v4199
      %v4232 = vsub.f32 %v4200, %v4216
      %v4233 = vsub.f32 %v4201, %v4217
      %v4234 = vsub.f32 %v4202, %v4218
      %v4235 = vsub.f32 %v4203, %v4219
      %v4236 = vsub.f32 %v4204, %v4220
      %v4237 = vsub.f32 %v4205, %v4221
      %v4238 = vsub.f32 %v4206, %v4222
      %v4239 = vsub.f32 %v4207, %v4223
      %v4240 = vsub.f32 %v4208, %v4224
      %v4241 = vsub.f32 %v4209, %v4225
      %v4242 = vsub.f32 %v4210, %v4226
      %v4243 = vsub.f32 %v4211, %v4227
      %v4244 = vsub.f32 %v4212, %v4228
      %v4245 = vsub.f32 %v4213, %v4229
      %v4246 = vsub.f32 %v4214, %v4230
      %v4247 = vsub.f32 %v4215, %v4231
      %v4248 = vadd.f32 %v4232, 1e-05
      %v4249 = vadd.f32 %v4233, 1e-05
      %v4250 = vadd.f32 %v4234, 1e-05
      %v4251 = vadd.f32 %v4235, 1e-05
      %v4252 = vadd.f32 %v4236, 1e-05
      %v4253 = vadd.f32 %v4237, 1e-05
      %v4254 = vadd.f32 %v4238, 1e-05
      %v4255 = vadd.f32 %v4239, 1e-05
      %v4256 = vadd.f32 %v4240, 1e-05
      %v4257 = vadd.f32 %v4241, 1e-05
      %v4258 = vadd.f32 %v4242, 1e-05
      %v4259 = vadd.f32 %v4243, 1e-05
      %v4260 = vadd.f32 %v4244, 1e-05
      %v4261 = vadd.f32 %v4245, 1e-05
      %v4262 = vadd.f32 %v4246, 1e-05
      %v4263 = vadd.f32 %v4247, 1e-05
      %v4264 = vrsqrt.pop %v4248
      %v4265 = vrsqrt.pop %v4249
      %v4266 = vrsqrt.pop %v4250
      %v4267 = vrsqrt.pop %v4251
      %v4268 = vrsqrt.pop %v4252
      %v4269 = vrsqrt.pop %v4253
      %v4270 = vrsqrt.pop %v4254
      %v4271 = vrsqrt.pop %v4255
      %v4272 = vrsqrt.pop %v4256
      %v4273 = vrsqrt.pop %v4257
      %v4274 = vrsqrt.pop %v4258
      %v4275 = vrsqrt.pop %v4259
      %v4276 = vrsqrt.pop %v4260
      %v4277 = vrsqrt.pop %v4261
      %v4278 = vrsqrt.pop %v4262
      %v4279 = vrsqrt.pop %v4263
      %v4280 = vmul.f32 %v4184, %v4264
      %v4281 = vmul.f32 %v4185, %v4265
      %v4282 = vmul.f32 %v4186, %v4266
      %v4283 = vmul.f32 %v4187, %v4267
      %v4284 = vmul.f32 %v4188, %v4268
      %v4285 = vmul.f32 %v4189, %v4269
      %v4286 = vmul.f32 %v4190, %v4270
      %v4287 = vmul.f32 %v4191, %v4271
      %v4288 = vmul.f32 %v4192, %v4272
      %v4289 = vmul.f32 %v4193, %v4273
      %v4290 = vmul.f32 %v4194, %v4274
      %v4291 = vmul.f32 %v4195, %v4275
      %v4292 = vmul.f32 %v4196, %v4276
      %v4293 = vmul.f32 %v4197, %v4277
      %v4294 = vmul.f32 %v4198, %v4278
      %v4295 = vmul.f32 %v4199, %v4279
      %v4296 = vpack.c.bf16 %v4265, %v4264
      %v4297 = vpack.c.bf16 %v4267, %v4266
      %v4298 = vpack.c.bf16 %v4269, %v4268
      %v4299 = vpack.c.bf16 %v4271, %v4270
      %v4300 = vpack.c.bf16 %v4273, %v4272
      %v4301 = vpack.c.bf16 %v4275, %v4274
      %v4302 = vpack.c.bf16 %v4277, %v4276
      %v4303 = vpack.c.bf16 %v4279, %v4278
      %v4305 = vsel %vm1117, %v4296, 0
      %v4308 = vsel %vm1117, %v4297, 0
      %v4311 = vsel %vm1117, %v4298, 0
      %v4314 = vsel %vm1117, %v4299, 0
      %v4317 = vsel %vm1117, %v4300, 0
      %v4320 = vsel %vm1117, %v4301, 0
      %v4323 = vsel %vm1117, %v4302, 0
      %v4326 = vsel %vm1117, %v4303, 0
      %4328 = vmatprep.subr.bf16.mxu0 %v1783
      %4329 = vmatpush1.bf16.msra.mxu0 %v1782
      %4330 = vmatprep.subr.bf16.mxu0 0
      %4331 = vmatpush1.bf16.msra.mxu0 0
      %4332 = vmatprep.subr.bf16.mxu0 0
      %4333 = vmatpush1.bf16.msra.mxu0 0
      %4334 = vmatprep.subr.bf16.mxu0 0
      %4335 = vmatpush1.bf16.msra.mxu0 0
      %4336 = vmatprep.subr.bf16.mxu0 0
      %4337 = vmatpush1.bf16.msra.mxu0 0
      %4338 = vmatprep.subr.bf16.mxu0 0
      %4339 = vmatpush1.bf16.msra.mxu0 0
      %4340 = vmatprep.subr.bf16.mxu0 0
      %4341 = vmatpush1.bf16.msra.mxu0 0
      %4342 = vmatprep.subr.bf16.mxu0 0
      %4343 = vmatpush1.bf16.msra.mxu0 0
      %4344 = vmatprep.subr.bf16.mxu0 0
      %4345 = vmatpush1.bf16.msra.mxu0 0
      %4346 = vmatprep.subr.bf16.mxu0 0
      %4347 = vmatpush1.bf16.msra.mxu0 0
      %4348 = vmatprep.subr.bf16.mxu0 0
      %4349 = vmatpush1.bf16.msra.mxu0 0
      %4350 = vmatprep.subr.bf16.mxu0 0
      %4351 = vmatpush1.bf16.msra.mxu0 0
      %4352 = vmatprep.subr.bf16.mxu0 0
      %4353 = vmatpush1.bf16.msra.mxu0 0
      %4354 = vmatprep.subr.bf16.mxu0 0
      %4355 = vmatpush1.bf16.msra.mxu0 0
      %4356 = vmatprep.subr.bf16.mxu0 0
      %4357 = vmatpush1.bf16.msra.mxu0 0
      %4358 = vmatprep.subr.bf16.mxu0 0
      %4359 = vmatpush1.bf16.msra.mxu0 0
      %4360 = vmatprep.mubr.bf16.mxu0 0
      %4361 = vmatmul.mubr.bf16.gmra.mrb[0].mxu0 %v4305
      %v4362 = vpop.f32.mrb[0].mxu0
      %v4363 = vadd.f32 0.0, %v4362
      %v4364 = vpop.f32.mrb[0].mxu0
      %v4365 = vadd.f32 0.0, %v4364
      %v4366 = vpop.f32.mrb[0].mxu0
      %v4367 = vadd.f32 0.0, %v4366
      %v4368 = vpop.f32.mrb[0].mxu0
      %v4369 = vadd.f32 0.0, %v4368
      %4370 = vmatprep.mubr.bf16.mxu0 0
      %4371 = vmatmul.mubr.bf16.gmra.mrb[0].mxu0 %v4308
      %v4372 = vpop.f32.mrb[0].mxu0
      %v4373 = vadd.f32 0.0, %v4372
      %v4374 = vpop.f32.mrb[0].mxu0
      %v4375 = vadd.f32 0.0, %v4374
      %v4376 = vpop.f32.mrb[0].mxu0
      %v4377 = vadd.f32 0.0, %v4376
      %v4378 = vpop.f32.mrb[0].mxu0
      %v4379 = vadd.f32 0.0, %v4378
      %4380 = vmatprep.mubr.bf16.mxu0 0
      %4381 = vmatmul.mubr.bf16.gmra.mrb[0].mxu0 %v4311
      %v4382 = vpop.f32.mrb[0].mxu0
      %v4383 = vadd.f32 0.0, %v4382
      %v4384 = vpop.f32.mrb[0].mxu0
      %v4385 = vadd.f32 0.0, %v4384
      %v4386 = vpop.f32.mrb[0].mxu0
      %v4387 = vadd.f32 0.0, %v4386
      %v4388 = vpop.f32.mrb[0].mxu0
      %v4389 = vadd.f32 0.0, %v4388
      %4390 = vmatprep.mubr.bf16.mxu0 0
      %4391 = vmatmul.mubr.bf16.gmra.mrb[0].mxu0 %v4314
      %v4392 = vpop.f32.mrb[0].mxu0
      %v4393 = vadd.f32 0.0, %v4392
      %v4394 = vpop.f32.mrb[0].mxu0
      %v4395 = vadd.f32 0.0, %v4394
      %v4396 = vpop.f32.mrb[0].mxu0
      %v4397 = vadd.f32 0.0, %v4396
      %v4398 = vpop.f32.mrb[0].mxu0
      %v4399 = vadd.f32 0.0, %v4398
      %4400 = vmatprep.mubr.bf16.mxu0 0
      %4401 = vmatmul.mubr.bf16.gmra.mrb[0].mxu0 %v4317
      %v4402 = vpop.f32.mrb[0].mxu0
      %v4403 = vadd.f32 0.0, %v4402
      %v4404 = vpop.f32.mrb[0].mxu0
      %v4405 = vadd.f32 0.0, %v4404
      %v4406 = vpop.f32.mrb[0].mxu0
      %v4407 = vadd.f32 0.0, %v4406
      %v4408 = vpop.f32.mrb[0].mxu0
      %v4409 = vadd.f32 0.0, %v4408
      %4410 = vmatprep.mubr.bf16.mxu0 0
      %4411 = vmatmul.mubr.bf16.gmra.mrb[0].mxu0 %v4320
      %v4412 = vpop.f32.mrb[0].mxu0
      %v4413 = vadd.f32 0.0, %v4412
      %v4414 = vpop.f32.mrb[0].mxu0
      %v4415 = vadd.f32 0.0, %v4414
      %v4416 = vpop.f32.mrb[0].mxu0
      %v4417 = vadd.f32 0.0, %v4416
      %v4418 = vpop.f32.mrb[0].mxu0
      %v4419 = vadd.f32 0.0, %v4418
      %4420 = vmatprep.mubr.bf16.mxu0 0
      %4421 = vmatmul.mubr.bf16.gmra.mrb[0].mxu0 %v4323
      %v4422 = vpop.f32.mrb[0].mxu0
      %v4423 = vadd.f32 0.0, %v4422
      %v4424 = vpop.f32.mrb[0].mxu0
      %v4425 = vadd.f32 0.0, %v4424
      %v4426 = vpop.f32.mrb[0].mxu0
      %v4427 = vadd.f32 0.0, %v4426
      %v4428 = vpop.f32.mrb[0].mxu0
      %v4429 = vadd.f32 0.0, %v4428
      %4430 = vmatprep.mubr.bf16.mxu0 0
      %4431 = vmatmul.mubr.bf16.gmra.mrb[0].mxu0 %v4326
      %v4432 = vpop.f32.mrb[0].mxu0
      %v4433 = vadd.f32 0.0, %v4432
      %v4434 = vpop.f32.mrb[0].mxu0
      %v4435 = vadd.f32 0.0, %v4434
      %v4436 = vpop.f32.mrb[0].mxu0
      %v4437 = vadd.f32 0.0, %v4436
      %v4438 = vpop.f32.mrb[0].mxu0
      %v4439 = vadd.f32 0.0, %v4438
      %4440 = vdwg.mxu0
      %4441 = vmatprep.subr.bf16.mxu0 %v1785
      %4442 = vmatpush1.bf16.msra.mxu0 %v1784
      %4443 = vmatprep.subr.bf16.mxu0 0
      %4444 = vmatpush1.bf16.msra.mxu0 0
      %4445 = vmatprep.subr.bf16.mxu0 0
      %4446 = vmatpush1.bf16.msra.mxu0 0
      %4447 = vmatprep.subr.bf16.mxu0 0
      %4448 = vmatpush1.bf16.msra.mxu0 0
      %4449 = vmatprep.subr.bf16.mxu0 0
      %4450 = vmatpush1.bf16.msra.mxu0 0
      %4451 = vmatprep.subr.bf16.mxu0 0
      %4452 = vmatpush1.bf16.msra.mxu0 0
      %4453 = vmatprep.subr.bf16.mxu0 0
      %4454 = vmatpush1.bf16.msra.mxu0 0
      %4455 = vmatprep.subr.bf16.mxu0 0
      %4456 = vmatpush1.bf16.msra.mxu0 0
      %4457 = vmatprep.subr.bf16.mxu0 0
      %4458 = vmatpush1.bf16.msra.mxu0 0
      %4459 = vmatprep.subr.bf16.mxu0 0
      %4460 = vmatpush1.bf16.msra.mxu0 0
      %4461 = vmatprep.subr.bf16.mxu0 0
      %4462 = vmatpush1.bf16.msra.mxu0 0
      %4463 = vmatprep.subr.bf16.mxu0 0
      %4464 = vmatpush1.bf16.msra.mxu0 0
      %4465 = vmatprep.subr.bf16.mxu0 0
      %4466 = vmatpush1.bf16.msra.mxu0 0
      %4467 = vmatprep.subr.bf16.mxu0 0
      %4468 = vmatpush1.bf16.msra.mxu0 0
      %4469 = vmatprep.subr.bf16.mxu0 0
      %4470 = vmatpush1.bf16.msra.mxu0 0
      %4471 = vmatprep.subr.bf16.mxu0 0
      %4472 = vmatpush1.bf16.msra.mxu0 0
      %4473 = vmatprep.mubr.bf16.mxu0 0
      %4474 = vmatmul.mubr.bf16.gmra.mrb[0].mxu0 %v4305
      %v4475 = vpop.f32.mrb[0].mxu0
      %v4476 = vadd.f32 0.0, %v4475
      %v4477 = vpop.f32.mrb[0].mxu0
      %v4478 = vadd.f32 0.0, %v4477
      %v4479 = vpop.f32.mrb[0].mxu0
      %v4480 = vadd.f32 0.0, %v4479
      %v4481 = vpop.f32.mrb[0].mxu0
      %v4482 = vadd.f32 0.0, %v4481
      %4483 = vmatprep.mubr.bf16.mxu0 0
      %4484 = vmatmul.mubr.bf16.gmra.mrb[0].mxu0 %v4308
      %v4485 = vpop.f32.mrb[0].mxu0
      %v4486 = vadd.f32 0.0, %v4485
      %v4487 = vpop.f32.mrb[0].mxu0
      %v4488 = vadd.f32 0.0, %v4487
      %v4489 = vpop.f32.mrb[0].mxu0
      %v4490 = vadd.f32 0.0, %v4489
      %v4491 = vpop.f32.mrb[0].mxu0
      %v4492 = vadd.f32 0.0, %v4491
      %4493 = vmatprep.mubr.bf16.mxu0 0
      %4494 = vmatmul.mubr.bf16.gmra.mrb[0].mxu0 %v4311
      %v4495 = vpop.f32.mrb[0].mxu0
      %v4496 = vadd.f32 0.0, %v4495
      %v4497 = vpop.f32.mrb[0].mxu0
      %v4498 = vadd.f32 0.0, %v4497
      %v4499 = vpop.f32.mrb[0].mxu0
      %v4500 = vadd.f32 0.0, %v4499
      %v4501 = vpop.f32.mrb[0].mxu0
      %v4502 = vadd.f32 0.0, %v4501
      %4503 = vmatprep.mubr.bf16.mxu0 0
      %4504 = vmatmul.mubr.bf16.gmra.mrb[0].mxu0 %v4314
      %v4505 = vpop.f32.mrb[0].mxu0
      %v4506 = vadd.f32 0.0, %v4505
      %v4507 = vpop.f32.mrb[0].mxu0
      %v4508 = vadd.f32 0.0, %v4507
      %v4509 = vpop.f32.mrb[0].mxu0
      %v4510 = vadd.f32 0.0, %v4509
      %v4511 = vpop.f32.mrb[0].mxu0
      %v4512 = vadd.f32 0.0, %v4511
      %4513 = vmatprep.mubr.bf16.mxu0 0
      %4514 = vmatmul.mubr.bf16.gmra.mrb[0].mxu0 %v4317
      %v4515 = vpop.f32.mrb[0].mxu0
      %v4516 = vadd.f32 0.0, %v4515
      %v4517 = vpop.f32.mrb[0].mxu0
      %v4518 = vadd.f32 0.0, %v4517
      %v4519 = vpop.f32.mrb[0].mxu0
      %v4520 = vadd.f32 0.0, %v4519
      %v4521 = vpop.f32.mrb[0].mxu0
      %v4522 = vadd.f32 0.0, %v4521
      %4523 = vmatprep.mubr.bf16.mxu0 0
      %4524 = vmatmul.mubr.bf16.gmra.mrb[0].mxu0 %v4320
      %v4525 = vpop.f32.mrb[0].mxu0
      %v4526 = vadd.f32 0.0, %v4525
      %v4527 = vpop.f32.mrb[0].mxu0
      %v4528 = vadd.f32 0.0, %v4527
      %v4529 = vpop.f32.mrb[0].mxu0
      %v4530 = vadd.f32 0.0, %v4529
      %v4531 = vpop.f32.mrb[0].mxu0
      %v4532 = vadd.f32 0.0, %v4531
      %4533 = vmatprep.mubr.bf16.mxu0 0
      %4534 = vmatmul.mubr.bf16.gmra.mrb[0].mxu0 %v4323
      %v4535 = vpop.f32.mrb[0].mxu0
      %v4536 = vadd.f32 0.0, %v4535
      %v4537 = vpop.f32.mrb[0].mxu0
      %v4538 = vadd.f32 0.0, %v4537
      %v4539 = vpop.f32.mrb[0].mxu0
      %v4540 = vadd.f32 0.0, %v4539
      %v4541 = vpop.f32.mrb[0].mxu0
      %v4542 = vadd.f32 0.0, %v4541
      %4543 = vmatprep.mubr.bf16.mxu0 0
      %4544 = vmatmul.mubr.bf16.gmra.mrb[0].mxu0 %v4326
      %v4545 = vpop.f32.mrb[0].mxu0
      %v4546 = vadd.f32 0.0, %v4545
      %v4547 = vpop.f32.mrb[0].mxu0
      %v4548 = vadd.f32 0.0, %v4547
      %v4549 = vpop.f32.mrb[0].mxu0
      %v4550 = vadd.f32 0.0, %v4549
      %v4551 = vpop.f32.mrb[0].mxu0
      %v4552 = vadd.f32 0.0, %v4551
      %4553 = vdwg.mxu0
      %v4554 = vmul.f32 %v3556, %v4363
      %v4555 = vmul.f32 %v3557, %v4365
      %v4556 = vmul.f32 %v3558, %v4476
      %v4557 = vmul.f32 %v3559, %v4478
      %v4558 = vmul.f32 %v3560, %v4367
      %v4559 = vmul.f32 %v3561, %v4369
      %v4560 = vmul.f32 %v3562, %v4480
      %v4561 = vmul.f32 %v3563, %v4482
      %v4562 = vmul.f32 %v3564, %v4373
      %v4563 = vmul.f32 %v3565, %v4375
      %v4564 = vmul.f32 %v3566, %v4486
      %v4565 = vmul.f32 %v3567, %v4488
      %v4566 = vmul.f32 %v3568, %v4377
      %v4567 = vmul.f32 %v3569, %v4379
      %v4568 = vmul.f32 %v3570, %v4490
      %v4569 = vmul.f32 %v3571, %v4492
      %v4570 = vmul.f32 %v3572, %v4383
      %v4571 = vmul.f32 %v3573, %v4385
      %v4572 = vmul.f32 %v3574, %v4496
      %v4573 = vmul.f32 %v3575, %v4498
      %v4574 = vmul.f32 %v3576, %v4387
      %v4575 = vmul.f32 %v3577, %v4389
      %v4576 = vmul.f32 %v3578, %v4500
      %v4577 = vmul.f32 %v3579, %v4502
      %v4578 = vmul.f32 %v3580, %v4393
      %v4579 = vmul.f32 %v3581, %v4395
      %v4580 = vmul.f32 %v3582, %v4506
      %v4581 = vmul.f32 %v3583, %v4508
      %v4582 = vmul.f32 %v3584, %v4397
      %v4583 = vmul.f32 %v3585, %v4399
      %v4584 = vmul.f32 %v3586, %v4510
      %v4585 = vmul.f32 %v3587, %v4512
      %v4586 = vmul.f32 %v3588, %v4403
      %v4587 = vmul.f32 %v3589, %v4405
      %v4588 = vmul.f32 %v3590, %v4516
      %v4589 = vmul.f32 %v3591, %v4518
      %v4590 = vmul.f32 %v3592, %v4407
      %v4591 = vmul.f32 %v3593, %v4409
      %v4592 = vmul.f32 %v3594, %v4520
      %v4593 = vmul.f32 %v3595, %v4522
      %v4594 = vmul.f32 %v3596, %v4413
      %v4595 = vmul.f32 %v3597, %v4415
      %v4596 = vmul.f32 %v3598, %v4526
      %v4597 = vmul.f32 %v3599, %v4528
      %v4598 = vmul.f32 %v3600, %v4417
      %v4599 = vmul.f32 %v3601, %v4419
      %v4600 = vmul.f32 %v3602, %v4530
      %v4601 = vmul.f32 %v3603, %v4532
      %v4602 = vmul.f32 %v3604, %v4423
      %v4603 = vmul.f32 %v3605, %v4425
      %v4604 = vmul.f32 %v3606, %v4536
      %v4605 = vmul.f32 %v3607, %v4538
      %v4606 = vmul.f32 %v3608, %v4427
      %v4607 = vmul.f32 %v3609, %v4429
      %v4608 = vmul.f32 %v3610, %v4540
      %v4609 = vmul.f32 %v3611, %v4542
      %v4610 = vmul.f32 %v3612, %v4433
      %v4611 = vmul.f32 %v3613, %v4435
      %v4612 = vmul.f32 %v3614, %v4546
      %v4613 = vmul.f32 %v3615, %v4548
      %v4614 = vmul.f32 %v3616, %v4437
      %v4615 = vmul.f32 %v3617, %v4439
      %v4616 = vmul.f32 %v3618, %v4550
      %v4617 = vmul.f32 %v3619, %v4552
      %v4618 = vpack.c.bf16 %v4281, %v4280
      %v4619 = vpack.c.bf16 %v4283, %v4282
      %v4620 = vpack.c.bf16 %v4285, %v4284
      %v4621 = vpack.c.bf16 %v4287, %v4286
      %v4622 = vpack.c.bf16 %v4289, %v4288
      %v4623 = vpack.c.bf16 %v4291, %v4290
      %v4624 = vpack.c.bf16 %v4293, %v4292
      %v4625 = vpack.c.bf16 %v4295, %v4294
      %v4627 = vsel %vm1117, %v4618, 0
      %v4630 = vsel %vm1117, %v4619, 0
      %v4633 = vsel %vm1117, %v4620, 0
      %v4636 = vsel %vm1117, %v4621, 0
      %v4639 = vsel %vm1117, %v4622, 0
      %v4642 = vsel %vm1117, %v4623, 0
      %v4645 = vsel %vm1117, %v4624, 0
      %v4648 = vsel %vm1117, %v4625, 0
      %4650 = vmatprep.subr.bf16.mxu0 %v1783
      %4651 = vmatpush1.bf16.msra.mxu0 %v1782
      %4652 = vmatprep.subr.bf16.mxu0 0
      %4653 = vmatpush1.bf16.msra.mxu0 0
      %4654 = vmatprep.subr.bf16.mxu0 0
      %4655 = vmatpush1.bf16.msra.mxu0 0
      %4656 = vmatprep.subr.bf16.mxu0 0
      %4657 = vmatpush1.bf16.msra.mxu0 0
      %4658 = vmatprep.subr.bf16.mxu0 0
      %4659 = vmatpush1.bf16.msra.mxu0 0
      %4660 = vmatprep.subr.bf16.mxu0 0
      %4661 = vmatpush1.bf16.msra.mxu0 0
      %4662 = vmatprep.subr.bf16.mxu0 0
      %4663 = vmatpush1.bf16.msra.mxu0 0
      %4664 = vmatprep.subr.bf16.mxu0 0
      %4665 = vmatpush1.bf16.msra.mxu0 0
      %4666 = vmatprep.subr.bf16.mxu0 0
      %4667 = vmatpush1.bf16.msra.mxu0 0
      %4668 = vmatprep.subr.bf16.mxu0 0
      %4669 = vmatpush1.bf16.msra.mxu0 0
      %4670 = vmatprep.subr.bf16.mxu0 0
      %4671 = vmatpush1.bf16.msra.mxu0 0
      %4672 = vmatprep.subr.bf16.mxu0 0
      %4673 = vmatpush1.bf16.msra.mxu0 0
      %4674 = vmatprep.subr.bf16.mxu0 0
      %4675 = vmatpush1.bf16.msra.mxu0 0
      %4676 = vmatprep.subr.bf16.mxu0 0
      %4677 = vmatpush1.bf16.msra.mxu0 0
      %4678 = vmatprep.subr.bf16.mxu0 0
      %4679 = vmatpush1.bf16.msra.mxu0 0
      %4680 = vmatprep.subr.bf16.mxu0 0
      %4681 = vmatpush1.bf16.msra.mxu0 0
      %4682 = vmatprep.mubr.bf16.mxu0 0
      %4683 = vmatmul.mubr.bf16.gmra.mrb[0].mxu0 %v4627
      %v4684 = vpop.f32.mrb[0].mxu0
      %v4685 = vadd.f32 0.0, %v4684
      %v4686 = vpop.f32.mrb[0].mxu0
      %v4687 = vadd.f32 0.0, %v4686
      %v4688 = vpop.f32.mrb[0].mxu0
      %v4689 = vadd.f32 0.0, %v4688
      %v4690 = vpop.f32.mrb[0].mxu0
      %v4691 = vadd.f32 0.0, %v4690
      %4692 = vmatprep.mubr.bf16.mxu0 0
      %4693 = vmatmul.mubr.bf16.gmra.mrb[0].mxu0 %v4630
      %v4694 = vpop.f32.mrb[0].mxu0
      %v4695 = vadd.f32 0.0, %v4694
      %v4696 = vpop.f32.mrb[0].mxu0
      %v4697 = vadd.f32 0.0, %v4696
      %v4698 = vpop.f32.mrb[0].mxu0
      %v4699 = vadd.f32 0.0, %v4698
      %v4700 = vpop.f32.mrb[0].mxu0
      %v4701 = vadd.f32 0.0, %v4700
      %4702 = vmatprep.mubr.bf16.mxu0 0
      %4703 = vmatmul.mubr.bf16.gmra.mrb[0].mxu0 %v4633
      %v4704 = vpop.f32.mrb[0].mxu0
      %v4705 = vadd.f32 0.0, %v4704
      %v4706 = vpop.f32.mrb[0].mxu0
      %v4707 = vadd.f32 0.0, %v4706
      %v4708 = vpop.f32.mrb[0].mxu0
      %v4709 = vadd.f32 0.0, %v4708
      %v4710 = vpop.f32.mrb[0].mxu0
      %v4711 = vadd.f32 0.0, %v4710
      %4712 = vmatprep.mubr.bf16.mxu0 0
      %4713 = vmatmul.mubr.bf16.gmra.mrb[0].mxu0 %v4636
      %v4714 = vpop.f32.mrb[0].mxu0
      %v4715 = vadd.f32 0.0, %v4714
      %v4716 = vpop.f32.mrb[0].mxu0
      %v4717 = vadd.f32 0.0, %v4716
      %v4718 = vpop.f32.mrb[0].mxu0
      %v4719 = vadd.f32 0.0, %v4718
      %v4720 = vpop.f32.mrb[0].mxu0
      %v4721 = vadd.f32 0.0, %v4720
      %4722 = vmatprep.mubr.bf16.mxu0 0
      %4723 = vmatmul.mubr.bf16.gmra.mrb[0].mxu0 %v4639
      %v4724 = vpop.f32.mrb[0].mxu0
      %v4725 = vadd.f32 0.0, %v4724
      %v4726 = vpop.f32.mrb[0].mxu0
      %v4727 = vadd.f32 0.0, %v4726
      %v4728 = vpop.f32.mrb[0].mxu0
      %v4729 = vadd.f32 0.0, %v4728
      %v4730 = vpop.f32.mrb[0].mxu0
      %v4731 = vadd.f32 0.0, %v4730
      %4732 = vmatprep.mubr.bf16.mxu0 0
      %4733 = vmatmul.mubr.bf16.gmra.mrb[0].mxu0 %v4642
      %v4734 = vpop.f32.mrb[0].mxu0
      %v4735 = vadd.f32 0.0, %v4734
      %v4736 = vpop.f32.mrb[0].mxu0
      %v4737 = vadd.f32 0.0, %v4736
      %v4738 = vpop.f32.mrb[0].mxu0
      %v4739 = vadd.f32 0.0, %v4738
      %v4740 = vpop.f32.mrb[0].mxu0
      %v4741 = vadd.f32 0.0, %v4740
      %4742 = vmatprep.mubr.bf16.mxu0 0
      %4743 = vmatmul.mubr.bf16.gmra.mrb[0].mxu0 %v4645
      %v4744 = vpop.f32.mrb[0].mxu0
      %v4745 = vadd.f32 0.0, %v4744
      %v4746 = vpop.f32.mrb[0].mxu0
      %v4747 = vadd.f32 0.0, %v4746
      %v4748 = vpop.f32.mrb[0].mxu0
      %v4749 = vadd.f32 0.0, %v4748
      %v4750 = vpop.f32.mrb[0].mxu0
      %v4751 = vadd.f32 0.0, %v4750
      %4752 = vmatprep.mubr.bf16.mxu0 0
      %4753 = vmatmul.mubr.bf16.gmra.mrb[0].mxu0 %v4648
      %v4754 = vpop.f32.mrb[0].mxu0
      %v4755 = vadd.f32 0.0, %v4754
      %v4756 = vpop.f32.mrb[0].mxu0
      %v4757 = vadd.f32 0.0, %v4756
      %v4758 = vpop.f32.mrb[0].mxu0
      %v4759 = vadd.f32 0.0, %v4758
      %v4760 = vpop.f32.mrb[0].mxu0
      %v4761 = vadd.f32 0.0, %v4760
      %4762 = vdwg.mxu0
      %4763 = vmatprep.subr.bf16.mxu0 %v1785
      %4764 = vmatpush1.bf16.msra.mxu0 %v1784
      %4765 = vmatprep.subr.bf16.mxu0 0
      %4766 = vmatpush1.bf16.msra.mxu0 0
      %4767 = vmatprep.subr.bf16.mxu0 0
      %4768 = vmatpush1.bf16.msra.mxu0 0
      %4769 = vmatprep.subr.bf16.mxu0 0
      %4770 = vmatpush1.bf16.msra.mxu0 0
      %4771 = vmatprep.subr.bf16.mxu0 0
      %4772 = vmatpush1.bf16.msra.mxu0 0
      %4773 = vmatprep.subr.bf16.mxu0 0
      %4774 = vmatpush1.bf16.msra.mxu0 0
      %4775 = vmatprep.subr.bf16.mxu0 0
      %4776 = vmatpush1.bf16.msra.mxu0 0
      %4777 = vmatprep.subr.bf16.mxu0 0
      %4778 = vmatpush1.bf16.msra.mxu0 0
      %4779 = vmatprep.subr.bf16.mxu0 0
      %4780 = vmatpush1.bf16.msra.mxu0 0
      %4781 = vmatprep.subr.bf16.mxu0 0
      %4782 = vmatpush1.bf16.msra.mxu0 0
      %4783 = vmatprep.subr.bf16.mxu0 0
      %4784 = vmatpush1.bf16.msra.mxu0 0
      %4785 = vmatprep.subr.bf16.mxu0 0
      %4786 = vmatpush1.bf16.msra.mxu0 0
      %4787 = vmatprep.subr.bf16.mxu0 0
      %4788 = vmatpush1.bf16.msra.mxu0 0
      %4789 = vmatprep.subr.bf16.mxu0 0
      %4790 = vmatpush1.bf16.msra.mxu0 0
      %4791 = vmatprep.subr.bf16.mxu0 0
      %4792 = vmatpush1.bf16.msra.mxu0 0
      %4793 = vmatprep.subr.bf16.mxu0 0
      %4794 = vmatpush1.bf16.msra.mxu0 0
      %4795 = vmatprep.mubr.bf16.mxu0 0
      %4796 = vmatmul.mubr.bf16.gmra.mrb[0].mxu0 %v4627
      %v4797 = vpop.f32.mrb[0].mxu0
      %v4798 = vadd.f32 0.0, %v4797
      %v4799 = vpop.f32.mrb[0].mxu0
      %v4800 = vadd.f32 0.0, %v4799
      %v4801 = vpop.f32.mrb[0].mxu0
      %v4802 = vadd.f32 0.0, %v4801
      %v4803 = vpop.f32.mrb[0].mxu0
      %v4804 = vadd.f32 0.0, %v4803
      %4805 = vmatprep.mubr.bf16.mxu0 0
      %4806 = vmatmul.mubr.bf16.gmra.mrb[0].mxu0 %v4630
      %v4807 = vpop.f32.mrb[0].mxu0
      %v4808 = vadd.f32 0.0, %v4807
      %v4809 = vpop.f32.mrb[0].mxu0
      %v4810 = vadd.f32 0.0, %v4809
      %v4811 = vpop.f32.mrb[0].mxu0
      %v4812 = vadd.f32 0.0, %v4811
      %v4813 = vpop.f32.mrb[0].mxu0
      %v4814 = vadd.f32 0.0, %v4813
      %4815 = vmatprep.mubr.bf16.mxu0 0
      %4816 = vmatmul.mubr.bf16.gmra.mrb[0].mxu0 %v4633
      %v4817 = vpop.f32.mrb[0].mxu0
      %v4818 = vadd.f32 0.0, %v4817
      %v4819 = vpop.f32.mrb[0].mxu0
      %v4820 = vadd.f32 0.0, %v4819
      %v4821 = vpop.f32.mrb[0].mxu0
      %v4822 = vadd.f32 0.0, %v4821
      %v4823 = vpop.f32.mrb[0].mxu0
      %v4824 = vadd.f32 0.0, %v4823
      %4825 = vmatprep.mubr.bf16.mxu0 0
      %4826 = vmatmul.mubr.bf16.gmra.mrb[0].mxu0 %v4636
      %v4827 = vpop.f32.mrb[0].mxu0
      %v4828 = vadd.f32 0.0, %v4827
      %v4829 = vpop.f32.mrb[0].mxu0
      %v4830 = vadd.f32 0.0, %v4829
      %v4831 = vpop.f32.mrb[0].mxu0
      %v4832 = vadd.f32 0.0, %v4831
      %v4833 = vpop.f32.mrb[0].mxu0
      %v4834 = vadd.f32 0.0, %v4833
      %4835 = vmatprep.mubr.bf16.mxu0 0
      %4836 = vmatmul.mubr.bf16.gmra.mrb[0].mxu0 %v4639
      %v4837 = vpop.f32.mrb[0].mxu0
      %v4838 = vadd.f32 0.0, %v4837
      %v4839 = vpop.f32.mrb[0].mxu0
      %v4840 = vadd.f32 0.0, %v4839
      %v4841 = vpop.f32.mrb[0].mxu0
      %v4842 = vadd.f32 0.0, %v4841
      %v4843 = vpop.f32.mrb[0].mxu0
      %v4844 = vadd.f32 0.0, %v4843
      %4845 = vmatprep.mubr.bf16.mxu0 0
      %4846 = vmatmul.mubr.bf16.gmra.mrb[0].mxu0 %v4642
      %v4847 = vpop.f32.mrb[0].mxu0
      %v4848 = vadd.f32 0.0, %v4847
      %v4849 = vpop.f32.mrb[0].mxu0
      %v4850 = vadd.f32 0.0, %v4849
      %v4851 = vpop.f32.mrb[0].mxu0
      %v4852 = vadd.f32 0.0, %v4851
      %v4853 = vpop.f32.mrb[0].mxu0
      %v4854 = vadd.f32 0.0, %v4853
      %4855 = vmatprep.mubr.bf16.mxu0 0
      %4856 = vmatmul.mubr.bf16.gmra.mrb[0].mxu0 %v4645
      %v4857 = vpop.f32.mrb[0].mxu0
      %v4858 = vadd.f32 0.0, %v4857
      %v4859 = vpop.f32.mrb[0].mxu0
      %v4860 = vadd.f32 0.0, %v4859
      %v4861 = vpop.f32.mrb[0].mxu0
      %v4862 = vadd.f32 0.0, %v4861
      %v4863 = vpop.f32.mrb[0].mxu0
      %v4864 = vadd.f32 0.0, %v4863
      %4865 = vmatprep.mubr.bf16.mxu0 0
      %4866 = vmatmul.mubr.bf16.gmra.mrb[0].mxu0 %v4648
      %v4867 = vpop.f32.mrb[0].mxu0
      %v4868 = vadd.f32 0.0, %v4867
      %v4869 = vpop.f32.mrb[0].mxu0
      %v4870 = vadd.f32 0.0, %v4869
      %v4871 = vpop.f32.mrb[0].mxu0
      %v4872 = vadd.f32 0.0, %v4871
      %v4873 = vpop.f32.mrb[0].mxu0
      %v4874 = vadd.f32 0.0, %v4873
      %4875 = vdwg.mxu0
      %v4876 = vsub.f32 %v4554, %v4685
      %v4877 = vsub.f32 %v4555, %v4687
      %v4878 = vsub.f32 %v4556, %v4798
      %v4879 = vsub.f32 %v4557, %v4800
      %v4880 = vsub.f32 %v4558, %v4689
      %v4881 = vsub.f32 %v4559, %v4691
      %v4882 = vsub.f32 %v4560, %v4802
      %v4883 = vsub.f32 %v4561, %v4804
      %v4884 = vsub.f32 %v4562, %v4695
      %v4885 = vsub.f32 %v4563, %v4697
      %v4886 = vsub.f32 %v4564, %v4808
      %v4887 = vsub.f32 %v4565, %v4810
      %v4888 = vsub.f32 %v4566, %v4699
      %v4889 = vsub.f32 %v4567, %v4701
      %v4890 = vsub.f32 %v4568, %v4812
      %v4891 = vsub.f32 %v4569, %v4814
      %v4892 = vsub.f32 %v4570, %v4705
      %v4893 = vsub.f32 %v4571, %v4707
      %v4894 = vsub.f32 %v4572, %v4818
      %v4895 = vsub.f32 %v4573, %v4820
      %v4896 = vsub.f32 %v4574, %v4709
      %v4897 = vsub.f32 %v4575, %v4711
      %v4898 = vsub.f32 %v4576, %v4822
      %v4899 = vsub.f32 %v4577, %v4824
      %v4900 = vsub.f32 %v4578, %v4715
      %v4901 = vsub.f32 %v4579, %v4717
      %v4902 = vsub.f32 %v4580, %v4828
      %v4903 = vsub.f32 %v4581, %v4830
      %v4904 = vsub.f32 %v4582, %v4719
      %v4905 = vsub.f32 %v4583, %v4721
      %v4906 = vsub.f32 %v4584, %v4832
      %v4907 = vsub.f32 %v4585, %v4834
      %v4908 = vsub.f32 %v4586, %v4725
      %v4909 = vsub.f32 %v4587, %v4727
      %v4910 = vsub.f32 %v4588, %v4838
      %v4911 = vsub.f32 %v4589, %v4840
      %v4912 = vsub.f32 %v4590, %v4729
      %v4913 = vsub.f32 %v4591, %v4731
      %v4914 = vsub.f32 %v4592, %v4842
      %v4915 = vsub.f32 %v4593, %v4844
      %v4916 = vsub.f32 %v4594, %v4735
      %v4917 = vsub.f32 %v4595, %v4737
      %v4918 = vsub.f32 %v4596, %v4848
      %v4919 = vsub.f32 %v4597, %v4850
      %v4920 = vsub.f32 %v4598, %v4739
      %v4921 = vsub.f32 %v4599, %v4741
      %v4922 = vsub.f32 %v4600, %v4852
      %v4923 = vsub.f32 %v4601, %v4854
      %v4924 = vsub.f32 %v4602, %v4745
      %v4925 = vsub.f32 %v4603, %v4747
      %v4926 = vsub.f32 %v4604, %v4858
      %v4927 = vsub.f32 %v4605, %v4860
      %v4928 = vsub.f32 %v4606, %v4749
      %v4929 = vsub.f32 %v4607, %v4751
      %v4930 = vsub.f32 %v4608, %v4862
      %v4931 = vsub.f32 %v4609, %v4864
      %v4932 = vsub.f32 %v4610, %v4755
      %v4933 = vsub.f32 %v4611, %v4757
      %v4934 = vsub.f32 %v4612, %v4868
      %v4935 = vsub.f32 %v4613, %v4870
      %v4936 = vsub.f32 %v4614, %v4759
      %v4937 = vsub.f32 %v4615, %v4761
      %v4938 = vsub.f32 %v4616, %v4872
      %v4939 = vsub.f32 %v4617, %v4874
      %v4940 = vpack.c.bf16 %v4880, %v4876
      %v4941 = vpack.c.bf16 %v4881, %v4877
      %v4942 = vpack.c.bf16 %v4882, %v4878
      %v4943 = vpack.c.bf16 %v4883, %v4879
      %v4944 = vpack.c.bf16 %v4888, %v4884
      %v4945 = vpack.c.bf16 %v4889, %v4885
      %v4946 = vpack.c.bf16 %v4890, %v4886
      %v4947 = vpack.c.bf16 %v4891, %v4887
      %v4948 = vpack.c.bf16 %v4896, %v4892
      %v4949 = vpack.c.bf16 %v4897, %v4893
      %v4950 = vpack.c.bf16 %v4898, %v4894
      %v4951 = vpack.c.bf16 %v4899, %v4895
      %v4952 = vpack.c.bf16 %v4904, %v4900
      %v4953 = vpack.c.bf16 %v4905, %v4901
      %v4954 = vpack.c.bf16 %v4906, %v4902
      %v4955 = vpack.c.bf16 %v4907, %v4903
      %v4956 = vpack.c.bf16 %v4912, %v4908
      %v4957 = vpack.c.bf16 %v4913, %v4909
      %v4958 = vpack.c.bf16 %v4914, %v4910
      %v4959 = vpack.c.bf16 %v4915, %v4911
      %v4960 = vpack.c.bf16 %v4920, %v4916
      %v4961 = vpack.c.bf16 %v4921, %v4917
      %v4962 = vpack.c.bf16 %v4922, %v4918
      %v4963 = vpack.c.bf16 %v4923, %v4919
      %v4964 = vpack.c.bf16 %v4928, %v4924
      %v4965 = vpack.c.bf16 %v4929, %v4925
      %v4966 = vpack.c.bf16 %v4930, %v4926
      %v4967 = vpack.c.bf16 %v4931, %v4927
      %v4968 = vpack.c.bf16 %v4936, %v4932
      %v4969 = vpack.c.bf16 %v4937, %v4933
      %v4970 = vpack.c.bf16 %v4938, %v4934
      %v4971 = vpack.c.bf16 %v4939, %v4935
      %v4972 = vld [vmem:[%s7] sm:$0xf]
      %v4973 = vld [vmem:[%s7 + $0x4] sm:$0xf]
      %v4974 = vld [vmem:[%s7 + $0x8] sm:$0xf]
      %v4975 = vld [vmem:[%s7 + $0xc] sm:$0xf]
      %v4976 = vld [vmem:[%s7 + $0x10] sm:$0xf]
      %v4977 = vld [vmem:[%s7 + $0x14] sm:$0xf]
      %v4978 = vld [vmem:[%s7 + $0x18] sm:$0xf]
      %v4979 = vld [vmem:[%s7 + $0x1c] sm:$0xf]
      %v4980 = vld [vmem:[%s7 + $0x20] sm:$0xf]
      %v4981 = vld [vmem:[%s7 + $0x24] sm:$0xf]
      %v4982 = vld [vmem:[%s7 + $0x28] sm:$0xf]
      %v4983 = vld [vmem:[%s7 + $0x2c] sm:$0xf]
      %v4984 = vld [vmem:[%s7 + $0x30] sm:$0xf]
      %v4985 = vld [vmem:[%s7 + $0x34] sm:$0xf]
      %v4986 = vld [vmem:[%s7 + $0x38] sm:$0xf]
      %v4987 = vld [vmem:[%s7 + $0x3c] sm:$0xf]
      %v4988 = vld [vmem:[%s7 + $0x40] sm:$0xf]
      %v4989 = vld [vmem:[%s7 + $0x44] sm:$0xf]
      %v4990 = vld [vmem:[%s7 + $0x48] sm:$0xf]
      %v4991 = vld [vmem:[%s7 + $0x4c] sm:$0xf]
      %v4992 = vld [vmem:[%s7 + $0x50] sm:$0xf]
      %v4993 = vld [vmem:[%s7 + $0x54] sm:$0xf]
      %v4994 = vld [vmem:[%s7 + $0x58] sm:$0xf]
      %v4995 = vld [vmem:[%s7 + $0x5c] sm:$0xf]
      %v4996 = vld [vmem:[%s7 + $0x60] sm:$0xf]
      %v4997 = vld [vmem:[%s7 + $0x64] sm:$0xf]
      %v4998 = vld [vmem:[%s7 + $0x68] sm:$0xf]
      %v4999 = vld [vmem:[%s7 + $0x6c] sm:$0xf]
      %v5000 = vld [vmem:[%s7 + $0x70] sm:$0xf]
      %v5001 = vld [vmem:[%s7 + $0x74] sm:$0xf]
      %v5002 = vld [vmem:[%s7 + $0x78] sm:$0xf]
      %v5003 = vld [vmem:[%s7 + $0x7c] sm:$0xf]
      %v5004 = vld [vmem:[%s7 + $0x80] sm:$0xf]
      %v5005 = vld [vmem:[%s7 + $0x84] sm:$0xf]
      %v5006 = vld [vmem:[%s7 + $0x88] sm:$0xf]
      %v5007 = vld [vmem:[%s7 + $0x8c] sm:$0xf]
      %v5008 = vld [vmem:[%s7 + $0x90] sm:$0xf]
      %v5009 = vld [vmem:[%s7 + $0x94] sm:$0xf]
      %v5010 = vld [vmem:[%s7 + $0x98] sm:$0xf]
      %v5011 = vld [vmem:[%s7 + $0x9c] sm:$0xf]
      %v5012 = vld [vmem:[%s7 + $0xa0] sm:$0xf]
      %v5013 = vld [vmem:[%s7 + $0xa4] sm:$0xf]
      %v5014 = vld [vmem:[%s7 + $0xa8] sm:$0xf]
      %v5015 = vld [vmem:[%s7 + $0xac] sm:$0xf]
      %v5016 = vld [vmem:[%s7 + $0xb0] sm:$0xf]
      %v5017 = vld [vmem:[%s7 + $0xb4] sm:$0xf]
      %v5018 = vld [vmem:[%s7 + $0xb8] sm:$0xf]
      %v5019 = vld [vmem:[%s7 + $0xbc] sm:$0xf]
      %v5020 = vld [vmem:[%s7 + $0xc0] sm:$0xf]
      %v5021 = vld [vmem:[%s7 + $0xc4] sm:$0xf]
      %v5022 = vld [vmem:[%s8] sm:$0x1]
      %v5024 = vlaneseq
      %v5025 = vshrl.u32 %v5024, 7
      %v5026 = vsub.s32 0, %v5025
      %v5027 = vrot.slane %v5022, %v5026
      %v5079 = vunpack.c.l.b16 %v4972
      %v5080 = vunpack.c.l.b16 %v4973
      %v5081 = vunpack.c.l.b16 %v4974
      %v5082 = vunpack.c.l.b16 %v4975
      %v5083 = vunpack.c.l.b16 %v4976
      %v5084 = vunpack.c.l.b16 %v4977
      %v5085 = vunpack.c.l.b16 %v4978
      %v5086 = vunpack.c.l.b16 %v4979
      %v5087 = vunpack.c.l.b16 %v4980
      %v5088 = vunpack.c.l.b16 %v4981
      %v5089 = vunpack.c.l.b16 %v4982
      %v5090 = vunpack.c.l.b16 %v4983
      %v5091 = vunpack.c.l.b16 %v4984
      %v5092 = vunpack.c.l.b16 %v4985
      %v5093 = vunpack.c.l.b16 %v4986
      %v5094 = vunpack.c.l.b16 %v4987
      %v5095 = vunpack.c.l.b16 %v4988
      %v5096 = vunpack.c.l.b16 %v4989
      %v5097 = vunpack.c.l.b16 %v4990
      %v5098 = vunpack.c.l.b16 %v4991
      %v5099 = vunpack.c.l.b16 %v4992
      %v5100 = vunpack.c.l.b16 %v4993
      %v5101 = vunpack.c.l.b16 %v4994
      %v5102 = vunpack.c.l.b16 %v4995
      %v5103 = vunpack.c.l.b16 %v4996
      %v5104 = vunpack.c.l.b16 %v4997
      %v5105 = vunpack.c.l.b16 %v4998
      %v5106 = vunpack.c.l.b16 %v4999
      %v5107 = vunpack.c.l.b16 %v5000
      %v5108 = vunpack.c.l.b16 %v5001
      %v5109 = vunpack.c.l.b16 %v5002
      %v5110 = vunpack.c.l.b16 %v5003
      %v5111 = vunpack.c.l.b16 %v5004
      %v5112 = vunpack.c.l.b16 %v5005
      %v5113 = vunpack.c.l.b16 %v5006
      %v5114 = vunpack.c.l.b16 %v5007
      %v5115 = vunpack.c.l.b16 %v5008
      %v5116 = vunpack.c.l.b16 %v5009
      %v5117 = vunpack.c.l.b16 %v5010
      %v5118 = vunpack.c.l.b16 %v5011
      %v5119 = vunpack.c.l.b16 %v5012
      %v5120 = vunpack.c.l.b16 %v5013
      %v5121 = vunpack.c.l.b16 %v5014
      %v5122 = vunpack.c.l.b16 %v5015
      %v5123 = vunpack.c.l.b16 %v5016
      %v5124 = vunpack.c.l.b16 %v5017
      %v5125 = vunpack.c.l.b16 %v5018
      %v5126 = vunpack.c.l.b16 %v5019
      %v5127 = vunpack.c.l.b16 %v5020
      %v5128 = vunpack.c.l.b16 %v5021
      %v5129 = vpack.c.b16 %v5080, %v5079
      %v5130 = vpack.c.b16 %v5082, %v5081
      %v5131 = vpack.c.b16 %v5084, %v5083
      %v5132 = vpack.c.b16 %v5086, %v5085
      %v5133 = vpack.c.b16 %v5088, %v5087
      %v5134 = vpack.c.b16 %v5090, %v5089
      %v5135 = vpack.c.b16 %v5092, %v5091
      %v5136 = vpack.c.b16 %v5094, %v5093
      %v5137 = vpack.c.b16 %v5096, %v5095
      %v5138 = vpack.c.b16 %v5098, %v5097
      %v5139 = vpack.c.b16 %v5100, %v5099
      %v5140 = vpack.c.b16 %v5102, %v5101
      %v5141 = vpack.c.b16 %v5104, %v5103
      %v5142 = vpack.c.b16 %v5106, %v5105
      %v5143 = vpack.c.b16 %v5108, %v5107
      %v5144 = vpack.c.b16 %v5110, %v5109
      %v5145 = vpack.c.b16 %v5112, %v5111
      %v5146 = vpack.c.b16 %v5114, %v5113
      %v5147 = vpack.c.b16 %v5116, %v5115
      %v5148 = vpack.c.b16 %v5118, %v5117
      %v5149 = vpack.c.b16 %v5120, %v5119
      %v5150 = vpack.c.b16 %v5122, %v5121
      %v5151 = vpack.c.b16 %v5124, %v5123
      %v5152 = vpack.c.b16 %v5126, %v5125
      %v5153 = vpack.c.b16 %v5128, %v5127
      %v5180 = vsel %vm1117, %v4943, 0
      %v5183 = vsel %vm1117, %v4947, 0
      %v5186 = vsel %vm1117, %v4951, 0
      %v5189 = vsel %vm1117, %v4955, 0
      %v5192 = vsel %vm1117, %v4959, 0
      %v5195 = vsel %vm1117, %v4963, 0
      %v5198 = vsel %vm1117, %v4967, 0
      %v5201 = vsel %vm1117, %v4971, 0
      %5203 = vmatprep.subr.bf16.mxu0 0
      %5204 = vmatpush1.bf16.msra.mxu0 %v5129
      %5205 = vmatprep.subr.bf16.mxu0 0
      %5206 = vmatpush1.bf16.msra.mxu0 %v5130
      %5207 = vmatprep.subr.bf16.mxu0 0
      %5208 = vmatpush1.bf16.msra.mxu0 %v5131
      %5209 = vmatprep.subr.bf16.mxu0 0
      %5210 = vmatpush1.bf16.msra.mxu0 %v5132
      %5211 = vmatprep.subr.bf16.mxu0 0
      %5212 = vmatpush1.bf16.msra.mxu0 %v5133
      %5213 = vmatprep.subr.bf16.mxu0 0
      %5214 = vmatpush1.bf16.msra.mxu0 %v5134
      %5215 = vmatprep.subr.bf16.mxu0 0
      %5216 = vmatpush1.bf16.msra.mxu0 %v5135
      %5217 = vmatprep.subr.bf16.mxu0 0
      %5218 = vmatpush1.bf16.msra.mxu0 %v5136
      %5219 = vmatprep.subr.bf16.mxu0 0
      %5220 = vmatpush1.bf16.msra.mxu0 %v5137
      %5221 = vmatprep.subr.bf16.mxu0 0
      %5222 = vmatpush1.bf16.msra.mxu0 %v5138
      %5223 = vmatprep.subr.bf16.mxu0 0
      %5224 = vmatpush1.bf16.msra.mxu0 %v5139
      %5225 = vmatprep.subr.bf16.mxu0 0
      %5226 = vmatpush1.bf16.msra.mxu0 %v5140
      %5227 = vmatprep.subr.bf16.mxu0 0
      %5228 = vmatpush1.bf16.msra.mxu0 %v5141
      %5229 = vmatprep.subr.bf16.mxu0 0
      %5230 = vmatpush1.bf16.msra.mxu0 %v5142
      %5231 = vmatprep.subr.bf16.mxu0 0
      %5232 = vmatpush1.bf16.msra.mxu0 %v5143
      %5233 = vmatprep.subr.bf16.mxu0 0
      %5234 = vmatpush1.bf16.msra.mxu0 %v5144
      %5235 = vmatprep.mubr.bf16.mxu0 %v4941
      %5236 = vmatmul.mubr.bf16.gmra.mrb[0].mxu0 %v4940
      %v5237 = vpop.f32.mrb[0].mxu0
      %v5238 = vadd.f32 %v5027, %v5237
      %v5239 = vpop.f32.mrb[0].mxu0
      %v5240 = vpop.f32.mrb[0].mxu0
      %v5241 = vadd.f32 %v5027, %v5240
      %v5242 = vpop.f32.mrb[0].mxu0
      %5243 = vmatprep.mubr.bf16.mxu0 %v4945
      %5244 = vmatmul.mubr.bf16.gmra.mrb[0].mxu0 %v4944
      %v5245 = vpop.f32.mrb[0].mxu0
      %v5246 = vadd.f32 %v5027, %v5245
      %v5247 = vpop.f32.mrb[0].mxu0
      %v5248 = vpop.f32.mrb[0].mxu0
      %v5249 = vadd.f32 %v5027, %v5248
      %v5250 = vpop.f32.mrb[0].mxu0
      %5251 = vmatprep.mubr.bf16.mxu0 %v4949
      %5252 = vmatmul.mubr.bf16.gmra.mrb[0].mxu0 %v4948
      %v5253 = vpop.f32.mrb[0].mxu0
      %v5254 = vadd.f32 %v5027, %v5253
      %v5255 = vpop.f32.mrb[0].mxu0
      %v5256 = vpop.f32.mrb[0].mxu0
      %v5257 = vadd.f32 %v5027, %v5256
      %v5258 = vpop.f32.mrb[0].mxu0
      %5259 = vmatprep.mubr.bf16.mxu0 %v4953
      %5260 = vmatmul.mubr.bf16.gmra.mrb[0].mxu0 %v4952
      %v5261 = vpop.f32.mrb[0].mxu0
      %v5262 = vadd.f32 %v5027, %v5261
      %v5263 = vpop.f32.mrb[0].mxu0
      %v5264 = vpop.f32.mrb[0].mxu0
      %v5265 = vadd.f32 %v5027, %v5264
      %v5266 = vpop.f32.mrb[0].mxu0
      %5267 = vmatprep.mubr.bf16.mxu0 %v4957
      %5268 = vmatmul.mubr.bf16.gmra.mrb[0].mxu0 %v4956
      %v5269 = vpop.f32.mrb[0].mxu0
      %v5270 = vadd.f32 %v5027, %v5269
      %v5271 = vpop.f32.mrb[0].mxu0
      %v5272 = vpop.f32.mrb[0].mxu0
      %v5273 = vadd.f32 %v5027, %v5272
      %v5274 = vpop.f32.mrb[0].mxu0
      %5275 = vmatprep.mubr.bf16.mxu0 %v4961
      %5276 = vmatmul.mubr.bf16.gmra.mrb[0].mxu0 %v4960
      %v5277 = vpop.f32.mrb[0].mxu0
      %v5278 = vadd.f32 %v5027, %v5277
      %v5279 = vpop.f32.mrb[0].mxu0
      %v5280 = vpop.f32.mrb[0].mxu0
      %v5281 = vadd.f32 %v5027, %v5280
      %v5282 = vpop.f32.mrb[0].mxu0
      %5283 = vmatprep.mubr.bf16.mxu0 %v4965
      %5284 = vmatmul.mubr.bf16.gmra.mrb[0].mxu0 %v4964
      %v5285 = vpop.f32.mrb[0].mxu0
      %v5286 = vadd.f32 %v5027, %v5285
      %v5287 = vpop.f32.mrb[0].mxu0
      %v5288 = vpop.f32.mrb[0].mxu0
      %v5289 = vadd.f32 %v5027, %v5288
      %v5290 = vpop.f32.mrb[0].mxu0
      %5291 = vmatprep.mubr.bf16.mxu0 %v4969
      %5292 = vmatmul.mubr.bf16.gmra.mrb[0].mxu0 %v4968
      %v5293 = vpop.f32.mrb[0].mxu0
      %v5294 = vadd.f32 %v5027, %v5293
      %v5295 = vpop.f32.mrb[0].mxu0
      %v5296 = vpop.f32.mrb[0].mxu0
      %v5297 = vadd.f32 %v5027, %v5296
      %v5298 = vpop.f32.mrb[0].mxu0
      %5299 = vdwg.mxu0
      %5300 = vmatprep.subr.bf16.mxu0 0
      %5301 = vmatpush1.bf16.msra.mxu0 %v5145
      %5302 = vmatprep.subr.bf16.mxu0 0
      %5303 = vmatpush1.bf16.msra.mxu0 %v5146
      %5304 = vmatprep.subr.bf16.mxu0 0
      %5305 = vmatpush1.bf16.msra.mxu0 %v5147
      %5306 = vmatprep.subr.bf16.mxu0 0
      %5307 = vmatpush1.bf16.msra.mxu0 %v5148
      %5308 = vmatprep.subr.bf16.mxu0 0
      %5309 = vmatpush1.bf16.msra.mxu0 %v5149
      %5310 = vmatprep.subr.bf16.mxu0 0
      %5311 = vmatpush1.bf16.msra.mxu0 %v5150
      %5312 = vmatprep.subr.bf16.mxu0 0
      %5313 = vmatpush1.bf16.msra.mxu0 %v5151
      %5314 = vmatprep.subr.bf16.mxu0 0
      %5315 = vmatpush1.bf16.msra.mxu0 %v5152
      %5316 = vmatprep.subr.bf16.mxu0 0
      %5317 = vmatpush1.bf16.msra.mxu0 %v5153
      %5318 = vmatprep.subr.bf16.mxu0 0
      %5319 = vmatpush1.bf16.msra.mxu0 0
      %5320 = vmatprep.subr.bf16.mxu0 0
      %5321 = vmatpush1.bf16.msra.mxu0 0
      %5322 = vmatprep.subr.bf16.mxu0 0
      %5323 = vmatpush1.bf16.msra.mxu0 0
      %5324 = vmatprep.subr.bf16.mxu0 0
      %5325 = vmatpush1.bf16.msra.mxu0 0
      %5326 = vmatprep.subr.bf16.mxu0 0
      %5327 = vmatpush1.bf16.msra.mxu0 0
      %5328 = vmatprep.subr.bf16.mxu0 0
      %5329 = vmatpush1.bf16.msra.mxu0 0
      %5330 = vmatprep.subr.bf16.mxu0 0
      %5331 = vmatpush1.bf16.msra.mxu0 0
      %5332 = vmatprep.mubr.bf16.mxu0 %v5180
      %5333 = vmatmul.mubr.bf16.gmra.mrb[0].mxu0 %v4942
      %v5334 = vpop.f32.mrb[0].mxu0
      %v5335 = vadd.f32 %v5238, %v5334
      %v5336 = vpop.f32.mrb[0].mxu0
      %v5337 = vpop.f32.mrb[0].mxu0
      %v5338 = vadd.f32 %v5241, %v5337
      %v5339 = vpop.f32.mrb[0].mxu0
      %5340 = vmatprep.mubr.bf16.mxu0 %v5183
      %5341 = vmatmul.mubr.bf16.gmra.mrb[0].mxu0 %v4946
      %v5342 = vpop.f32.mrb[0].mxu0
      %v5343 = vadd.f32 %v5246, %v5342
      %v5344 = vpop.f32.mrb[0].mxu0
      %v5345 = vpop.f32.mrb[0].mxu0
      %v5346 = vadd.f32 %v5249, %v5345
      %v5347 = vpop.f32.mrb[0].mxu0
      %5348 = vmatprep.mubr.bf16.mxu0 %v5186
      %5349 = vmatmul.mubr.bf16.gmra.mrb[0].mxu0 %v4950
      %v5350 = vpop.f32.mrb[0].mxu0
      %v5351 = vadd.f32 %v5254, %v5350
      %v5352 = vpop.f32.mrb[0].mxu0
      %v5353 = vpop.f32.mrb[0].mxu0
      %v5354 = vadd.f32 %v5257, %v5353
      %v5355 = vpop.f32.mrb[0].mxu0
      %5356 = vmatprep.mubr.bf16.mxu0 %v5189
      %5357 = vmatmul.mubr.bf16.gmra.mrb[0].mxu0 %v4954
      %v5358 = vpop.f32.mrb[0].mxu0
      %v5359 = vadd.f32 %v5262, %v5358
      %v5360 = vpop.f32.mrb[0].mxu0
      %v5361 = vpop.f32.mrb[0].mxu0
      %v5362 = vadd.f32 %v5265, %v5361
      %v5363 = vpop.f32.mrb[0].mxu0
      %5364 = vmatprep.mubr.bf16.mxu0 %v5192
      %5365 = vmatmul.mubr.bf16.gmra.mrb[0].mxu0 %v4958
      %v5366 = vpop.f32.mrb[0].mxu0
      %v5367 = vadd.f32 %v5270, %v5366
      %v5368 = vpop.f32.mrb[0].mxu0
      %v5369 = vpop.f32.mrb[0].mxu0
      %v5370 = vadd.f32 %v5273, %v5369
      %v5371 = vpop.f32.mrb[0].mxu0
      %5372 = vmatprep.mubr.bf16.mxu0 %v5195
      %5373 = vmatmul.mubr.bf16.gmra.mrb[0].mxu0 %v4962
      %v5374 = vpop.f32.mrb[0].mxu0
      %v5375 = vadd.f32 %v5278, %v5374
      %v5376 = vpop.f32.mrb[0].mxu0
      %v5377 = vpop.f32.mrb[0].mxu0
      %v5378 = vadd.f32 %v5281, %v5377
      %v5379 = vpop.f32.mrb[0].mxu0
      %5380 = vmatprep.mubr.bf16.mxu0 %v5198
      %5381 = vmatmul.mubr.bf16.gmra.mrb[0].mxu0 %v4966
      %v5382 = vpop.f32.mrb[0].mxu0
      %v5383 = vadd.f32 %v5286, %v5382
      %v5384 = vpop.f32.mrb[0].mxu0
      %v5385 = vpop.f32.mrb[0].mxu0
      %v5386 = vadd.f32 %v5289, %v5385
      %v5387 = vpop.f32.mrb[0].mxu0
      %5388 = vmatprep.mubr.bf16.mxu0 %v5201
      %5389 = vmatmul.mubr.bf16.gmra.mrb[0].mxu0 %v4970
      %v5390 = vpop.f32.mrb[0].mxu0
      %v5391 = vadd.f32 %v5294, %v5390
      %v5392 = vpop.f32.mrb[0].mxu0
      %v5393 = vpop.f32.mrb[0].mxu0
      %v5394 = vadd.f32 %v5297, %v5393
      %v5395 = vpop.f32.mrb[0].mxu0
      %5396 = vdwg.mxu0
      %v5397 = vmax.f32 %v5335, 0.0
      %v5398 = vmax.f32 %v5338, 0.0
      %v5399 = vmax.f32 %v5343, 0.0
      %v5400 = vmax.f32 %v5346, 0.0
      %v5401 = vmax.f32 %v5351, 0.0
      %v5402 = vmax.f32 %v5354, 0.0
      %v5403 = vmax.f32 %v5359, 0.0
      %v5404 = vmax.f32 %v5362, 0.0
      %v5405 = vmax.f32 %v5367, 0.0
      %v5406 = vmax.f32 %v5370, 0.0
      %v5407 = vmax.f32 %v5375, 0.0
      %v5408 = vmax.f32 %v5378, 0.0
      %v5409 = vmax.f32 %v5383, 0.0
      %v5410 = vmax.f32 %v5386, 0.0
      %v5411 = vmax.f32 %v5391, 0.0
      %v5412 = vmax.f32 %v5394, 0.0
      %v5413 = vpack.c.bf16 %v5398, %v5397
      %v5414 = vpack.c.bf16 %v5400, %v5399
      %v5415 = vpack.c.bf16 %v5402, %v5401
      %v5416 = vpack.c.bf16 %v5404, %v5403
      %v5417 = vpack.c.bf16 %v5406, %v5405
      %v5418 = vpack.c.bf16 %v5408, %v5407
      %v5419 = vpack.c.bf16 %v5410, %v5409
      %v5420 = vpack.c.bf16 %v5412, %v5411
      %v5421 = vld [vmem:[%s9] sm:$0xf]
      %v5422 = vld [vmem:[%s9 + $0x4] sm:$0xf]
      %v5423 = vld [vmem:[%s9 + $0x8] sm:$0xf]
      %v5424 = vld [vmem:[%s9 + $0xc] sm:$0xf]
      %v5425 = vld [vmem:[%s10] sm:$0x1]
      %v5427 = vlaneseq
      %v5428 = vshrl.u32 %v5427, 7
      %v5429 = vsub.s32 0, %v5428
      %v5430 = vrot.slane %v5425, %v5429
      %v5436 = vunpack.c.l.b16 %v5421
      %v5437 = vunpack.c.l.b16 %v5422
      %v5438 = vunpack.c.l.b16 %v5423
      %v5439 = vunpack.c.l.b16 %v5424
      %v5440 = vpack.c.b16 %v5437, %v5436
      %v5441 = vpack.c.b16 %v5439, %v5438
      %vm5444 = vcmask 261120
      %v5446 = vsel %vm5444, %v5413, 0
      %v5449 = vsel %vm5444, %v5414, 0
      %v5452 = vsel %vm5444, %v5415, 0
      %v5455 = vsel %vm5444, %v5416, 0
      %v5458 = vsel %vm5444, %v5417, 0
      %v5461 = vsel %vm5444, %v5418, 0
      %v5464 = vsel %vm5444, %v5419, 0
      %v5467 = vsel %vm5444, %v5420, 0
      %5469 = vmatprep.subr.bf16.mxu0 0
      %5470 = vmatpush1.bf16.msra.mxu0 %v5440
      %5471 = vmatprep.subr.bf16.mxu0 0
      %5472 = vmatpush1.bf16.msra.mxu0 %v5441
      %5473 = vmatprep.subr.bf16.mxu0 0
      %5474 = vmatpush1.bf16.msra.mxu0 0
      %5475 = vmatprep.subr.bf16.mxu0 0
      %5476 = vmatpush1.bf16.msra.mxu0 0
      %5477 = vmatprep.subr.bf16.mxu0 0
      %5478 = vmatpush1.bf16.msra.mxu0 0
      %5479 = vmatprep.subr.bf16.mxu0 0
      %5480 = vmatpush1.bf16.msra.mxu0 0
      %5481 = vmatprep.subr.bf16.mxu0 0
      %5482 = vmatpush1.bf16.msra.mxu0 0
      %5483 = vmatprep.subr.bf16.mxu0 0
      %5484 = vmatpush1.bf16.msra.mxu0 0
      %5485 = vmatprep.subr.bf16.mxu0 0
      %5486 = vmatpush1.bf16.msra.mxu0 0
      %5487 = vmatprep.subr.bf16.mxu0 0
      %5488 = vmatpush1.bf16.msra.mxu0 0
      %5489 = vmatprep.subr.bf16.mxu0 0
      %5490 = vmatpush1.bf16.msra.mxu0 0
      %5491 = vmatprep.subr.bf16.mxu0 0
      %5492 = vmatpush1.bf16.msra.mxu0 0
      %5493 = vmatprep.subr.bf16.mxu0 0
      %5494 = vmatpush1.bf16.msra.mxu0 0
      %5495 = vmatprep.subr.bf16.mxu0 0
      %5496 = vmatpush1.bf16.msra.mxu0 0
      %5497 = vmatprep.subr.bf16.mxu0 0
      %5498 = vmatpush1.bf16.msra.mxu0 0
      %5499 = vmatprep.subr.bf16.mxu0 0
      %5500 = vmatpush1.bf16.msra.mxu0 0
      %5501 = vmatprep.mubr.bf16.mxu0 0
      %5502 = vmatmul.mubr.bf16.gmra.mrb[0].mxu0 %v5446
      %v5503 = vpop.f32.mrb[0].mxu0
      %v5504 = vadd.f32 %v5430, %v5503
      %v5505 = vpop.f32.mrb[0].mxu0
      %v5506 = vpop.f32.mrb[0].mxu0
      %v5507 = vadd.f32 %v5430, %v5506
      %v5508 = vpop.f32.mrb[0].mxu0
      %5509 = vmatprep.mubr.bf16.mxu0 0
      %5510 = vmatmul.mubr.bf16.gmra.mrb[0].mxu0 %v5449
      %v5511 = vpop.f32.mrb[0].mxu0
      %v5512 = vadd.f32 %v5430, %v5511
      %v5513 = vpop.f32.mrb[0].mxu0
      %v5514 = vpop.f32.mrb[0].mxu0
      %v5515 = vadd.f32 %v5430, %v5514
      %v5516 = vpop.f32.mrb[0].mxu0
      %5517 = vmatprep.mubr.bf16.mxu0 0
      %5518 = vmatmul.mubr.bf16.gmra.mrb[0].mxu0 %v5452
      %v5519 = vpop.f32.mrb[0].mxu0
      %v5520 = vadd.f32 %v5430, %v5519
      %v5521 = vpop.f32.mrb[0].mxu0
      %v5522 = vpop.f32.mrb[0].mxu0
      %v5523 = vadd.f32 %v5430, %v5522
      %v5524 = vpop.f32.mrb[0].mxu0
      %5525 = vmatprep.mubr.bf16.mxu0 0
      %5526 = vmatmul.mubr.bf16.gmra.mrb[0].mxu0 %v5455
      %v5527 = vpop.f32.mrb[0].mxu0
      %v5528 = vadd.f32 %v5430, %v5527
      %v5529 = vpop.f32.mrb[0].mxu0
      %v5530 = vpop.f32.mrb[0].mxu0
      %v5531 = vadd.f32 %v5430, %v5530
      %v5532 = vpop.f32.mrb[0].mxu0
      %5533 = vmatprep.mubr.bf16.mxu0 0
      %5534 = vmatmul.mubr.bf16.gmra.mrb[0].mxu0 %v5458
      %v5535 = vpop.f32.mrb[0].mxu0
      %v5536 = vadd.f32 %v5430, %v5535
      %v5537 = vpop.f32.mrb[0].mxu0
      %v5538 = vpop.f32.mrb[0].mxu0
      %v5539 = vadd.f32 %v5430, %v5538
      %v5540 = vpop.f32.mrb[0].mxu0
      %5541 = vmatprep.mubr.bf16.mxu0 0
      %5542 = vmatmul.mubr.bf16.gmra.mrb[0].mxu0 %v5461
      %v5543 = vpop.f32.mrb[0].mxu0
      %v5544 = vadd.f32 %v5430, %v5543
      %v5545 = vpop.f32.mrb[0].mxu0
      %v5546 = vpop.f32.mrb[0].mxu0
      %v5547 = vadd.f32 %v5430, %v5546
      %v5548 = vpop.f32.mrb[0].mxu0
      %5549 = vmatprep.mubr.bf16.mxu0 0
      %5550 = vmatmul.mubr.bf16.gmra.mrb[0].mxu0 %v5464
      %v5551 = vpop.f32.mrb[0].mxu0
      %v5552 = vadd.f32 %v5430, %v5551
      %v5553 = vpop.f32.mrb[0].mxu0
      %v5554 = vpop.f32.mrb[0].mxu0
      %v5555 = vadd.f32 %v5430, %v5554
      %v5556 = vpop.f32.mrb[0].mxu0
      %5557 = vmatprep.mubr.bf16.mxu0 0
      %5558 = vmatmul.mubr.bf16.gmra.mrb[0].mxu0 %v5467
      %v5559 = vpop.f32.mrb[0].mxu0
      %v5560 = vadd.f32 %v5430, %v5559
      %v5561 = vpop.f32.mrb[0].mxu0
      %v5562 = vpop.f32.mrb[0].mxu0
      %v5563 = vadd.f32 %v5430, %v5562
      %v5564 = vpop.f32.mrb[0].mxu0
      %5565 = vdwg.mxu0
      %5566 = vst [vmem:[%s388] sm:$0xff] %v5504
      %5567 = vst [vmem:[%s388 + $0x8] sm:$0xff] %v5507
      %5568 = vst [vmem:[%s388 + $0x10] sm:$0xff] %v5512
      %5569 = vst [vmem:[%s388 + $0x18] sm:$0xff] %v5515
      %5570 = vst [vmem:[%s388 + $0x20] sm:$0xff] %v5520
      %5571 = vst [vmem:[%s388 + $0x28] sm:$0xff] %v5523
      %5572 = vst [vmem:[%s388 + $0x30] sm:$0xff] %v5528
      %5573 = vst [vmem:[%s388 + $0x38] sm:$0xff] %v5531
      %5574 = vst [vmem:[%s388 + $0x40] sm:$0xff] %v5536
      %5575 = vst [vmem:[%s388 + $0x48] sm:$0xff] %v5539
      %5576 = vst [vmem:[%s388 + $0x50] sm:$0xff] %v5544
      %5577 = vst [vmem:[%s388 + $0x58] sm:$0xff] %v5547
      %5578 = vst [vmem:[%s388 + $0x60] sm:$0xff] %v5552
      %5579 = vst [vmem:[%s388 + $0x68] sm:$0xff] %v5555
      %5580 = vst [vmem:[%s388 + $0x70] sm:$0xff] %v5560
      %5581 = vst [vmem:[%s388 + $0x78] sm:$0xff] %v5563
      %s5582 = smul.u32 16, %s22
      %p5583 = scmp.lt.s32.totalorder %s5582, 31
      %s5584 = scalar_select %p5583, %s5582, 31
      %s5585 = smul.addr %s5584, 8
      %s5586 = scalar_lea.vmem %s11, %s5585
      // Predicated region
      $region65: #{value_func_cnn_forward.1} parent=63 // pred_check
        %p5587 = pneg %p276
      $region66: #{value_func_cnn_forward.1} parent=63 // pred_check_branch
        %5589 = sbr.rel (%p5587) target = $region68
      $region67: #{value_func_cnn_forward.1} parent=63 // pred_region
        %s5590 = smul.u32 16, %s22
      $region68: #{value_func_cnn_forward.1} parent=63 // pred_fallthru
        _
    $region64: #{value_func_cnn_forward.1} parent=5 // pred_fallthru
      _
    %p5591 = scmp.le.s32.totalorder 2, %s17
    // Predicated region
    $region69: #{value_func_cnn_forward.1} parent=5 // pred_check
      %p5592 = pneg %p5591
    $region70: #{value_func_cnn_forward.1} parent=5 // pred_check_branch
      %5594 = sbr.rel (%p5592) target = $region72
    $region71: #{value_func_cnn_forward.1} parent=5 // pred_region
      %s5595 = ssub.s32 %s17, 2
      // Predicated region
      $region73: #{value_func_cnn_forward.1} parent=71 // pred_check
        %p5596 = pneg %p282
      $region74: #{value_func_cnn_forward.1} parent=71 // pred_check_branch
        %5598 = sbr.rel (%p5596) target = $region76
      $region75: #{value_func_cnn_forward.1} parent=71 // pred_region
        %s5599 = smul.u32 16, %s23
        %p5600 = scmp.lt.s32.totalorder %s5599, 31
        %s5601 = scalar_select %p5600, %s5599, 31
        %s5602 = smul.addr %s5601, 8
        %s5603 = scalar_lea.vmem %s11, %s5602
      $region76: #{value_func_cnn_forward.1} parent=71 // pred_fallthru
        _
    $region72: #{value_func_cnn_forward.1} parent=5 // pred_fallthru
      _
  $region6: #{value_func_cnn_forward.1} parent=0 // loop_footer
    %s21 = sadd.s32 1, %s17
  $region7: #{value_func_cnn_forward.1} parent=0 // loop_footer_branch
    %16 = sbr.rel target = $region3
  $region8: #{value_func_cnn_forward.1} parent=0 // loop_exit
    _

</llo_original>
